<compile_context>
chip_gen: v6e
topology: v6e:2x2x1
jax: 0.10.0
libtpu: 0.0.40
codegen_flags: <defaults>
</compile_context>

<pallas_src>
import functools

import jax
import jax.numpy as jnp
import numpy as np
from jax import lax
from jax.experimental import pallas as pl
from jax.experimental.pallas import tpu as pltpu


def _cbam_kernel(x_ref, w1_ref, w2t_ref, cw_ref, o_ref, pad_ref,
                 *, B, C, Cr, H, W, K, P, PADL, PADW):
    # x_ref   : (B, C, H*W)        VMEM  lane-dense input
    # w1_ref  : (Cr, C)            VMEM  first Linear weight (PyTorch layout)
    # w2t_ref : (Cr, C)            VMEM  second Linear weight, transposed
    # cw_ref  : (2*K*K,)           SMEM  flattened conv weight [in_ch, kh, kw]
    # o_ref   : (B, C, H*W)        VMEM  lane-dense output
    # pad_ref : (2*B, PADW)        VMEM  zero-haloed, sublane-stacked spatial maps
    HW = H * W
    x = x_ref[...]                                    # (B, C, HW)

    # ---- channel attention --------------------------------------------------
    maxp = jnp.max(x, axis=2)                         # (B, C)  lane reduce
    avgp = jnp.mean(x, axis=2)                        # (B, C)
    pooled = jnp.concatenate([maxp, avgp], axis=0)    # (2B, C): fused MLP pass

    w1 = w1_ref[...]                                  # (Cr, C)
    w2t = w2t_ref[...]                                # (Cr, C)
    if Cr <= 8:
        # Near-degenerate MLP width: VPU lane-reduce + broadcast FMA per hidden
        # unit; avoids two serial MXU round-trips on a latency-bound kernel.
        y = jnp.zeros((2 * B, C), jnp.float32)
        for j in range(Cr):
            hj = jnp.sum(pooled * w1[j:j + 1, :], axis=1, keepdims=True)
            hj = jnp.maximum(hj, 0.0)                 # (2B, 1)  ReLU
            y = y + hj * w2t[j:j + 1, :]              # (2B, C)
    else:
        h = jnp.maximum(
            lax.dot_general(pooled, w1, (((1,), (1,)), ((), ())),
                            preferred_element_type=jnp.float32), 0.0)
        y = jnp.dot(h, w2t, preferred_element_type=jnp.float32)

    ch_scale = jax.nn.sigmoid(y[:B] + y[B:])          # (B, C)
    ch = ch_scale[:, :, None] * x                     # (B, C, HW)

    # Park ch in VMEM (the output block) so it is NOT live across the 49-tap
    # unrolled loop; re-read for the final in-place multiply.
    o_ref[...] = ch.astype(o_ref.dtype)

    # ---- spatial attention --------------------------------------------------
    maxc = jnp.max(ch, axis=1)                        # (B, HW)  sublane reduce
    meanc = jnp.mean(ch, axis=1)                      # (B, HW)
    spat = jnp.concatenate([maxc, meanc], axis=0)     # (2B, HW) sublane-stacked

    # Lane-aligned halo memsets (PADL and PADW-PADL-HW are multiples of 128)
    # and one aligned interior store.
    pad_ref[:, :PADL] = jnp.zeros((2 * B, PADL), jnp.float32)
    pad_ref[:, PADL + HW:] = jnp.zeros((2 * B, PADW - PADL - HW), jnp.float32)
    pad_ref[:, PADL:PADL + HW] = spat

    # Column index modulo W, for horizontal wrap-around masking (built
    # in-kernel; no mask input DMA).
    col = lax.broadcasted_iota(jnp.int32, (1, HW), 1) % W          # (1, HW)

    # 7x7 conv (2 -> 1 ch): a tap (dy, dx) is a flat lane shift by
    # (dy-P)*W + (dx-P); the halo supplies vertical zero padding, the per-dx
    # column mask kills values that wrapped across a row boundary.  ONE slice
    # per tap; per-channel weights applied as two scalar FMAs into two
    # accumulators, merged by sublane split/add at the end.
    acc_a = jnp.zeros((2 * B, HW), jnp.float32)
    acc_b = jnp.zeros((2 * B, HW), jnp.float32)
    for dx in range(K):
        shift = dx - P
        valid = jnp.logical_and(col + shift >= 0, col + shift < W)  # (1, HW)
        part_a = jnp.zeros((2 * B, HW), jnp.float32)
        part_b = jnp.zeros((2 * B, HW), jnp.float32)
        for dy in range(K):
            start = PADL + (dy - P) * W + shift       # static lane offset
            slab = pad_ref[:, start:start + HW]       # (2B, HW), single slice
            w_max = cw_ref[0 * K * K + dy * K + dx]   # SMEM scalar taps
            w_mean = cw_ref[1 * K * K + dy * K + dx]
            part_a = part_a + w_max * slab
            part_b = part_b + w_mean * slab
        acc_a = acc_a + jnp.where(valid, part_a, 0.0)
        acc_b = acc_b + jnp.where(valid, part_b, 0.0)

    conv = acc_a[:B, :] + acc_b[B:, :]                # (B, HW): max-ch + mean-ch
    sp = jax.nn.sigmoid(conv)                         # (B, HW)
    o_ref[...] = (sp[:, None, :] * o_ref[...]).astype(o_ref.dtype)


def cbam_pallas(x, w1, w2, conv_w):
    """x: (B, C, H, W) f32; w1: (Cr, C); w2: (C, Cr); conv_w: (1, 2, K, K)."""
    B, C, H, W = x.shape
    Cr = w1.shape[0]
    K = conv_w.shape[-1]
    P = K // 2
    HW = H * W
    PAD = P * W + P                                   # max |flat shift|

    def _round_up(v, m):
        return ((v + m - 1) // m) * m

    PADL = _round_up(PAD, 128)                        # lane-aligned left halo
    PADW = _round_up(PADL + HW + PAD, 128)            # lane-aligned total width

    x2 = x.reshape(B, C, HW)                          # lane-dense view
    w1a = jnp.asarray(w1, jnp.float32)                # (Cr, C)
    w2t = jnp.asarray(w2, jnp.float32).T              # (Cr, C)
    cw_flat = jnp.asarray(conv_w, jnp.float32).reshape(-1)   # (2*K*K,) -> SMEM

    kernel = functools.partial(_cbam_kernel, B=B, C=C, Cr=Cr, H=H, W=W, K=K,
                               P=P, PADL=PADL, PADW=PADW)

    out = pl.pallas_call(
        kernel,
        out_shape=jax.ShapeDtypeStruct((B, C, HW), x.dtype),
        grid=(1,),                                    # whole problem, one step
        in_specs=[
            pl.BlockSpec((B, C, HW), lambda i: (0, 0, 0)),
            pl.BlockSpec((Cr, C), lambda i: (0, 0)),
            pl.BlockSpec((Cr, C), lambda i: (0, 0)),
            pl.BlockSpec(memory_space=pltpu.MemorySpace.SMEM),
        ],
        out_specs=pl.BlockSpec((B, C, HW), lambda i: (0, 0, 0)),
        scratch_shapes=[pltpu.VMEM((2 * B, PADW), jnp.float32)],
        compiler_params=pltpu.CompilerParams(
            dimension_semantics=("arbitrary",)),
    )(x2, w1a, w2t, cw_flat)
    return out.reshape(B, C, H, W)


def cbam_reference(x, w1, w2, conv_w):
    """Pure-JAX reference mirroring the PyTorch forward (all layers bias-free)."""
    maxp = jnp.max(x, axis=(2, 3))                    # (B, C)
    avgp = jnp.mean(x, axis=(2, 3))                   # (B, C)

    def mlp(p):
        return jnp.maximum(p @ w1.T, 0.0) @ w2.T

    ch_scale = jax.nn.sigmoid(mlp(maxp) + mlp(avgp))[:, :, None, None]
    ch = ch_scale * x                                 # (B, C, H, W)

    max_out = jnp.max(ch, axis=1, keepdims=True)
    mean_out = jnp.mean(ch, axis=1, keepdims=True)
    sp_in = jnp.concatenate([max_out, mean_out], axis=1)     # (B, 2, H, W)
    conv = lax.conv_general_dilated(
        sp_in, conv_w, window_strides=(1, 1), padding="SAME",
        dimension_numbers=("NCHW", "OIHW", "NCHW"))
    sp = jax.nn.sigmoid(conv)                         # (B, 1, H, W)
    return sp * ch


if __name__ == "__main__":
    # Module config: CBAMBlock(in_channel=32, reduction=16, kernel_size=7)
    B, C, H, W = 2, 32, 16, 16
    reduction, K = 16, 7
    Cr = C // reduction

    key = jax.random.PRNGKey(0)
    kx, k1, k2, kc = jax.random.split(key, 4)
    x = jax.random.normal(kx, (B, C, H, W), dtype=jnp.float32)
    # PyTorch Linear weight layout is (out_features, in_features).
    w1 = 0.2 * jax.random.normal(k1, (Cr, C), dtype=jnp.float32)    # mlp[0]
    w2 = 0.2 * jax.random.normal(k2, (C, Cr), dtype=jnp.float32)    # mlp[2]
    conv_w = 0.1 * jax.random.normal(kc, (1, 2, K, K), dtype=jnp.float32)

    out = jax.block_until_ready(cbam_pallas(x, w1, w2, conv_w))
    ref = jax.block_until_ready(cbam_reference(x, w1, w2, conv_w))

    np.testing.assert_allclose(np.asarray(out), np.asarray(ref),
                               rtol=1e-5, atol=1e-5)
    print("KERNEL_OK")
</pallas_src>

<mosaic_0001>
module attributes {stable_mosaic.version = 11 : i64} {
  func.func @_cbam_kernel(%arg0: i32, %arg1: memref<2x32x256xf32, #tpu.memory_space<vmem>>, %arg2: memref<2x32xf32, #tpu.memory_space<vmem>>, %arg3: memref<2x32xf32, #tpu.memory_space<vmem>>, %arg4: memref<98xf32, #tpu.memory_space<smem>>, %arg5: memref<2x32x256xf32, #tpu.memory_space<vmem>>, %arg6: memref<4x512xf32, #tpu.memory_space<vmem>>) attributes {dimension_semantics = [#tpu.dimension_semantics<arbitrary>], iteration_bounds = array<i64: 1>, scalar_prefetch = 0 : i64, scratch_operands = 1 : i64, tpu.core_type = #tpu.core_type<tc>, window_params = [{pipeline_mode = #tpu.pipeline_mode<synchronous>, transform_indices = @transform_0, window_bounds = array<i64: 2, 32, 256>}, {pipeline_mode = #tpu.pipeline_mode<synchronous>, transform_indices = @transform_1, window_bounds = array<i64: 2, 32>}, {pipeline_mode = #tpu.pipeline_mode<synchronous>, transform_indices = @transform_2, window_bounds = array<i64: 2, 32>}, {transform_indices = @transform_3, window_bounds = array<i64: 98>}, {pipeline_mode = #tpu.pipeline_mode<synchronous>, transform_indices = @transform_4, window_bounds = array<i64: 2, 32, 256>}]} {
    %c0 = arith.constant 0 : index
    %c0_0 = arith.constant 0 : index
    %c0_1 = arith.constant 0 : index
    %0 = vector.load %arg1[%c0, %c0_0, %c0_1] : memref<2x32x256xf32, #tpu.memory_space<vmem>>, vector<2x32x256xf32>
    %cst = arith.constant dense<0xFF800000> : vector<2x32xf32>
    %1 = vector.multi_reduction <maximumf>, %0, %cst [2] : vector<2x32x256xf32> to vector<2x32xf32>
    %cst_2 = arith.constant dense<0.000000e+00> : vector<2x32xf32>
    %2 = vector.multi_reduction <add>, %0, %cst_2 [2] : vector<2x32x256xf32> to vector<2x32xf32>
    %cst_3 = arith.constant 2.560000e+02 : f32
    %3 = vector.broadcast %cst_3 : f32 to vector<2x32xf32>
    %4 = arith.divf %2, %3 : vector<2x32xf32>
    %5 = tpu.concatenate %1, %4 in 0 : vector<2x32xf32>, vector<2x32xf32> -> vector<4x32xf32>
    %c0_4 = arith.constant 0 : index
    %c0_5 = arith.constant 0 : index
    %6 = vector.load %arg2[%c0_4, %c0_5] : memref<2x32xf32, #tpu.memory_space<vmem>>, vector<2x32xf32>
    %c0_6 = arith.constant 0 : index
    %c0_7 = arith.constant 0 : index
    %7 = vector.load %arg3[%c0_6, %c0_7] : memref<2x32xf32, #tpu.memory_space<vmem>>, vector<2x32xf32>
    %cst_8 = arith.constant 0.000000e+00 : f32
    %8 = vector.broadcast %cst_8 : f32 to vector<4x32xf32>
    %9 = vector.extract_strided_slice %6 {offsets = [0, 0], sizes = [1, 32], strides = [1, 1]} : vector<2x32xf32> to vector<1x32xf32>
    %10 = vector.broadcast %9 : vector<1x32xf32> to vector<4x32xf32>
    %11 = arith.mulf %5, %10 : vector<4x32xf32>
    %cst_9 = arith.constant dense<0.000000e+00> : vector<4xf32>
    %12 = vector.multi_reduction <add>, %11, %cst_9 [1] : vector<4x32xf32> to vector<4xf32>
    %13 = vector.shape_cast %12 : vector<4xf32> to vector<4x1xf32>
    %cst_10 = arith.constant 0.000000e+00 : f32
    %14 = vector.broadcast %cst_10 : f32 to vector<4x1xf32>
    %15 = arith.maximumf %13, %14 : vector<4x1xf32>
    %16 = vector.extract_strided_slice %7 {offsets = [0, 0], sizes = [1, 32], strides = [1, 1]} : vector<2x32xf32> to vector<1x32xf32>
    %17 = vector.broadcast %15 : vector<4x1xf32> to vector<4x32xf32>
    %18 = vector.broadcast %16 : vector<1x32xf32> to vector<4x32xf32>
    %19 = arith.mulf %17, %18 : vector<4x32xf32>
    %20 = arith.addf %8, %19 : vector<4x32xf32>
    %21 = vector.extract_strided_slice %6 {offsets = [1, 0], sizes = [1, 32], strides = [1, 1]} : vector<2x32xf32> to vector<1x32xf32>
    %22 = vector.broadcast %21 : vector<1x32xf32> to vector<4x32xf32>
    %23 = arith.mulf %5, %22 : vector<4x32xf32>
    %cst_11 = arith.constant dense<0.000000e+00> : vector<4xf32>
    %24 = vector.multi_reduction <add>, %23, %cst_11 [1] : vector<4x32xf32> to vector<4xf32>
    %25 = vector.shape_cast %24 : vector<4xf32> to vector<4x1xf32>
    %cst_12 = arith.constant 0.000000e+00 : f32
    %26 = vector.broadcast %cst_12 : f32 to vector<4x1xf32>
    %27 = arith.maximumf %25, %26 : vector<4x1xf32>
    %28 = vector.extract_strided_slice %7 {offsets = [1, 0], sizes = [1, 32], strides = [1, 1]} : vector<2x32xf32> to vector<1x32xf32>
    %29 = vector.broadcast %27 : vector<4x1xf32> to vector<4x32xf32>
    %30 = vector.broadcast %28 : vector<1x32xf32> to vector<4x32xf32>
    %31 = arith.mulf %29, %30 : vector<4x32xf32>
    %32 = arith.addf %20, %31 : vector<4x32xf32>
    %33 = vector.extract_strided_slice %32 {offsets = [0, 0], sizes = [2, 32], strides = [1, 1]} : vector<4x32xf32> to vector<2x32xf32>
    %34 = vector.extract_strided_slice %32 {offsets = [2, 0], sizes = [2, 32], strides = [1, 1]} : vector<4x32xf32> to vector<2x32xf32>
    %35 = arith.addf %33, %34 : vector<2x32xf32>
    %36 = arith.negf %35 : vector<2x32xf32>
    %37 = math.exp %36 : vector<2x32xf32>
    %cst_13 = arith.constant 1.000000e+00 : f32
    %38 = vector.broadcast %cst_13 : f32 to vector<2x32xf32>
    %39 = arith.addf %38, %37 : vector<2x32xf32>
    %40 = arith.divf %38, %39 : vector<2x32xf32>
    %41 = vector.shape_cast %40 : vector<2x32xf32> to vector<2x32x1xf32>
    %42 = vector.broadcast %41 : vector<2x32x1xf32> to vector<2x32x256xf32>
    %43 = arith.mulf %42, %0 : vector<2x32x256xf32>
    %c0_14 = arith.constant 0 : index
    %c0_15 = arith.constant 0 : index
    %c0_16 = arith.constant 0 : index
    %44 = vector.load %arg5[%c0_14, %c0_15, %c0_16] : memref<2x32x256xf32, #tpu.memory_space<vmem>>, vector<2x32x256xf32>
    tpu.vector_store %arg5[%c0_14, %c0_15, %c0_16], %43 {strides = array<i32>} : memref<2x32x256xf32, #tpu.memory_space<vmem>>, vector<2x32x256xf32>,
    %cst_17 = arith.constant dense<0xFF800000> : vector<2x256xf32>
    %45 = vector.multi_reduction <maximumf>, %43, %cst_17 [1] : vector<2x32x256xf32> to vector<2x256xf32>
    %cst_18 = arith.constant dense<0.000000e+00> : vector<2x256xf32>
    %46 = vector.multi_reduction <add>, %43, %cst_18 [1] : vector<2x32x256xf32> to vector<2x256xf32>
    %cst_19 = arith.constant 3.200000e+01 : f32
    %47 = vector.broadcast %cst_19 : f32 to vector<2x256xf32>
    %48 = arith.divf %46, %47 : vector<2x256xf32>
    %49 = tpu.concatenate %45, %48 in 0 : vector<2x256xf32>, vector<2x256xf32> -> vector<4x256xf32>
    %cst_20 = arith.constant 0.000000e+00 : f32
    %50 = vector.broadcast %cst_20 : f32 to vector<4x128xf32>
    %c0_21 = arith.constant 0 : index
    %c0_22 = arith.constant 0 : index
    %51 = vector.load %arg6[%c0_21, %c0_22] : memref<4x512xf32, #tpu.memory_space<vmem>>, vector<4x128xf32>
    tpu.vector_store %arg6[%c0_21, %c0_22], %50 {strides = array<i32>} : memref<4x512xf32, #tpu.memory_space<vmem>>, vector<4x128xf32>,
    %cst_23 = arith.constant 0.000000e+00 : f32
    %52 = vector.broadcast %cst_23 : f32 to vector<4x128xf32>
    %c0_24 = arith.constant 0 : index
    %c384 = arith.constant 384 : index
    %53 = vector.load %arg6[%c0_24, %c384] : memref<4x512xf32, #tpu.memory_space<vmem>>, vector<4x128xf32>
    tpu.vector_store %arg6[%c0_24, %c384], %52 {strides = array<i32>} : memref<4x512xf32, #tpu.memory_space<vmem>>, vector<4x128xf32>,
    %c0_25 = arith.constant 0 : index
    %c128 = arith.constant 128 : index
    %54 = vector.load %arg6[%c0_25, %c128] : memref<4x512xf32, #tpu.memory_space<vmem>>, vector<4x256xf32>
    tpu.vector_store %arg6[%c0_25, %c128], %49 {strides = array<i32>} : memref<4x512xf32, #tpu.memory_space<vmem>>, vector<4x256xf32>,
    %55 = tpu.iota {dimensions = array<i32: 1>} : vector<1x256xi32>
    %c16_i32 = arith.constant 16 : i32
    %c0_i32 = arith.constant 0 : i32
    %56 = arith.cmpi eq, %c16_i32, %c0_i32 : i32
    %c1_i32 = arith.constant 1 : i32
    %57 = arith.select %56, %c1_i32, %c16_i32 : i32
    %58 = vector.broadcast %57 : i32 to vector<1x256xi32>
    %59 = arith.remsi %55, %58 : vector<1x256xi32>
    %c0_i32_26 = arith.constant 0 : i32
    %60 = vector.broadcast %c0_i32_26 : i32 to vector<1x256xi32>
    %61 = arith.cmpi ne, %59, %60 : vector<1x256xi32>
    %c0_i32_27 = arith.constant 0 : i32
    %62 = vector.broadcast %c0_i32_27 : i32 to vector<1x256xi32>
    %63 = arith.cmpi slt, %59, %62 : vector<1x256xi32>
    %c0_i32_28 = arith.constant 0 : i32
    %64 = arith.cmpi slt, %57, %c0_i32_28 : i32
    %65 = vector.broadcast %64 : i1 to vector<1x256xi1>
    %66 = vector.broadcast %65 : vector<1x256xi1> to vector<1x256xi1>
    %67 = arith.xori %63, %66 : vector<1x256xi1>
    %68 = arith.andi %67, %61 : vector<1x256xi1>
    %69 = vector.broadcast %57 : i32 to vector<1x256xi32>
    %70 = arith.addi %59, %69 : vector<1x256xi32>
    %71 = arith.select %68, %70, %59 : vector<1x256xi1>, vector<1x256xi32>
    %cst_29 = arith.constant 0.000000e+00 : f32
    %72 = vector.broadcast %cst_29 : f32 to vector<4x256xf32>
    %cst_30 = arith.constant 0.000000e+00 : f32
    %73 = vector.broadcast %cst_30 : f32 to vector<4x256xf32>
    %c-3_i32 = arith.constant -3 : i32
    %74 = vector.broadcast %c-3_i32 : i32 to vector<1x256xi32>
    %75 = arith.addi %71, %74 : vector<1x256xi32>
    %c0_i32_31 = arith.constant 0 : i32
    %76 = vector.broadcast %c0_i32_31 : i32 to vector<1x256xi32>
    %77 = arith.cmpi sge, %75, %76 : vector<1x256xi32>
    %c-3_i32_32 = arith.constant -3 : i32
    %78 = vector.broadcast %c-3_i32_32 : i32 to vector<1x256xi32>
    %79 = arith.addi %71, %78 : vector<1x256xi32>
    %c16_i32_33 = arith.constant 16 : i32
    %80 = vector.broadcast %c16_i32_33 : i32 to vector<1x256xi32>
    %81 = arith.cmpi slt, %79, %80 : vector<1x256xi32>
    %82 = arith.andi %77, %81 : vector<1x256xi1>
    %cst_34 = arith.constant 0.000000e+00 : f32
    %83 = vector.broadcast %cst_34 : f32 to vector<4x256xf32>
    %cst_35 = arith.constant 0.000000e+00 : f32
    %84 = vector.broadcast %cst_35 : f32 to vector<4x256xf32>
    %c0_36 = arith.constant 0 : index
    %c77 = arith.constant 77 : index
    %85 = vector.load %arg6[%c0_36, %c77] : memref<4x512xf32, #tpu.memory_space<vmem>>, vector<4x256xf32>
    %c0_37 = arith.constant 0 : index
    %86 = memref.load %arg4[%c0_37] : memref<98xf32, #tpu.memory_space<smem>>
    %c49 = arith.constant 49 : index
    %87 = memref.load %arg4[%c49] : memref<98xf32, #tpu.memory_space<smem>>
    %88 = vector.broadcast %86 : f32 to vector<4x256xf32>
    %89 = arith.mulf %88, %85 : vector<4x256xf32>
    %90 = arith.addf %83, %89 : vector<4x256xf32>
    %91 = vector.broadcast %87 : f32 to vector<4x256xf32>
    %92 = arith.mulf %91, %85 : vector<4x256xf32>
    %93 = arith.addf %84, %92 : vector<4x256xf32>
    %c0_38 = arith.constant 0 : index
    %c93 = arith.constant 93 : index
    %94 = vector.load %arg6[%c0_38, %c93] : memref<4x512xf32, #tpu.memory_space<vmem>>, vector<4x256xf32>
    %c7 = arith.constant 7 : index
    %95 = memref.load %arg4[%c7] : memref<98xf32, #tpu.memory_space<smem>>
    %c56 = arith.constant 56 : index
    %96 = memref.load %arg4[%c56] : memref<98xf32, #tpu.memory_space<smem>>
    %97 = vector.broadcast %95 : f32 to vector<4x256xf32>
    %98 = arith.mulf %97, %94 : vector<4x256xf32>
    %99 = arith.addf %90, %98 : vector<4x256xf32>
    %100 = vector.broadcast %96 : f32 to vector<4x256xf32>
    %101 = arith.mulf %100, %94 : vector<4x256xf32>
    %102 = arith.addf %93, %101 : vector<4x256xf32>
    %c0_39 = arith.constant 0 : index
    %c109 = arith.constant 109 : index
    %103 = vector.load %arg6[%c0_39, %c109] : memref<4x512xf32, #tpu.memory_space<vmem>>, vector<4x256xf32>
    %c14 = arith.constant 14 : index
    %104 = memref.load %arg4[%c14] : memref<98xf32, #tpu.memory_space<smem>>
    %c63 = arith.constant 63 : index
    %105 = memref.load %arg4[%c63] : memref<98xf32, #tpu.memory_space<smem>>
    %106 = vector.broadcast %104 : f32 to vector<4x256xf32>
    %107 = arith.mulf %106, %103 : vector<4x256xf32>
    %108 = arith.addf %99, %107 : vector<4x256xf32>
    %109 = vector.broadcast %105 : f32 to vector<4x256xf32>
    %110 = arith.mulf %109, %103 : vector<4x256xf32>
    %111 = arith.addf %102, %110 : vector<4x256xf32>
    %c0_40 = arith.constant 0 : index
    %c125 = arith.constant 125 : index
    %112 = vector.load %arg6[%c0_40, %c125] : memref<4x512xf32, #tpu.memory_space<vmem>>, vector<4x256xf32>
    %c21 = arith.constant 21 : index
    %113 = memref.load %arg4[%c21] : memref<98xf32, #tpu.memory_space<smem>>
    %c70 = arith.constant 70 : index
    %114 = memref.load %arg4[%c70] : memref<98xf32, #tpu.memory_space<smem>>
    %115 = vector.broadcast %113 : f32 to vector<4x256xf32>
    %116 = arith.mulf %115, %112 : vector<4x256xf32>
    %117 = arith.addf %108, %116 : vector<4x256xf32>
    %118 = vector.broadcast %114 : f32 to vector<4x256xf32>
    %119 = arith.mulf %118, %112 : vector<4x256xf32>
    %120 = arith.addf %111, %119 : vector<4x256xf32>
    %c0_41 = arith.constant 0 : index
    %c141 = arith.constant 141 : index
    %121 = vector.load %arg6[%c0_41, %c141] : memref<4x512xf32, #tpu.memory_space<vmem>>, vector<4x256xf32>
    %c28 = arith.constant 28 : index
    %122 = memref.load %arg4[%c28] : memref<98xf32, #tpu.memory_space<smem>>
    %c77_42 = arith.constant 77 : index
    %123 = memref.load %arg4[%c77_42] : memref<98xf32, #tpu.memory_space<smem>>
    %124 = vector.broadcast %122 : f32 to vector<4x256xf32>
    %125 = arith.mulf %124, %121 : vector<4x256xf32>
    %126 = arith.addf %117, %125 : vector<4x256xf32>
    %127 = vector.broadcast %123 : f32 to vector<4x256xf32>
    %128 = arith.mulf %127, %121 : vector<4x256xf32>
    %129 = arith.addf %120, %128 : vector<4x256xf32>
    %c0_43 = arith.constant 0 : index
    %c157 = arith.constant 157 : index
    %130 = vector.load %arg6[%c0_43, %c157] : memref<4x512xf32, #tpu.memory_space<vmem>>, vector<4x256xf32>
    %c35 = arith.constant 35 : index
    %131 = memref.load %arg4[%c35] : memref<98xf32, #tpu.memory_space<smem>>
    %c84 = arith.constant 84 : index
    %132 = memref.load %arg4[%c84] : memref<98xf32, #tpu.memory_space<smem>>
    %133 = vector.broadcast %131 : f32 to vector<4x256xf32>
    %134 = arith.mulf %133, %130 : vector<4x256xf32>
    %135 = arith.addf %126, %134 : vector<4x256xf32>
    %136 = vector.broadcast %132 : f32 to vector<4x256xf32>
    %137 = arith.mulf %136, %130 : vector<4x256xf32>
    %138 = arith.addf %129, %137 : vector<4x256xf32>
    %c0_44 = arith.constant 0 : index
    %c173 = arith.constant 173 : index
    %139 = vector.load %arg6[%c0_44, %c173] : memref<4x512xf32, #tpu.memory_space<vmem>>, vector<4x256xf32>
    %c42 = arith.constant 42 : index
    %140 = memref.load %arg4[%c42] : memref<98xf32, #tpu.memory_space<smem>>
    %c91 = arith.constant 91 : index
    %141 = memref.load %arg4[%c91] : memref<98xf32, #tpu.memory_space<smem>>
    %142 = vector.broadcast %140 : f32 to vector<4x256xf32>
    %143 = arith.mulf %142, %139 : vector<4x256xf32>
    %144 = arith.addf %135, %143 : vector<4x256xf32>
    %145 = vector.broadcast %141 : f32 to vector<4x256xf32>
    %146 = arith.mulf %145, %139 : vector<4x256xf32>
    %147 = arith.addf %138, %146 : vector<4x256xf32>
    %cst_45 = arith.constant 0.000000e+00 : f32
    %148 = vector.shape_cast %82 : vector<1x256xi1> to vector<1x256xi1>
    %149 = vector.broadcast %148 : vector<1x256xi1> to vector<4x256xi1>
    %150 = vector.broadcast %cst_45 : f32 to vector<4x256xf32>
    %151 = arith.select %149, %144, %150 : vector<4x256xi1>, vector<4x256xf32>
    %152 = arith.addf %72, %151 : vector<4x256xf32>
    %cst_46 = arith.constant 0.000000e+00 : f32
    %153 = vector.shape_cast %82 : vector<1x256xi1> to vector<1x256xi1>
    %154 = vector.broadcast %153 : vector<1x256xi1> to vector<4x256xi1>
    %155 = vector.broadcast %cst_46 : f32 to vector<4x256xf32>
    %156 = arith.select %154, %147, %155 : vector<4x256xi1>, vector<4x256xf32>
    %157 = arith.addf %73, %156 : vector<4x256xf32>
    %c-2_i32 = arith.constant -2 : i32
    %158 = vector.broadcast %c-2_i32 : i32 to vector<1x256xi32>
    %159 = arith.addi %71, %158 : vector<1x256xi32>
    %c0_i32_47 = arith.constant 0 : i32
    %160 = vector.broadcast %c0_i32_47 : i32 to vector<1x256xi32>
    %161 = arith.cmpi sge, %159, %160 : vector<1x256xi32>
    %c-2_i32_48 = arith.constant -2 : i32
    %162 = vector.broadcast %c-2_i32_48 : i32 to vector<1x256xi32>
    %163 = arith.addi %71, %162 : vector<1x256xi32>
    %c16_i32_49 = arith.constant 16 : i32
    %164 = vector.broadcast %c16_i32_49 : i32 to vector<1x256xi32>
    %165 = arith.cmpi slt, %163, %164 : vector<1x256xi32>
    %166 = arith.andi %161, %165 : vector<1x256xi1>
    %cst_50 = arith.constant 0.000000e+00 : f32
    %167 = vector.broadcast %cst_50 : f32 to vector<4x256xf32>
    %cst_51 = arith.constant 0.000000e+00 : f32
    %168 = vector.broadcast %cst_51 : f32 to vector<4x256xf32>
    %c0_52 = arith.constant 0 : index
    %c78 = arith.constant 78 : index
    %169 = vector.load %arg6[%c0_52, %c78] : memref<4x512xf32, #tpu.memory_space<vmem>>, vector<4x256xf32>
    %c1 = arith.constant 1 : index
    %170 = memref.load %arg4[%c1] : memref<98xf32, #tpu.memory_space<smem>>
    %c50 = arith.constant 50 : index
    %171 = memref.load %arg4[%c50] : memref<98xf32, #tpu.memory_space<smem>>
    %172 = vector.broadcast %170 : f32 to vector<4x256xf32>
    %173 = arith.mulf %172, %169 : vector<4x256xf32>
    %174 = arith.addf %167, %173 : vector<4x256xf32>
    %175 = vector.broadcast %171 : f32 to vector<4x256xf32>
    %176 = arith.mulf %175, %169 : vector<4x256xf32>
    %177 = arith.addf %168, %176 : vector<4x256xf32>
    %c0_53 = arith.constant 0 : index
    %c94 = arith.constant 94 : index
    %178 = vector.load %arg6[%c0_53, %c94] : memref<4x512xf32, #tpu.memory_space<vmem>>, vector<4x256xf32>
    %c8 = arith.constant 8 : index
    %179 = memref.load %arg4[%c8] : memref<98xf32, #tpu.memory_space<smem>>
    %c57 = arith.constant 57 : index
    %180 = memref.load %arg4[%c57] : memref<98xf32, #tpu.memory_space<smem>>
    %181 = vector.broadcast %179 : f32 to vector<4x256xf32>
    %182 = arith.mulf %181, %178 : vector<4x256xf32>
    %183 = arith.addf %174, %182 : vector<4x256xf32>
    %184 = vector.broadcast %180 : f32 to vector<4x256xf32>
    %185 = arith.mulf %184, %178 : vector<4x256xf32>
    %186 = arith.addf %177, %185 : vector<4x256xf32>
    %c0_54 = arith.constant 0 : index
    %c110 = arith.constant 110 : index
    %187 = vector.load %arg6[%c0_54, %c110] : memref<4x512xf32, #tpu.memory_space<vmem>>, vector<4x256xf32>
    %c15 = arith.constant 15 : index
    %188 = memref.load %arg4[%c15] : memref<98xf32, #tpu.memory_space<smem>>
    %c64 = arith.constant 64 : index
    %189 = memref.load %arg4[%c64] : memref<98xf32, #tpu.memory_space<smem>>
    %190 = vector.broadcast %188 : f32 to vector<4x256xf32>
    %191 = arith.mulf %190, %187 : vector<4x256xf32>
    %192 = arith.addf %183, %191 : vector<4x256xf32>
    %193 = vector.broadcast %189 : f32 to vector<4x256xf32>
    %194 = arith.mulf %193, %187 : vector<4x256xf32>
    %195 = arith.addf %186, %194 : vector<4x256xf32>
    %c0_55 = arith.constant 0 : index
    %c126 = arith.constant 126 : index
    %196 = vector.load %arg6[%c0_55, %c126] : memref<4x512xf32, #tpu.memory_space<vmem>>, vector<4x256xf32>
    %c22 = arith.constant 22 : index
    %197 = memref.load %arg4[%c22] : memref<98xf32, #tpu.memory_space<smem>>
    %c71 = arith.constant 71 : index
    %198 = memref.load %arg4[%c71] : memref<98xf32, #tpu.memory_space<smem>>
    %199 = vector.broadcast %197 : f32 to vector<4x256xf32>
    %200 = arith.mulf %199, %196 : vector<4x256xf32>
    %201 = arith.addf %192, %200 : vector<4x256xf32>
    %202 = vector.broadcast %198 : f32 to vector<4x256xf32>
    %203 = arith.mulf %202, %196 : vector<4x256xf32>
    %204 = arith.addf %195, %203 : vector<4x256xf32>
    %c0_56 = arith.constant 0 : index
    %c142 = arith.constant 142 : index
    %205 = vector.load %arg6[%c0_56, %c142] : memref<4x512xf32, #tpu.memory_space<vmem>>, vector<4x256xf32>
    %c29 = arith.constant 29 : index
    %206 = memref.load %arg4[%c29] : memref<98xf32, #tpu.memory_space<smem>>
    %c78_57 = arith.constant 78 : index
    %207 = memref.load %arg4[%c78_57] : memref<98xf32, #tpu.memory_space<smem>>
    %208 = vector.broadcast %206 : f32 to vector<4x256xf32>
    %209 = arith.mulf %208, %205 : vector<4x256xf32>
    %210 = arith.addf %201, %209 : vector<4x256xf32>
    %211 = vector.broadcast %207 : f32 to vector<4x256xf32>
    %212 = arith.mulf %211, %205 : vector<4x256xf32>
    %213 = arith.addf %204, %212 : vector<4x256xf32>
    %c0_58 = arith.constant 0 : index
    %c158 = arith.constant 158 : index
    %214 = vector.load %arg6[%c0_58, %c158] : memref<4x512xf32, #tpu.memory_space<vmem>>, vector<4x256xf32>
    %c36 = arith.constant 36 : index
    %215 = memref.load %arg4[%c36] : memref<98xf32, #tpu.memory_space<smem>>
    %c85 = arith.constant 85 : index
    %216 = memref.load %arg4[%c85] : memref<98xf32, #tpu.memory_space<smem>>
    %217 = vector.broadcast %215 : f32 to vector<4x256xf32>
    %218 = arith.mulf %217, %214 : vector<4x256xf32>
    %219 = arith.addf %210, %218 : vector<4x256xf32>
    %220 = vector.broadcast %216 : f32 to vector<4x256xf32>
    %221 = arith.mulf %220, %214 : vector<4x256xf32>
    %222 = arith.addf %213, %221 : vector<4x256xf32>
    %c0_59 = arith.constant 0 : index
    %c174 = arith.constant 174 : index
    %223 = vector.load %arg6[%c0_59, %c174] : memref<4x512xf32, #tpu.memory_space<vmem>>, vector<4x256xf32>
    %c43 = arith.constant 43 : index
    %224 = memref.load %arg4[%c43] : memref<98xf32, #tpu.memory_space<smem>>
    %c92 = arith.constant 92 : index
    %225 = memref.load %arg4[%c92] : memref<98xf32, #tpu.memory_space<smem>>
    %226 = vector.broadcast %224 : f32 to vector<4x256xf32>
    %227 = arith.mulf %226, %223 : vector<4x256xf32>
    %228 = arith.addf %219, %227 : vector<4x256xf32>
    %229 = vector.broadcast %225 : f32 to vector<4x256xf32>
    %230 = arith.mulf %229, %223 : vector<4x256xf32>
    %231 = arith.addf %222, %230 : vector<4x256xf32>
    %cst_60 = arith.constant 0.000000e+00 : f32
    %232 = vector.shape_cast %166 : vector<1x256xi1> to vector<1x256xi1>
    %233 = vector.broadcast %232 : vector<1x256xi1> to vector<4x256xi1>
    %234 = vector.broadcast %cst_60 : f32 to vector<4x256xf32>
    %235 = arith.select %233, %228, %234 : vector<4x256xi1>, vector<4x256xf32>
    %236 = arith.addf %152, %235 : vector<4x256xf32>
    %cst_61 = arith.constant 0.000000e+00 : f32
    %237 = vector.shape_cast %166 : vector<1x256xi1> to vector<1x256xi1>
    %238 = vector.broadcast %237 : vector<1x256xi1> to vector<4x256xi1>
    %239 = vector.broadcast %cst_61 : f32 to vector<4x256xf32>
    %240 = arith.select %238, %231, %239 : vector<4x256xi1>, vector<4x256xf32>
    %241 = arith.addf %157, %240 : vector<4x256xf32>
    %c-1_i32 = arith.constant -1 : i32
    %242 = vector.broadcast %c-1_i32 : i32 to vector<1x256xi32>
    %243 = arith.addi %71, %242 : vector<1x256xi32>
    %c0_i32_62 = arith.constant 0 : i32
    %244 = vector.broadcast %c0_i32_62 : i32 to vector<1x256xi32>
    %245 = arith.cmpi sge, %243, %244 : vector<1x256xi32>
    %c-1_i32_63 = arith.constant -1 : i32
    %246 = vector.broadcast %c-1_i32_63 : i32 to vector<1x256xi32>
    %247 = arith.addi %71, %246 : vector<1x256xi32>
    %c16_i32_64 = arith.constant 16 : i32
    %248 = vector.broadcast %c16_i32_64 : i32 to vector<1x256xi32>
    %249 = arith.cmpi slt, %247, %248 : vector<1x256xi32>
    %250 = arith.andi %245, %249 : vector<1x256xi1>
    %cst_65 = arith.constant 0.000000e+00 : f32
    %251 = vector.broadcast %cst_65 : f32 to vector<4x256xf32>
    %cst_66 = arith.constant 0.000000e+00 : f32
    %252 = vector.broadcast %cst_66 : f32 to vector<4x256xf32>
    %c0_67 = arith.constant 0 : index
    %c79 = arith.constant 79 : index
    %253 = vector.load %arg6[%c0_67, %c79] : memref<4x512xf32, #tpu.memory_space<vmem>>, vector<4x256xf32>
    %c2 = arith.constant 2 : index
    %254 = memref.load %arg4[%c2] : memref<98xf32, #tpu.memory_space<smem>>
    %c51 = arith.constant 51 : index
    %255 = memref.load %arg4[%c51] : memref<98xf32, #tpu.memory_space<smem>>
    %256 = vector.broadcast %254 : f32 to vector<4x256xf32>
    %257 = arith.mulf %256, %253 : vector<4x256xf32>
    %258 = arith.addf %251, %257 : vector<4x256xf32>
    %259 = vector.broadcast %255 : f32 to vector<4x256xf32>
    %260 = arith.mulf %259, %253 : vector<4x256xf32>
    %261 = arith.addf %252, %260 : vector<4x256xf32>
    %c0_68 = arith.constant 0 : index
    %c95 = arith.constant 95 : index
    %262 = vector.load %arg6[%c0_68, %c95] : memref<4x512xf32, #tpu.memory_space<vmem>>, vector<4x256xf32>
    %c9 = arith.constant 9 : index
    %263 = memref.load %arg4[%c9] : memref<98xf32, #tpu.memory_space<smem>>
    %c58 = arith.constant 58 : index
    %264 = memref.load %arg4[%c58] : memref<98xf32, #tpu.memory_space<smem>>
    %265 = vector.broadcast %263 : f32 to vector<4x256xf32>
    %266 = arith.mulf %265, %262 : vector<4x256xf32>
    %267 = arith.addf %258, %266 : vector<4x256xf32>
    %268 = vector.broadcast %264 : f32 to vector<4x256xf32>
    %269 = arith.mulf %268, %262 : vector<4x256xf32>
    %270 = arith.addf %261, %269 : vector<4x256xf32>
    %c0_69 = arith.constant 0 : index
    %c111 = arith.constant 111 : index
    %271 = vector.load %arg6[%c0_69, %c111] : memref<4x512xf32, #tpu.memory_space<vmem>>, vector<4x256xf32>
    %c16 = arith.constant 16 : index
    %272 = memref.load %arg4[%c16] : memref<98xf32, #tpu.memory_space<smem>>
    %c65 = arith.constant 65 : index
    %273 = memref.load %arg4[%c65] : memref<98xf32, #tpu.memory_space<smem>>
    %274 = vector.broadcast %272 : f32 to vector<4x256xf32>
    %275 = arith.mulf %274, %271 : vector<4x256xf32>
    %276 = arith.addf %267, %275 : vector<4x256xf32>
    %277 = vector.broadcast %273 : f32 to vector<4x256xf32>
    %278 = arith.mulf %277, %271 : vector<4x256xf32>
    %279 = arith.addf %270, %278 : vector<4x256xf32>
    %c0_70 = arith.constant 0 : index
    %c127 = arith.constant 127 : index
    %280 = vector.load %arg6[%c0_70, %c127] : memref<4x512xf32, #tpu.memory_space<vmem>>, vector<4x256xf32>
    %c23 = arith.constant 23 : index
    %281 = memref.load %arg4[%c23] : memref<98xf32, #tpu.memory_space<smem>>
    %c72 = arith.constant 72 : index
    %282 = memref.load %arg4[%c72] : memref<98xf32, #tpu.memory_space<smem>>
    %283 = vector.broadcast %281 : f32 to vector<4x256xf32>
    %284 = arith.mulf %283, %280 : vector<4x256xf32>
    %285 = arith.addf %276, %284 : vector<4x256xf32>
    %286 = vector.broadcast %282 : f32 to vector<4x256xf32>
    %287 = arith.mulf %286, %280 : vector<4x256xf32>
    %288 = arith.addf %279, %287 : vector<4x256xf32>
    %c0_71 = arith.constant 0 : index
    %c143 = arith.constant 143 : index
    %289 = vector.load %arg6[%c0_71, %c143] : memref<4x512xf32, #tpu.memory_space<vmem>>, vector<4x256xf32>
    %c30 = arith.constant 30 : index
    %290 = memref.load %arg4[%c30] : memref<98xf32, #tpu.memory_space<smem>>
    %c79_72 = arith.constant 79 : index
    %291 = memref.load %arg4[%c79_72] : memref<98xf32, #tpu.memory_space<smem>>
    %292 = vector.broadcast %290 : f32 to vector<4x256xf32>
    %293 = arith.mulf %292, %289 : vector<4x256xf32>
    %294 = arith.addf %285, %293 : vector<4x256xf32>
    %295 = vector.broadcast %291 : f32 to vector<4x256xf32>
    %296 = arith.mulf %295, %289 : vector<4x256xf32>
    %297 = arith.addf %288, %296 : vector<4x256xf32>
    %c0_73 = arith.constant 0 : index
    %c159 = arith.constant 159 : index
    %298 = vector.load %arg6[%c0_73, %c159] : memref<4x512xf32, #tpu.memory_space<vmem>>, vector<4x256xf32>
    %c37 = arith.constant 37 : index
    %299 = memref.load %arg4[%c37] : memref<98xf32, #tpu.memory_space<smem>>
    %c86 = arith.constant 86 : index
    %300 = memref.load %arg4[%c86] : memref<98xf32, #tpu.memory_space<smem>>
    %301 = vector.broadcast %299 : f32 to vector<4x256xf32>
    %302 = arith.mulf %301, %298 : vector<4x256xf32>
    %303 = arith.addf %294, %302 : vector<4x256xf32>
    %304 = vector.broadcast %300 : f32 to vector<4x256xf32>
    %305 = arith.mulf %304, %298 : vector<4x256xf32>
    %306 = arith.addf %297, %305 : vector<4x256xf32>
    %c0_74 = arith.constant 0 : index
    %c175 = arith.constant 175 : index
    %307 = vector.load %arg6[%c0_74, %c175] : memref<4x512xf32, #tpu.memory_space<vmem>>, vector<4x256xf32>
    %c44 = arith.constant 44 : index
    %308 = memref.load %arg4[%c44] : memref<98xf32, #tpu.memory_space<smem>>
    %c93_75 = arith.constant 93 : index
    %309 = memref.load %arg4[%c93_75] : memref<98xf32, #tpu.memory_space<smem>>
    %310 = vector.broadcast %308 : f32 to vector<4x256xf32>
    %311 = arith.mulf %310, %307 : vector<4x256xf32>
    %312 = arith.addf %303, %311 : vector<4x256xf32>
    %313 = vector.broadcast %309 : f32 to vector<4x256xf32>
    %314 = arith.mulf %313, %307 : vector<4x256xf32>
    %315 = arith.addf %306, %314 : vector<4x256xf32>
    %cst_76 = arith.constant 0.000000e+00 : f32
    %316 = vector.shape_cast %250 : vector<1x256xi1> to vector<1x256xi1>
    %317 = vector.broadcast %316 : vector<1x256xi1> to vector<4x256xi1>
    %318 = vector.broadcast %cst_76 : f32 to vector<4x256xf32>
    %319 = arith.select %317, %312, %318 : vector<4x256xi1>, vector<4x256xf32>
    %320 = arith.addf %236, %319 : vector<4x256xf32>
    %cst_77 = arith.constant 0.000000e+00 : f32
    %321 = vector.shape_cast %250 : vector<1x256xi1> to vector<1x256xi1>
    %322 = vector.broadcast %321 : vector<1x256xi1> to vector<4x256xi1>
    %323 = vector.broadcast %cst_77 : f32 to vector<4x256xf32>
    %324 = arith.select %322, %315, %323 : vector<4x256xi1>, vector<4x256xf32>
    %325 = arith.addf %241, %324 : vector<4x256xf32>
    %c0_i32_78 = arith.constant 0 : i32
    %326 = vector.broadcast %c0_i32_78 : i32 to vector<1x256xi32>
    %327 = arith.addi %71, %326 : vector<1x256xi32>
    %c0_i32_79 = arith.constant 0 : i32
    %328 = vector.broadcast %c0_i32_79 : i32 to vector<1x256xi32>
    %329 = arith.cmpi sge, %327, %328 : vector<1x256xi32>
    %c0_i32_80 = arith.constant 0 : i32
    %330 = vector.broadcast %c0_i32_80 : i32 to vector<1x256xi32>
    %331 = arith.addi %71, %330 : vector<1x256xi32>
    %c16_i32_81 = arith.constant 16 : i32
    %332 = vector.broadcast %c16_i32_81 : i32 to vector<1x256xi32>
    %333 = arith.cmpi slt, %331, %332 : vector<1x256xi32>
    %334 = arith.andi %329, %333 : vector<1x256xi1>
    %cst_82 = arith.constant 0.000000e+00 : f32
    %335 = vector.broadcast %cst_82 : f32 to vector<4x256xf32>
    %cst_83 = arith.constant 0.000000e+00 : f32
    %336 = vector.broadcast %cst_83 : f32 to vector<4x256xf32>
    %c0_84 = arith.constant 0 : index
    %c80 = arith.constant 80 : index
    %337 = vector.load %arg6[%c0_84, %c80] : memref<4x512xf32, #tpu.memory_space<vmem>>, vector<4x256xf32>
    %c3 = arith.constant 3 : index
    %338 = memref.load %arg4[%c3] : memref<98xf32, #tpu.memory_space<smem>>
    %c52 = arith.constant 52 : index
    %339 = memref.load %arg4[%c52] : memref<98xf32, #tpu.memory_space<smem>>
    %340 = vector.broadcast %338 : f32 to vector<4x256xf32>
    %341 = arith.mulf %340, %337 : vector<4x256xf32>
    %342 = arith.addf %335, %341 : vector<4x256xf32>
    %343 = vector.broadcast %339 : f32 to vector<4x256xf32>
    %344 = arith.mulf %343, %337 : vector<4x256xf32>
    %345 = arith.addf %336, %344 : vector<4x256xf32>
    %c0_85 = arith.constant 0 : index
    %c96 = arith.constant 96 : index
    %346 = vector.load %arg6[%c0_85, %c96] : memref<4x512xf32, #tpu.memory_space<vmem>>, vector<4x256xf32>
    %c10 = arith.constant 10 : index
    %347 = memref.load %arg4[%c10] : memref<98xf32, #tpu.memory_space<smem>>
    %c59 = arith.constant 59 : index
    %348 = memref.load %arg4[%c59] : memref<98xf32, #tpu.memory_space<smem>>
    %349 = vector.broadcast %347 : f32 to vector<4x256xf32>
    %350 = arith.mulf %349, %346 : vector<4x256xf32>
    %351 = arith.addf %342, %350 : vector<4x256xf32>
    %352 = vector.broadcast %348 : f32 to vector<4x256xf32>
    %353 = arith.mulf %352, %346 : vector<4x256xf32>
    %354 = arith.addf %345, %353 : vector<4x256xf32>
    %c0_86 = arith.constant 0 : index
    %c112 = arith.constant 112 : index
    %355 = vector.load %arg6[%c0_86, %c112] : memref<4x512xf32, #tpu.memory_space<vmem>>, vector<4x256xf32>
    %c17 = arith.constant 17 : index
    %356 = memref.load %arg4[%c17] : memref<98xf32, #tpu.memory_space<smem>>
    %c66 = arith.constant 66 : index
    %357 = memref.load %arg4[%c66] : memref<98xf32, #tpu.memory_space<smem>>
    %358 = vector.broadcast %356 : f32 to vector<4x256xf32>
    %359 = arith.mulf %358, %355 : vector<4x256xf32>
    %360 = arith.addf %351, %359 : vector<4x256xf32>
    %361 = vector.broadcast %357 : f32 to vector<4x256xf32>
    %362 = arith.mulf %361, %355 : vector<4x256xf32>
    %363 = arith.addf %354, %362 : vector<4x256xf32>
    %c0_87 = arith.constant 0 : index
    %c128_88 = arith.constant 128 : index
    %364 = vector.load %arg6[%c0_87, %c128_88] : memref<4x512xf32, #tpu.memory_space<vmem>>, vector<4x256xf32>
    %c24 = arith.constant 24 : index
    %365 = memref.load %arg4[%c24] : memref<98xf32, #tpu.memory_space<smem>>
    %c73 = arith.constant 73 : index
    %366 = memref.load %arg4[%c73] : memref<98xf32, #tpu.memory_space<smem>>
    %367 = vector.broadcast %365 : f32 to vector<4x256xf32>
    %368 = arith.mulf %367, %364 : vector<4x256xf32>
    %369 = arith.addf %360, %368 : vector<4x256xf32>
    %370 = vector.broadcast %366 : f32 to vector<4x256xf32>
    %371 = arith.mulf %370, %364 : vector<4x256xf32>
    %372 = arith.addf %363, %371 : vector<4x256xf32>
    %c0_89 = arith.constant 0 : index
    %c144 = arith.constant 144 : index
    %373 = vector.load %arg6[%c0_89, %c144] : memref<4x512xf32, #tpu.memory_space<vmem>>, vector<4x256xf32>
    %c31 = arith.constant 31 : index
    %374 = memref.load %arg4[%c31] : memref<98xf32, #tpu.memory_space<smem>>
    %c80_90 = arith.constant 80 : index
    %375 = memref.load %arg4[%c80_90] : memref<98xf32, #tpu.memory_space<smem>>
    %376 = vector.broadcast %374 : f32 to vector<4x256xf32>
    %377 = arith.mulf %376, %373 : vector<4x256xf32>
    %378 = arith.addf %369, %377 : vector<4x256xf32>
    %379 = vector.broadcast %375 : f32 to vector<4x256xf32>
    %380 = arith.mulf %379, %373 : vector<4x256xf32>
    %381 = arith.addf %372, %380 : vector<4x256xf32>
    %c0_91 = arith.constant 0 : index
    %c160 = arith.constant 160 : index
    %382 = vector.load %arg6[%c0_91, %c160] : memref<4x512xf32, #tpu.memory_space<vmem>>, vector<4x256xf32>
    %c38 = arith.constant 38 : index
    %383 = memref.load %arg4[%c38] : memref<98xf32, #tpu.memory_space<smem>>
    %c87 = arith.constant 87 : index
    %384 = memref.load %arg4[%c87] : memref<98xf32, #tpu.memory_space<smem>>
    %385 = vector.broadcast %383 : f32 to vector<4x256xf32>
    %386 = arith.mulf %385, %382 : vector<4x256xf32>
    %387 = arith.addf %378, %386 : vector<4x256xf32>
    %388 = vector.broadcast %384 : f32 to vector<4x256xf32>
    %389 = arith.mulf %388, %382 : vector<4x256xf32>
    %390 = arith.addf %381, %389 : vector<4x256xf32>
    %c0_92 = arith.constant 0 : index
    %c176 = arith.constant 176 : index
    %391 = vector.load %arg6[%c0_92, %c176] : memref<4x512xf32, #tpu.memory_space<vmem>>, vector<4x256xf32>
    %c45 = arith.constant 45 : index
    %392 = memref.load %arg4[%c45] : memref<98xf32, #tpu.memory_space<smem>>
    %c94_93 = arith.constant 94 : index
    %393 = memref.load %arg4[%c94_93] : memref<98xf32, #tpu.memory_space<smem>>
    %394 = vector.broadcast %392 : f32 to vector<4x256xf32>
    %395 = arith.mulf %394, %391 : vector<4x256xf32>
    %396 = arith.addf %387, %395 : vector<4x256xf32>
    %397 = vector.broadcast %393 : f32 to vector<4x256xf32>
    %398 = arith.mulf %397, %391 : vector<4x256xf32>
    %399 = arith.addf %390, %398 : vector<4x256xf32>
    %cst_94 = arith.constant 0.000000e+00 : f32
    %400 = vector.shape_cast %334 : vector<1x256xi1> to vector<1x256xi1>
    %401 = vector.broadcast %400 : vector<1x256xi1> to vector<4x256xi1>
    %402 = vector.broadcast %cst_94 : f32 to vector<4x256xf32>
    %403 = arith.select %401, %396, %402 : vector<4x256xi1>, vector<4x256xf32>
    %404 = arith.addf %320, %403 : vector<4x256xf32>
    %cst_95 = arith.constant 0.000000e+00 : f32
    %405 = vector.shape_cast %334 : vector<1x256xi1> to vector<1x256xi1>
    %406 = vector.broadcast %405 : vector<1x256xi1> to vector<4x256xi1>
    %407 = vector.broadcast %cst_95 : f32 to vector<4x256xf32>
    %408 = arith.select %406, %399, %407 : vector<4x256xi1>, vector<4x256xf32>
    %409 = arith.addf %325, %408 : vector<4x256xf32>
    %c1_i32_96 = arith.constant 1 : i32
    %410 = vector.broadcast %c1_i32_96 : i32 to vector<1x256xi32>
    %411 = arith.addi %71, %410 : vector<1x256xi32>
    %c0_i32_97 = arith.constant 0 : i32
    %412 = vector.broadcast %c0_i32_97 : i32 to vector<1x256xi32>
    %413 = arith.cmpi sge, %411, %412 : vector<1x256xi32>
    %c1_i32_98 = arith.constant 1 : i32
    %414 = vector.broadcast %c1_i32_98 : i32 to vector<1x256xi32>
    %415 = arith.addi %71, %414 : vector<1x256xi32>
    %c16_i32_99 = arith.constant 16 : i32
    %416 = vector.broadcast %c16_i32_99 : i32 to vector<1x256xi32>
    %417 = arith.cmpi slt, %415, %416 : vector<1x256xi32>
    %418 = arith.andi %413, %417 : vector<1x256xi1>
    %cst_100 = arith.constant 0.000000e+00 : f32
    %419 = vector.broadcast %cst_100 : f32 to vector<4x256xf32>
    %cst_101 = arith.constant 0.000000e+00 : f32
    %420 = vector.broadcast %cst_101 : f32 to vector<4x256xf32>
    %c0_102 = arith.constant 0 : index
    %c81 = arith.constant 81 : index
    %421 = vector.load %arg6[%c0_102, %c81] : memref<4x512xf32, #tpu.memory_space<vmem>>, vector<4x256xf32>
    %c4 = arith.constant 4 : index
    %422 = memref.load %arg4[%c4] : memref<98xf32, #tpu.memory_space<smem>>
    %c53 = arith.constant 53 : index
    %423 = memref.load %arg4[%c53] : memref<98xf32, #tpu.memory_space<smem>>
    %424 = vector.broadcast %422 : f32 to vector<4x256xf32>
    %425 = arith.mulf %424, %421 : vector<4x256xf32>
    %426 = arith.addf %419, %425 : vector<4x256xf32>
    %427 = vector.broadcast %423 : f32 to vector<4x256xf32>
    %428 = arith.mulf %427, %421 : vector<4x256xf32>
    %429 = arith.addf %420, %428 : vector<4x256xf32>
    %c0_103 = arith.constant 0 : index
    %c97 = arith.constant 97 : index
    %430 = vector.load %arg6[%c0_103, %c97] : memref<4x512xf32, #tpu.memory_space<vmem>>, vector<4x256xf32>
    %c11 = arith.constant 11 : index
    %431 = memref.load %arg4[%c11] : memref<98xf32, #tpu.memory_space<smem>>
    %c60 = arith.constant 60 : index
    %432 = memref.load %arg4[%c60] : memref<98xf32, #tpu.memory_space<smem>>
    %433 = vector.broadcast %431 : f32 to vector<4x256xf32>
    %434 = arith.mulf %433, %430 : vector<4x256xf32>
    %435 = arith.addf %426, %434 : vector<4x256xf32>
    %436 = vector.broadcast %432 : f32 to vector<4x256xf32>
    %437 = arith.mulf %436, %430 : vector<4x256xf32>
    %438 = arith.addf %429, %437 : vector<4x256xf32>
    %c0_104 = arith.constant 0 : index
    %c113 = arith.constant 113 : index
    %439 = vector.load %arg6[%c0_104, %c113] : memref<4x512xf32, #tpu.memory_space<vmem>>, vector<4x256xf32>
    %c18 = arith.constant 18 : index
    %440 = memref.load %arg4[%c18] : memref<98xf32, #tpu.memory_space<smem>>
    %c67 = arith.constant 67 : index
    %441 = memref.load %arg4[%c67] : memref<98xf32, #tpu.memory_space<smem>>
    %442 = vector.broadcast %440 : f32 to vector<4x256xf32>
    %443 = arith.mulf %442, %439 : vector<4x256xf32>
    %444 = arith.addf %435, %443 : vector<4x256xf32>
    %445 = vector.broadcast %441 : f32 to vector<4x256xf32>
    %446 = arith.mulf %445, %439 : vector<4x256xf32>
    %447 = arith.addf %438, %446 : vector<4x256xf32>
    %c0_105 = arith.constant 0 : index
    %c129 = arith.constant 129 : index
    %448 = vector.load %arg6[%c0_105, %c129] : memref<4x512xf32, #tpu.memory_space<vmem>>, vector<4x256xf32>
    %c25 = arith.constant 25 : index
    %449 = memref.load %arg4[%c25] : memref<98xf32, #tpu.memory_space<smem>>
    %c74 = arith.constant 74 : index
    %450 = memref.load %arg4[%c74] : memref<98xf32, #tpu.memory_space<smem>>
    %451 = vector.broadcast %449 : f32 to vector<4x256xf32>
    %452 = arith.mulf %451, %448 : vector<4x256xf32>
    %453 = arith.addf %444, %452 : vector<4x256xf32>
    %454 = vector.broadcast %450 : f32 to vector<4x256xf32>
    %455 = arith.mulf %454, %448 : vector<4x256xf32>
    %456 = arith.addf %447, %455 : vector<4x256xf32>
    %c0_106 = arith.constant 0 : index
    %c145 = arith.constant 145 : index
    %457 = vector.load %arg6[%c0_106, %c145] : memref<4x512xf32, #tpu.memory_space<vmem>>, vector<4x256xf32>
    %c32 = arith.constant 32 : index
    %458 = memref.load %arg4[%c32] : memref<98xf32, #tpu.memory_space<smem>>
    %c81_107 = arith.constant 81 : index
    %459 = memref.load %arg4[%c81_107] : memref<98xf32, #tpu.memory_space<smem>>
    %460 = vector.broadcast %458 : f32 to vector<4x256xf32>
    %461 = arith.mulf %460, %457 : vector<4x256xf32>
    %462 = arith.addf %453, %461 : vector<4x256xf32>
    %463 = vector.broadcast %459 : f32 to vector<4x256xf32>
    %464 = arith.mulf %463, %457 : vector<4x256xf32>
    %465 = arith.addf %456, %464 : vector<4x256xf32>
    %c0_108 = arith.constant 0 : index
    %c161 = arith.constant 161 : index
    %466 = vector.load %arg6[%c0_108, %c161] : memref<4x512xf32, #tpu.memory_space<vmem>>, vector<4x256xf32>
    %c39 = arith.constant 39 : index
    %467 = memref.load %arg4[%c39] : memref<98xf32, #tpu.memory_space<smem>>
    %c88 = arith.constant 88 : index
    %468 = memref.load %arg4[%c88] : memref<98xf32, #tpu.memory_space<smem>>
    %469 = vector.broadcast %467 : f32 to vector<4x256xf32>
    %470 = arith.mulf %469, %466 : vector<4x256xf32>
    %471 = arith.addf %462, %470 : vector<4x256xf32>
    %472 = vector.broadcast %468 : f32 to vector<4x256xf32>
    %473 = arith.mulf %472, %466 : vector<4x256xf32>
    %474 = arith.addf %465, %473 : vector<4x256xf32>
    %c0_109 = arith.constant 0 : index
    %c177 = arith.constant 177 : index
    %475 = vector.load %arg6[%c0_109, %c177] : memref<4x512xf32, #tpu.memory_space<vmem>>, vector<4x256xf32>
    %c46 = arith.constant 46 : index
    %476 = memref.load %arg4[%c46] : memref<98xf32, #tpu.memory_space<smem>>
    %c95_110 = arith.constant 95 : index
    %477 = memref.load %arg4[%c95_110] : memref<98xf32, #tpu.memory_space<smem>>
    %478 = vector.broadcast %476 : f32 to vector<4x256xf32>
    %479 = arith.mulf %478, %475 : vector<4x256xf32>
    %480 = arith.addf %471, %479 : vector<4x256xf32>
    %481 = vector.broadcast %477 : f32 to vector<4x256xf32>
    %482 = arith.mulf %481, %475 : vector<4x256xf32>
    %483 = arith.addf %474, %482 : vector<4x256xf32>
    %cst_111 = arith.constant 0.000000e+00 : f32
    %484 = vector.shape_cast %418 : vector<1x256xi1> to vector<1x256xi1>
    %485 = vector.broadcast %484 : vector<1x256xi1> to vector<4x256xi1>
    %486 = vector.broadcast %cst_111 : f32 to vector<4x256xf32>
    %487 = arith.select %485, %480, %486 : vector<4x256xi1>, vector<4x256xf32>
    %488 = arith.addf %404, %487 : vector<4x256xf32>
    %cst_112 = arith.constant 0.000000e+00 : f32
    %489 = vector.shape_cast %418 : vector<1x256xi1> to vector<1x256xi1>
    %490 = vector.broadcast %489 : vector<1x256xi1> to vector<4x256xi1>
    %491 = vector.broadcast %cst_112 : f32 to vector<4x256xf32>
    %492 = arith.select %490, %483, %491 : vector<4x256xi1>, vector<4x256xf32>
    %493 = arith.addf %409, %492 : vector<4x256xf32>
    %c2_i32 = arith.constant 2 : i32
    %494 = vector.broadcast %c2_i32 : i32 to vector<1x256xi32>
    %495 = arith.addi %71, %494 : vector<1x256xi32>
    %c0_i32_113 = arith.constant 0 : i32
    %496 = vector.broadcast %c0_i32_113 : i32 to vector<1x256xi32>
    %497 = arith.cmpi sge, %495, %496 : vector<1x256xi32>
    %c2_i32_114 = arith.constant 2 : i32
    %498 = vector.broadcast %c2_i32_114 : i32 to vector<1x256xi32>
    %499 = arith.addi %71, %498 : vector<1x256xi32>
    %c16_i32_115 = arith.constant 16 : i32
    %500 = vector.broadcast %c16_i32_115 : i32 to vector<1x256xi32>
    %501 = arith.cmpi slt, %499, %500 : vector<1x256xi32>
    %502 = arith.andi %497, %501 : vector<1x256xi1>
    %cst_116 = arith.constant 0.000000e+00 : f32
    %503 = vector.broadcast %cst_116 : f32 to vector<4x256xf32>
    %cst_117 = arith.constant 0.000000e+00 : f32
    %504 = vector.broadcast %cst_117 : f32 to vector<4x256xf32>
    %c0_118 = arith.constant 0 : index
    %c82 = arith.constant 82 : index
    %505 = vector.load %arg6[%c0_118, %c82] : memref<4x512xf32, #tpu.memory_space<vmem>>, vector<4x256xf32>
    %c5 = arith.constant 5 : index
    %506 = memref.load %arg4[%c5] : memref<98xf32, #tpu.memory_space<smem>>
    %c54 = arith.constant 54 : index
    %507 = memref.load %arg4[%c54] : memref<98xf32, #tpu.memory_space<smem>>
    %508 = vector.broadcast %506 : f32 to vector<4x256xf32>
    %509 = arith.mulf %508, %505 : vector<4x256xf32>
    %510 = arith.addf %503, %509 : vector<4x256xf32>
    %511 = vector.broadcast %507 : f32 to vector<4x256xf32>
    %512 = arith.mulf %511, %505 : vector<4x256xf32>
    %513 = arith.addf %504, %512 : vector<4x256xf32>
    %c0_119 = arith.constant 0 : index
    %c98 = arith.constant 98 : index
    %514 = vector.load %arg6[%c0_119, %c98] : memref<4x512xf32, #tpu.memory_space<vmem>>, vector<4x256xf32>
    %c12 = arith.constant 12 : index
    %515 = memref.load %arg4[%c12] : memref<98xf32, #tpu.memory_space<smem>>
    %c61 = arith.constant 61 : index
    %516 = memref.load %arg4[%c61] : memref<98xf32, #tpu.memory_space<smem>>
    %517 = vector.broadcast %515 : f32 to vector<4x256xf32>
    %518 = arith.mulf %517, %514 : vector<4x256xf32>
    %519 = arith.addf %510, %518 : vector<4x256xf32>
    %520 = vector.broadcast %516 : f32 to vector<4x256xf32>
    %521 = arith.mulf %520, %514 : vector<4x256xf32>
    %522 = arith.addf %513, %521 : vector<4x256xf32>
    %c0_120 = arith.constant 0 : index
    %c114 = arith.constant 114 : index
    %523 = vector.load %arg6[%c0_120, %c114] : memref<4x512xf32, #tpu.memory_space<vmem>>, vector<4x256xf32>
    %c19 = arith.constant 19 : index
    %524 = memref.load %arg4[%c19] : memref<98xf32, #tpu.memory_space<smem>>
    %c68 = arith.constant 68 : index
    %525 = memref.load %arg4[%c68] : memref<98xf32, #tpu.memory_space<smem>>
    %526 = vector.broadcast %524 : f32 to vector<4x256xf32>
    %527 = arith.mulf %526, %523 : vector<4x256xf32>
    %528 = arith.addf %519, %527 : vector<4x256xf32>
    %529 = vector.broadcast %525 : f32 to vector<4x256xf32>
    %530 = arith.mulf %529, %523 : vector<4x256xf32>
    %531 = arith.addf %522, %530 : vector<4x256xf32>
    %c0_121 = arith.constant 0 : index
    %c130 = arith.constant 130 : index
    %532 = vector.load %arg6[%c0_121, %c130] : memref<4x512xf32, #tpu.memory_space<vmem>>, vector<4x256xf32>
    %c26 = arith.constant 26 : index
    %533 = memref.load %arg4[%c26] : memref<98xf32, #tpu.memory_space<smem>>
    %c75 = arith.constant 75 : index
    %534 = memref.load %arg4[%c75] : memref<98xf32, #tpu.memory_space<smem>>
    %535 = vector.broadcast %533 : f32 to vector<4x256xf32>
    %536 = arith.mulf %535, %532 : vector<4x256xf32>
    %537 = arith.addf %528, %536 : vector<4x256xf32>
    %538 = vector.broadcast %534 : f32 to vector<4x256xf32>
    %539 = arith.mulf %538, %532 : vector<4x256xf32>
    %540 = arith.addf %531, %539 : vector<4x256xf32>
    %c0_122 = arith.constant 0 : index
    %c146 = arith.constant 146 : index
    %541 = vector.load %arg6[%c0_122, %c146] : memref<4x512xf32, #tpu.memory_space<vmem>>, vector<4x256xf32>
    %c33 = arith.constant 33 : index
    %542 = memref.load %arg4[%c33] : memref<98xf32, #tpu.memory_space<smem>>
    %c82_123 = arith.constant 82 : index
    %543 = memref.load %arg4[%c82_123] : memref<98xf32, #tpu.memory_space<smem>>
    %544 = vector.broadcast %542 : f32 to vector<4x256xf32>
    %545 = arith.mulf %544, %541 : vector<4x256xf32>
    %546 = arith.addf %537, %545 : vector<4x256xf32>
    %547 = vector.broadcast %543 : f32 to vector<4x256xf32>
    %548 = arith.mulf %547, %541 : vector<4x256xf32>
    %549 = arith.addf %540, %548 : vector<4x256xf32>
    %c0_124 = arith.constant 0 : index
    %c162 = arith.constant 162 : index
    %550 = vector.load %arg6[%c0_124, %c162] : memref<4x512xf32, #tpu.memory_space<vmem>>, vector<4x256xf32>
    %c40 = arith.constant 40 : index
    %551 = memref.load %arg4[%c40] : memref<98xf32, #tpu.memory_space<smem>>
    %c89 = arith.constant 89 : index
    %552 = memref.load %arg4[%c89] : memref<98xf32, #tpu.memory_space<smem>>
    %553 = vector.broadcast %551 : f32 to vector<4x256xf32>
    %554 = arith.mulf %553, %550 : vector<4x256xf32>
    %555 = arith.addf %546, %554 : vector<4x256xf32>
    %556 = vector.broadcast %552 : f32 to vector<4x256xf32>
    %557 = arith.mulf %556, %550 : vector<4x256xf32>
    %558 = arith.addf %549, %557 : vector<4x256xf32>
    %c0_125 = arith.constant 0 : index
    %c178 = arith.constant 178 : index
    %559 = vector.load %arg6[%c0_125, %c178] : memref<4x512xf32, #tpu.memory_space<vmem>>, vector<4x256xf32>
    %c47 = arith.constant 47 : index
    %560 = memref.load %arg4[%c47] : memref<98xf32, #tpu.memory_space<smem>>
    %c96_126 = arith.constant 96 : index
    %561 = memref.load %arg4[%c96_126] : memref<98xf32, #tpu.memory_space<smem>>
    %562 = vector.broadcast %560 : f32 to vector<4x256xf32>
    %563 = arith.mulf %562, %559 : vector<4x256xf32>
    %564 = arith.addf %555, %563 : vector<4x256xf32>
    %565 = vector.broadcast %561 : f32 to vector<4x256xf32>
    %566 = arith.mulf %565, %559 : vector<4x256xf32>
    %567 = arith.addf %558, %566 : vector<4x256xf32>
    %cst_127 = arith.constant 0.000000e+00 : f32
    %568 = vector.shape_cast %502 : vector<1x256xi1> to vector<1x256xi1>
    %569 = vector.broadcast %568 : vector<1x256xi1> to vector<4x256xi1>
    %570 = vector.broadcast %cst_127 : f32 to vector<4x256xf32>
    %571 = arith.select %569, %564, %570 : vector<4x256xi1>, vector<4x256xf32>
    %572 = arith.addf %488, %571 : vector<4x256xf32>
    %cst_128 = arith.constant 0.000000e+00 : f32
    %573 = vector.shape_cast %502 : vector<1x256xi1> to vector<1x256xi1>
    %574 = vector.broadcast %573 : vector<1x256xi1> to vector<4x256xi1>
    %575 = vector.broadcast %cst_128 : f32 to vector<4x256xf32>
    %576 = arith.select %574, %567, %575 : vector<4x256xi1>, vector<4x256xf32>
    %577 = arith.addf %493, %576 : vector<4x256xf32>
    %c3_i32 = arith.constant 3 : i32
    %578 = vector.broadcast %c3_i32 : i32 to vector<1x256xi32>
    %579 = arith.addi %71, %578 : vector<1x256xi32>
    %c0_i32_129 = arith.constant 0 : i32
    %580 = vector.broadcast %c0_i32_129 : i32 to vector<1x256xi32>
    %581 = arith.cmpi sge, %579, %580 : vector<1x256xi32>
    %c3_i32_130 = arith.constant 3 : i32
    %582 = vector.broadcast %c3_i32_130 : i32 to vector<1x256xi32>
    %583 = arith.addi %71, %582 : vector<1x256xi32>
    %c16_i32_131 = arith.constant 16 : i32
    %584 = vector.broadcast %c16_i32_131 : i32 to vector<1x256xi32>
    %585 = arith.cmpi slt, %583, %584 : vector<1x256xi32>
    %586 = arith.andi %581, %585 : vector<1x256xi1>
    %cst_132 = arith.constant 0.000000e+00 : f32
    %587 = vector.broadcast %cst_132 : f32 to vector<4x256xf32>
    %cst_133 = arith.constant 0.000000e+00 : f32
    %588 = vector.broadcast %cst_133 : f32 to vector<4x256xf32>
    %c0_134 = arith.constant 0 : index
    %c83 = arith.constant 83 : index
    %589 = vector.load %arg6[%c0_134, %c83] : memref<4x512xf32, #tpu.memory_space<vmem>>, vector<4x256xf32>
    %c6 = arith.constant 6 : index
    %590 = memref.load %arg4[%c6] : memref<98xf32, #tpu.memory_space<smem>>
    %c55 = arith.constant 55 : index
    %591 = memref.load %arg4[%c55] : memref<98xf32, #tpu.memory_space<smem>>
    %592 = vector.broadcast %590 : f32 to vector<4x256xf32>
    %593 = arith.mulf %592, %589 : vector<4x256xf32>
    %594 = arith.addf %587, %593 : vector<4x256xf32>
    %595 = vector.broadcast %591 : f32 to vector<4x256xf32>
    %596 = arith.mulf %595, %589 : vector<4x256xf32>
    %597 = arith.addf %588, %596 : vector<4x256xf32>
    %c0_135 = arith.constant 0 : index
    %c99 = arith.constant 99 : index
    %598 = vector.load %arg6[%c0_135, %c99] : memref<4x512xf32, #tpu.memory_space<vmem>>, vector<4x256xf32>
    %c13 = arith.constant 13 : index
    %599 = memref.load %arg4[%c13] : memref<98xf32, #tpu.memory_space<smem>>
    %c62 = arith.constant 62 : index
    %600 = memref.load %arg4[%c62] : memref<98xf32, #tpu.memory_space<smem>>
    %601 = vector.broadcast %599 : f32 to vector<4x256xf32>
    %602 = arith.mulf %601, %598 : vector<4x256xf32>
    %603 = arith.addf %594, %602 : vector<4x256xf32>
    %604 = vector.broadcast %600 : f32 to vector<4x256xf32>
    %605 = arith.mulf %604, %598 : vector<4x256xf32>
    %606 = arith.addf %597, %605 : vector<4x256xf32>
    %c0_136 = arith.constant 0 : index
    %c115 = arith.constant 115 : index
    %607 = vector.load %arg6[%c0_136, %c115] : memref<4x512xf32, #tpu.memory_space<vmem>>, vector<4x256xf32>
    %c20 = arith.constant 20 : index
    %608 = memref.load %arg4[%c20] : memref<98xf32, #tpu.memory_space<smem>>
    %c69 = arith.constant 69 : index
    %609 = memref.load %arg4[%c69] : memref<98xf32, #tpu.memory_space<smem>>
    %610 = vector.broadcast %608 : f32 to vector<4x256xf32>
    %611 = arith.mulf %610, %607 : vector<4x256xf32>
    %612 = arith.addf %603, %611 : vector<4x256xf32>
    %613 = vector.broadcast %609 : f32 to vector<4x256xf32>
    %614 = arith.mulf %613, %607 : vector<4x256xf32>
    %615 = arith.addf %606, %614 : vector<4x256xf32>
    %c0_137 = arith.constant 0 : index
    %c131 = arith.constant 131 : index
    %616 = vector.load %arg6[%c0_137, %c131] : memref<4x512xf32, #tpu.memory_space<vmem>>, vector<4x256xf32>
    %c27 = arith.constant 27 : index
    %617 = memref.load %arg4[%c27] : memref<98xf32, #tpu.memory_space<smem>>
    %c76 = arith.constant 76 : index
    %618 = memref.load %arg4[%c76] : memref<98xf32, #tpu.memory_space<smem>>
    %619 = vector.broadcast %617 : f32 to vector<4x256xf32>
    %620 = arith.mulf %619, %616 : vector<4x256xf32>
    %621 = arith.addf %612, %620 : vector<4x256xf32>
    %622 = vector.broadcast %618 : f32 to vector<4x256xf32>
    %623 = arith.mulf %622, %616 : vector<4x256xf32>
    %624 = arith.addf %615, %623 : vector<4x256xf32>
    %c0_138 = arith.constant 0 : index
    %c147 = arith.constant 147 : index
    %625 = vector.load %arg6[%c0_138, %c147] : memref<4x512xf32, #tpu.memory_space<vmem>>, vector<4x256xf32>
    %c34 = arith.constant 34 : index
    %626 = memref.load %arg4[%c34] : memref<98xf32, #tpu.memory_space<smem>>
    %c83_139 = arith.constant 83 : index
    %627 = memref.load %arg4[%c83_139] : memref<98xf32, #tpu.memory_space<smem>>
    %628 = vector.broadcast %626 : f32 to vector<4x256xf32>
    %629 = arith.mulf %628, %625 : vector<4x256xf32>
    %630 = arith.addf %621, %629 : vector<4x256xf32>
    %631 = vector.broadcast %627 : f32 to vector<4x256xf32>
    %632 = arith.mulf %631, %625 : vector<4x256xf32>
    %633 = arith.addf %624, %632 : vector<4x256xf32>
    %c0_140 = arith.constant 0 : index
    %c163 = arith.constant 163 : index
    %634 = vector.load %arg6[%c0_140, %c163] : memref<4x512xf32, #tpu.memory_space<vmem>>, vector<4x256xf32>
    %c41 = arith.constant 41 : index
    %635 = memref.load %arg4[%c41] : memref<98xf32, #tpu.memory_space<smem>>
    %c90 = arith.constant 90 : index
    %636 = memref.load %arg4[%c90] : memref<98xf32, #tpu.memory_space<smem>>
    %637 = vector.broadcast %635 : f32 to vector<4x256xf32>
    %638 = arith.mulf %637, %634 : vector<4x256xf32>
    %639 = arith.addf %630, %638 : vector<4x256xf32>
    %640 = vector.broadcast %636 : f32 to vector<4x256xf32>
    %641 = arith.mulf %640, %634 : vector<4x256xf32>
    %642 = arith.addf %633, %641 : vector<4x256xf32>
    %c0_141 = arith.constant 0 : index
    %c179 = arith.constant 179 : index
    %643 = vector.load %arg6[%c0_141, %c179] : memref<4x512xf32, #tpu.memory_space<vmem>>, vector<4x256xf32>
    %c48 = arith.constant 48 : index
    %644 = memref.load %arg4[%c48] : memref<98xf32, #tpu.memory_space<smem>>
    %c97_142 = arith.constant 97 : index
    %645 = memref.load %arg4[%c97_142] : memref<98xf32, #tpu.memory_space<smem>>
    %646 = vector.broadcast %644 : f32 to vector<4x256xf32>
    %647 = arith.mulf %646, %643 : vector<4x256xf32>
    %648 = arith.addf %639, %647 : vector<4x256xf32>
    %649 = vector.broadcast %645 : f32 to vector<4x256xf32>
    %650 = arith.mulf %649, %643 : vector<4x256xf32>
    %651 = arith.addf %642, %650 : vector<4x256xf32>
    %cst_143 = arith.constant 0.000000e+00 : f32
    %652 = vector.shape_cast %586 : vector<1x256xi1> to vector<1x256xi1>
    %653 = vector.broadcast %652 : vector<1x256xi1> to vector<4x256xi1>
    %654 = vector.broadcast %cst_143 : f32 to vector<4x256xf32>
    %655 = arith.select %653, %648, %654 : vector<4x256xi1>, vector<4x256xf32>
    %656 = arith.addf %572, %655 : vector<4x256xf32>
    %cst_144 = arith.constant 0.000000e+00 : f32
    %657 = vector.shape_cast %586 : vector<1x256xi1> to vector<1x256xi1>
    %658 = vector.broadcast %657 : vector<1x256xi1> to vector<4x256xi1>
    %659 = vector.broadcast %cst_144 : f32 to vector<4x256xf32>
    %660 = arith.select %658, %651, %659 : vector<4x256xi1>, vector<4x256xf32>
    %661 = arith.addf %577, %660 : vector<4x256xf32>
    %662 = vector.extract_strided_slice %656 {offsets = [0, 0], sizes = [2, 256], strides = [1, 1]} : vector<4x256xf32> to vector<2x256xf32>
    %663 = vector.extract_strided_slice %661 {offsets = [2, 0], sizes = [2, 256], strides = [1, 1]} : vector<4x256xf32> to vector<2x256xf32>
    %664 = arith.addf %662, %663 : vector<2x256xf32>
    %665 = arith.negf %664 : vector<2x256xf32>
    %666 = math.exp %665 : vector<2x256xf32>
    %cst_145 = arith.constant 1.000000e+00 : f32
    %667 = vector.broadcast %cst_145 : f32 to vector<2x256xf32>
    %668 = arith.addf %667, %666 : vector<2x256xf32>
    %669 = arith.divf %667, %668 : vector<2x256xf32>
    %670 = vector.shape_cast %669 : vector<2x256xf32> to vector<2x1x256xf32>
    %c0_146 = arith.constant 0 : index
    %c0_147 = arith.constant 0 : index
    %c0_148 = arith.constant 0 : index
    %671 = vector.load %arg5[%c0_146, %c0_147, %c0_148] : memref<2x32x256xf32, #tpu.memory_space<vmem>>, vector<2x32x256xf32>
    %672 = vector.broadcast %670 : vector<2x1x256xf32> to vector<2x32x256xf32>
    %673 = arith.mulf %672, %671 : vector<2x32x256xf32>
    %c0_149 = arith.constant 0 : index
    %c0_150 = arith.constant 0 : index
    %c0_151 = arith.constant 0 : index
    %674 = vector.load %arg5[%c0_149, %c0_150, %c0_151] : memref<2x32x256xf32, #tpu.memory_space<vmem>>, vector<2x32x256xf32>
    tpu.vector_store %arg5[%c0_149, %c0_150, %c0_151], %673 {strides = array<i32>} : memref<2x32x256xf32, #tpu.memory_space<vmem>>, vector<2x32x256xf32>,
    return
  }
  func.func @transform_0(%arg0: i32) -> (i32, i32, i32) {
    %c0_i32 = arith.constant 0 : i32
    %c0_i32_0 = arith.constant 0 : i32
    %c0_i32_1 = arith.constant 0 : i32
    %c0_i32_2 = arith.constant 0 : i32
    return %c0_i32, %c0_i32_0, %c0_i32_1 : i32, i32, i32
  }
  func.func @transform_1(%arg0: i32) -> (i32, i32) {
    %c0_i32 = arith.constant 0 : i32
    %c0_i32_0 = arith.constant 0 : i32
    %c0_i32_1 = arith.constant 0 : i32
    return %c0_i32, %c0_i32_0 : i32, i32
  }
  func.func @transform_2(%arg0: i32) -> (i32, i32) {
    %c0_i32 = arith.constant 0 : i32
    %c0_i32_0 = arith.constant 0 : i32
    %c0_i32_1 = arith.constant 0 : i32
    return %c0_i32, %c0_i32_0 : i32, i32
  }
  func.func @transform_3(%arg0: i32) -> i32 {
    %c0_i32 = arith.constant 0 : i32
    %c0_i32_0 = arith.constant 0 : i32
    return %c0_i32 : i32
  }
  func.func @transform_4(%arg0: i32) -> (i32, i32, i32) {
    %c0_i32 = arith.constant 0 : i32
    %c0_i32_0 = arith.constant 0 : i32
    %c0_i32_1 = arith.constant 0 : i32
    %c0_i32_2 = arith.constant 0 : i32
    return %c0_i32, %c0_i32_0, %c0_i32_1 : i32, i32, i32
  }
}

</mosaic_0001>

<llo_original>
// kernel: tpu_custom_call.1
$region0: #{tpu_custom_call.1}
  #allocation0 [shape = 'u32[]', space=smem, size = 0x4, offset = 0x4, fixed_abs, tag = 'smem constant byte address 0x4 - core index']
  #allocation1 [shape = 'u32[144,128]{1,0:T(1,128)}', space=vmem, size = 0x12000, scoped, tag = 'internal scratch']
  #allocation2 [shape = 'f32[4,512]{1,0:T(4,128)}', space=vmem, size = 0x2000, scoped, tag = 'scratch operand']
  %s0 = inlined_call_operand.hbm [shape: f32[2,32,256], index: 0, kind: input, shape index: {}]
  %s1 = inlined_call_operand.hbm [shape: f32[2,32], index: 1, kind: input, shape index: {}]
  %s2 = inlined_call_operand.vmem [shape: f32[2,32], index: 2, kind: input, shape index: {}]
  %s3 = inlined_call_operand.vmem [shape: f32[98], index: 3, kind: input, shape index: {}]
  %s4 = inlined_call_operand.hbm [shape: f32[2,32,256], index: 4, kind: output, shape index: {}]
  %s5 = sld [smem:[#allocation0]]
  $region38: #{tpu_custom_call.1} parent=0
    _
  %s7 = ssub.s32 1, %s5
  %s8 = scalar_select 0, %s7, %s5
  $region1: #{tpu_custom_call.1} parent=0
    #allocation3 [shape = 'u8[65536]{0}', space=vmem, size = 0x10000, scoped, tag = 'input window, operand 0, single buffered']
    #allocation4 [shape = 's32[1]{0}', space=sflag, size = 0x4, scoped, tag = 'scoped memory for tpu_custom_call.1']
    #allocation5 [shape = 's32[1]{0}', space=sflag, size = 0x4, scoped, tag = 'scoped memory for tpu_custom_call.1']
    #allocation6 [shape = 's32[1]{0}', space=sflag, size = 0x4, scoped, tag = 'scoped memory for tpu_custom_call.1']
    #allocation7 [shape = 'u8[1024]{0}', space=vmem, size = 0x400, scoped, tag = 'input window, operand 1, single buffered']
    #allocation8 [shape = 's32[1]{0}', space=sflag, size = 0x4, scoped, tag = 'scoped memory for tpu_custom_call.1']
    #allocation9 [shape = 'u8[512]{0}', space=smem, size = 0x200, scoped, tag = 'input window, operand 3, single buffered']
    #allocation10 [shape = 'u8[65536]{0}', space=vmem, size = 0x10000, scoped, tag = 'output window, operand 0, single buffered']
    %9 = vsyncpa [#allocation4], 0
    %10 = vsyncpa [#allocation8], 0
    %11 = vsyncpa [#allocation6], 0
    %12 = vsyncpa [#allocation5], 0
    // Predicated region
    $region2: #{tpu_custom_call.1} parent=1 // pred_check
      _
    $region3: #{tpu_custom_call.1} parent=1 // pred_check_branch
      %14 = sbr.rel (0) target = $region5
    $region4: #{tpu_custom_call.1} parent=1 // pred_region
      %s16 = ssub.s32 2048, 2048
      %17 = vsyncadd [#allocation4], %s16
      %s18 = sshll.u32 [#allocation3], 4
      %s19 = int_to_ptr.vmem [resolvable:$true] %s18
      %24 = dma.hbm_to_vmem [thread:$0]  %s0, 2048, %s19, [#allocation4], 256, 256, 16
    $region5: #{tpu_custom_call.1} parent=1 // pred_fallthru
      _
    // Predicated region
    $region6: #{tpu_custom_call.1} parent=1 // pred_check
      _
    $region7: #{tpu_custom_call.1} parent=1 // pred_check_branch
      %26 = sbr.rel (0) target = $region9
    $region8: #{tpu_custom_call.1} parent=1 // pred_region
      %s28 = ssub.s32 32, 32
      %29 = vsyncadd [#allocation8], %s28
      %s31 = sshll.u32 [#allocation7], 4
      %s32 = int_to_ptr.vmem [resolvable:$true] %s31
      %34 = dma.hbm_to_vmem [thread:$0]  %s1, 32, %s32, [#allocation8]
    $region9: #{tpu_custom_call.1} parent=1 // pred_fallthru
      _
    // Predicated region
    $region10: #{tpu_custom_call.1} parent=1 // pred_check
      _
    $region11: #{tpu_custom_call.1} parent=1 // pred_check_branch
      %36 = sbr.rel (0) target = $region13
    $region12: #{tpu_custom_call.1} parent=1 // pred_region
      _
    $region13: #{tpu_custom_call.1} parent=1 // pred_fallthru
      _
    // Predicated region
    $region14: #{tpu_custom_call.1} parent=1 // pred_check
      _
    $region15: #{tpu_custom_call.1} parent=1 // pred_check_branch
      %38 = sbr.rel (0) target = $region17
    $region16: #{tpu_custom_call.1} parent=1 // pred_region
      %s40 = ssub.s32 16, 16
      %41 = vsyncadd [#allocation6], %s40
      %s43 = sshll.u32 %s3, 4
      %s44 = int_to_ptr.vmem [resolvable:$true] %s43
      %46 = dma.vmem_to_smem %s44, 16, [#allocation9], [#allocation6]
    $region17: #{tpu_custom_call.1} parent=1 // pred_fallthru
      _
    // Predicated region
    $region18: #{tpu_custom_call.1} parent=1 // pred_check
      _
    $region19: #{tpu_custom_call.1} parent=1 // pred_check_branch
      %48 = sbr.rel (0) target = $region21
    $region20: #{tpu_custom_call.1} parent=1 // pred_region
      %49 = dma.done [#allocation4], 2048
    $region21: #{tpu_custom_call.1} parent=1 // pred_fallthru
      _
    // Predicated region
    $region22: #{tpu_custom_call.1} parent=1 // pred_check
      _
    $region23: #{tpu_custom_call.1} parent=1 // pred_check_branch
      %51 = sbr.rel (0) target = $region25
    $region24: #{tpu_custom_call.1} parent=1 // pred_region
      %52 = dma.done [#allocation8], 32
    $region25: #{tpu_custom_call.1} parent=1 // pred_fallthru
      _
    // Predicated region
    $region26: #{tpu_custom_call.1} parent=1 // pred_check
      _
    $region27: #{tpu_custom_call.1} parent=1 // pred_check_branch
      %54 = sbr.rel (0) target = $region29
    $region28: #{tpu_custom_call.1} parent=1 // pred_region
      %55 = dma.done [#allocation6], 16
    $region29: #{tpu_custom_call.1} parent=1 // pred_fallthru
      _
    %56 = sfence
    %v57 = vld [vmem:[#allocation3] sm:$0xff]
    %v58 = vld [vmem:[#allocation3 + $0x8] sm:$0xff]
    %v59 = vld [vmem:[#allocation3 + $0x10] sm:$0xff]
    %v60 = vld [vmem:[#allocation3 + $0x18] sm:$0xff]
    %v61 = vld [vmem:[#allocation3 + $0x20] sm:$0xff]
    %v62 = vld [vmem:[#allocation3 + $0x28] sm:$0xff]
    %v63 = vld [vmem:[#allocation3 + $0x30] sm:$0xff]
    %v64 = vld [vmem:[#allocation3 + $0x38] sm:$0xff]
    %v65 = vld [vmem:[#allocation3 + $0x40] sm:$0xff]
    %v66 = vld [vmem:[#allocation3 + $0x48] sm:$0xff]
    %v67 = vld [vmem:[#allocation3 + $0x50] sm:$0xff]
    %v68 = vld [vmem:[#allocation3 + $0x58] sm:$0xff]
    %v69 = vld [vmem:[#allocation3 + $0x60] sm:$0xff]
    %v70 = vld [vmem:[#allocation3 + $0x68] sm:$0xff]
    %v71 = vld [vmem:[#allocation3 + $0x70] sm:$0xff]
    %v72 = vld [vmem:[#allocation3 + $0x78] sm:$0xff]
    %v73 = vmax.f32 %v57, %v58
    %74 = vmax.xlane.f32.xlu0 %v73
    %v75 = vpop.xlane.xlu0 %74
    %v76 = vmax.f32 %v59, %v60
    %77 = vmax.xlane.f32.xlu0 %v76
    %v78 = vpop.xlane.xlu0 %77
    %v79 = vmax.f32 %v61, %v62
    %80 = vmax.xlane.f32.xlu0 %v79
    %v81 = vpop.xlane.xlu0 %80
    %v82 = vmax.f32 %v63, %v64
    %83 = vmax.xlane.f32.xlu0 %v82
    %v84 = vpop.xlane.xlu0 %83
    %v85 = vmax.f32 %v65, %v66
    %86 = vmax.xlane.f32.xlu0 %v85
    %v87 = vpop.xlane.xlu0 %86
    %v88 = vmax.f32 %v67, %v68
    %89 = vmax.xlane.f32.xlu0 %v88
    %v90 = vpop.xlane.xlu0 %89
    %v91 = vmax.f32 %v69, %v70
    %92 = vmax.xlane.f32.xlu0 %v91
    %v93 = vpop.xlane.xlu0 %92
    %v94 = vmax.f32 %v71, %v72
    %95 = vmax.xlane.f32.xlu0 %v94
    %v96 = vpop.xlane.xlu0 %95
    %v97 = vadd.f32 %v57, %v58
    %98 = vadd.xlane.f32.xlu0 %v97
    %v99 = vpop.xlane.xlu0 %98
    %v100 = vadd.f32 %v59, %v60
    %101 = vadd.xlane.f32.xlu0 %v100
    %v102 = vpop.xlane.xlu0 %101
    %v103 = vadd.f32 %v61, %v62
    %104 = vadd.xlane.f32.xlu0 %v103
    %v105 = vpop.xlane.xlu0 %104
    %v106 = vadd.f32 %v63, %v64
    %107 = vadd.xlane.f32.xlu0 %v106
    %v108 = vpop.xlane.xlu0 %107
    %v109 = vadd.f32 %v65, %v66
    %110 = vadd.xlane.f32.xlu0 %v109
    %v111 = vpop.xlane.xlu0 %110
    %v112 = vadd.f32 %v67, %v68
    %113 = vadd.xlane.f32.xlu0 %v112
    %v114 = vpop.xlane.xlu0 %113
    %v115 = vadd.f32 %v69, %v70
    %116 = vadd.xlane.f32.xlu0 %v115
    %v117 = vpop.xlane.xlu0 %116
    %v118 = vadd.f32 %v71, %v72
    %119 = vadd.xlane.f32.xlu0 %v118
    %v120 = vpop.xlane.xlu0 %119
    %v121 = vrcp.pop 256.0
    %v122 = vmul.f32 %v99, %v121
    %v123 = vmul.f32 %v102, %v121
    %v124 = vmul.f32 %v105, %v121
    %v125 = vmul.f32 %v108, %v121
    %v126 = vmul.f32 %v111, %v121
    %v127 = vmul.f32 %v114, %v121
    %v128 = vmul.f32 %v117, %v121
    %v129 = vmul.f32 %v120, %v121
    %v138 = vlaneseq
    %v139 = vand.u32 %v138, 127
    %v140 = vlaneseq
    %v141 = vshrl.u32 %v140, 7
    %v142 = vsub.s32 %v139, %v141
    %v143 = vrot.slane %v75, %v142
    %v144 = vadd.s32 %v139, 4294967288
    %v145 = vlaneseq
    %v146 = vshrl.u32 %v145, 7
    %v147 = vsub.s32 %v144, %v146
    %v148 = vrot.slane %v78, %v147
    %vm149 = vcmask 130112
    %v150 = vsel %vm149, %v148, %v143
    %v151 = vadd.s32 %v139, 4294967280
    %v152 = vlaneseq
    %v153 = vshrl.u32 %v152, 7
    %v154 = vsub.s32 %v151, %v153
    %v155 = vrot.slane %v81, %v154
    %vm156 = vcmask 195712
    %v157 = vsel %vm156, %v155, %v150
    %v158 = vadd.s32 %v139, 4294967272
    %v159 = vlaneseq
    %v160 = vshrl.u32 %v159, 7
    %v161 = vsub.s32 %v158, %v160
    %v162 = vrot.slane %v84, %v161
    %vm163 = vcmask 261312
    %v164 = vsel %vm163, %v162, %v157
    %v165 = vlaneseq
    %v166 = vshrl.u32 %v165, 7
    %v167 = vsub.s32 %v139, %v166
    %v168 = vrot.slane %v87, %v167
    %v169 = vlaneseq
    %v170 = vshrl.u32 %v169, 7
    %v171 = vsub.s32 %v144, %v170
    %v172 = vrot.slane %v90, %v171
    %v173 = vsel %vm149, %v172, %v168
    %v174 = vlaneseq
    %v175 = vshrl.u32 %v174, 7
    %v176 = vsub.s32 %v151, %v175
    %v177 = vrot.slane %v93, %v176
    %v178 = vsel %vm156, %v177, %v173
    %v179 = vlaneseq
    %v180 = vshrl.u32 %v179, 7
    %v181 = vsub.s32 %v158, %v180
    %v182 = vrot.slane %v96, %v181
    %v183 = vsel %vm163, %v182, %v178
    %vm184 = vcmask 1041409
    %v185 = vsel %vm184, %v183, %v164
    %v195 = vlaneseq
    %v196 = vshrl.u32 %v195, 7
    %v197 = vsub.s32 %v139, %v196
    %v198 = vrot.slane %v122, %v197
    %v199 = vlaneseq
    %v200 = vshrl.u32 %v199, 7
    %v201 = vsub.s32 %v144, %v200
    %v202 = vrot.slane %v123, %v201
    %v203 = vsel %vm149, %v202, %v198
    %v204 = vlaneseq
    %v205 = vshrl.u32 %v204, 7
    %v206 = vsub.s32 %v151, %v205
    %v207 = vrot.slane %v124, %v206
    %v208 = vsel %vm156, %v207, %v203
    %v209 = vlaneseq
    %v210 = vshrl.u32 %v209, 7
    %v211 = vsub.s32 %v158, %v210
    %v212 = vrot.slane %v125, %v211
    %v213 = vsel %vm163, %v212, %v208
    %v214 = vlaneseq
    %v215 = vshrl.u32 %v214, 7
    %v216 = vsub.s32 %v139, %v215
    %v217 = vrot.slane %v126, %v216
    %v218 = vlaneseq
    %v219 = vshrl.u32 %v218, 7
    %v220 = vsub.s32 %v144, %v219
    %v221 = vrot.slane %v127, %v220
    %v222 = vsel %vm149, %v221, %v217
    %v223 = vlaneseq
    %v224 = vshrl.u32 %v223, 7
    %v225 = vsub.s32 %v151, %v224
    %v226 = vrot.slane %v128, %v225
    %v227 = vsel %vm156, %v226, %v222
    %v228 = vlaneseq
    %v229 = vshrl.u32 %v228, 7
    %v230 = vsub.s32 %v158, %v229
    %v231 = vrot.slane %v129, %v230
    %v232 = vsel %vm163, %v231, %v227
    %vm233 = vcmask 1043459
    %v234 = vsel %vm233, %v232, %v213
    %vm236 = vcmask 1041408
    %v237 = vsel %vm236, %v185, %v234
    %v238 = vld [vmem:[#allocation7] sm:$0x3]
    %v239 = vld [vmem:[%s2] sm:$0x3]
    %v240 = vlaneseq
    %v241 = vshrl.u32 %v240, 7
    %v242 = vsub.s32 0, %v241
    %v243 = vrot.slane %v238, %v242
    %v244 = vmul.f32 %v237, %v243
    %vm245 = vcmask 257024
    %v246 = vsel %vm245, %v244, 0.0
    %247 = vadd.xlane.f32.xlu0 %v246
    %v248 = vpop.xlane.xlu0 %247
    %v249 = vmax.f32 %v248, 0.0
    %v250 = vlaneseq
    %v251 = vshrl.u32 %v250, 7
    %v252 = vsub.s32 0, %v251
    %v253 = vrot.slane %v239, %v252
    %v254 = vmul.f32 %v249, %v253
    %v255 = vadd.f32 %v254, 0.0
    %v256 = vlaneseq
    %v257 = vshrl.u32 %v256, 7
    %v258 = vsub.s32 1, %v257
    %v259 = vrot.slane %v238, %v258
    %v260 = vmul.f32 %v237, %v259
    %v261 = vsel %vm245, %v260, 0.0
    %262 = vadd.xlane.f32.xlu0 %v261
    %v263 = vpop.xlane.xlu0 %262
    %v264 = vmax.f32 %v263, 0.0
    %v265 = vlaneseq
    %v266 = vshrl.u32 %v265, 7
    %v267 = vsub.s32 1, %v266
    %v268 = vrot.slane %v239, %v267
    %v269 = vmul.f32 %v264, %v268
    %v270 = vadd.f32 %v255, %v269
    %v272 = vrot.slane %v270, 2
    %v274 = vadd.f32 %v270, %v272
    %v275 = vxor.u32 %v274, 2147483648
    %v276 = vmul.f32 %v275, 1.442695
    %v277 = vpow.pop %v276
    %v278 = vadd.f32 %v277, 1.0
    %v279 = vrcp.pop %v278
    %v280 = vmul.f32 1.0, %v279
    %v281 = vlaneseq
    %v282 = vshrl.u32 %v281, 7
    %v283 = vsub.s32 0, %v282
    %v284 = vrot.slane %v280, %v283
    %286 = vbcast.lane.b32.xlu0 %v284, 256
    %v287 = vpop.permute.xlu0 %286
    %s289 = sor.u32 256, 8
    %290 = vbcast.lane.b32.xlu0 %v284, %s289
    %v291 = vpop.permute.xlu0 %290
    %s293 = sor.u32 256, 16
    %294 = vbcast.lane.b32.xlu0 %v284, %s293
    %v295 = vpop.permute.xlu0 %294
    %s297 = sor.u32 256, 24
    %298 = vbcast.lane.b32.xlu0 %v284, %s297
    %v299 = vpop.permute.xlu0 %298
    %v300 = vlaneseq
    %v301 = vshrl.u32 %v300, 7
    %v302 = vsub.s32 1, %v301
    %v303 = vrot.slane %v280, %v302
    %305 = vbcast.lane.b32.xlu0 %v303, 256
    %v306 = vpop.permute.xlu0 %305
    %s308 = sor.u32 256, 8
    %309 = vbcast.lane.b32.xlu0 %v303, %s308
    %v310 = vpop.permute.xlu0 %309
    %s312 = sor.u32 256, 16
    %313 = vbcast.lane.b32.xlu0 %v303, %s312
    %v314 = vpop.permute.xlu0 %313
    %s316 = sor.u32 256, 24
    %317 = vbcast.lane.b32.xlu0 %v303, %s316
    %v318 = vpop.permute.xlu0 %317
    %v319 = vmul.f32 %v287, %v57
    %v320 = vmul.f32 %v287, %v58
    %v321 = vmul.f32 %v291, %v59
    %v322 = vmul.f32 %v291, %v60
    %v323 = vmul.f32 %v295, %v61
    %v324 = vmul.f32 %v295, %v62
    %v325 = vmul.f32 %v299, %v63
    %v326 = vmul.f32 %v299, %v64
    %v327 = vmul.f32 %v306, %v65
    %v328 = vmul.f32 %v306, %v66
    %v329 = vmul.f32 %v310, %v67
    %v330 = vmul.f32 %v310, %v68
    %v331 = vmul.f32 %v314, %v69
    %v332 = vmul.f32 %v314, %v70
    %v333 = vmul.f32 %v318, %v71
    %v334 = vmul.f32 %v318, %v72
    %335 = vst [vmem:[#allocation10] sm:$0xff] %v319
    %336 = vst [vmem:[#allocation10 + $0x8] sm:$0xff] %v320
    %337 = vst [vmem:[#allocation10 + $0x10] sm:$0xff] %v321
    %338 = vst [vmem:[#allocation10 + $0x18] sm:$0xff] %v322
    %339 = vst [vmem:[#allocation10 + $0x20] sm:$0xff] %v323
    %340 = vst [vmem:[#allocation10 + $0x28] sm:$0xff] %v324
    %341 = vst [vmem:[#allocation10 + $0x30] sm:$0xff] %v325
    %342 = vst [vmem:[#allocation10 + $0x38] sm:$0xff] %v326
    %343 = vst [vmem:[#allocation10 + $0x40] sm:$0xff] %v327
    %344 = vst [vmem:[#allocation10 + $0x48] sm:$0xff] %v328
    %345 = vst [vmem:[#allocation10 + $0x50] sm:$0xff] %v329
    %346 = vst [vmem:[#allocation10 + $0x58] sm:$0xff] %v330
    %347 = vst [vmem:[#allocation10 + $0x60] sm:$0xff] %v331
    %348 = vst [vmem:[#allocation10 + $0x68] sm:$0xff] %v332
    %349 = vst [vmem:[#allocation10 + $0x70] sm:$0xff] %v333
    %350 = vst [vmem:[#allocation10 + $0x78] sm:$0xff] %v334
    %v351 = vmax.f32 %v319, %v321
    %v352 = vmax.f32 %v351, %v323
    %v353 = vmax.f32 %v352, %v325
    %v354 = vrot.slane %v353, 4
    %v355 = vmax.f32 %v353, %v354
    %v356 = vrot.slane %v355, 2
    %v357 = vmax.f32 %v355, %v356
    %v358 = vrot.slane %v357, 1
    %v359 = vmax.f32 %v357, %v358
    %v360 = vmax.f32 %v320, %v322
    %v361 = vmax.f32 %v360, %v324
    %v362 = vmax.f32 %v361, %v326
    %v363 = vrot.slane %v362, 4
    %v364 = vmax.f32 %v362, %v363
    %v365 = vrot.slane %v364, 2
    %v366 = vmax.f32 %v364, %v365
    %v367 = vrot.slane %v366, 1
    %v368 = vmax.f32 %v366, %v367
    %v369 = vmax.f32 %v327, %v329
    %v370 = vmax.f32 %v369, %v331
    %v371 = vmax.f32 %v370, %v333
    %v372 = vrot.slane %v371, 4
    %v373 = vmax.f32 %v371, %v372
    %v374 = vrot.slane %v373, 2
    %v375 = vmax.f32 %v373, %v374
    %v376 = vrot.slane %v375, 1
    %v377 = vmax.f32 %v375, %v376
    %v378 = vmax.f32 %v328, %v330
    %v379 = vmax.f32 %v378, %v332
    %v380 = vmax.f32 %v379, %v334
    %v381 = vrot.slane %v380, 4
    %v382 = vmax.f32 %v380, %v381
    %v383 = vrot.slane %v382, 2
    %v384 = vmax.f32 %v382, %v383
    %v385 = vrot.slane %v384, 1
    %v386 = vmax.f32 %v384, %v385
    %v387 = vadd.f32 %v319, %v321
    %v388 = vadd.f32 %v387, %v323
    %v389 = vadd.f32 %v388, %v325
    %v390 = vrot.slane %v389, 4
    %v391 = vadd.f32 %v389, %v390
    %v392 = vrot.slane %v391, 2
    %v393 = vadd.f32 %v391, %v392
    %v394 = vrot.slane %v393, 1
    %v395 = vadd.f32 %v393, %v394
    %v396 = vadd.f32 %v320, %v322
    %v397 = vadd.f32 %v396, %v324
    %v398 = vadd.f32 %v397, %v326
    %v399 = vrot.slane %v398, 4
    %v400 = vadd.f32 %v398, %v399
    %v401 = vrot.slane %v400, 2
    %v402 = vadd.f32 %v400, %v401
    %v403 = vrot.slane %v402, 1
    %v404 = vadd.f32 %v402, %v403
    %v405 = vadd.f32 %v327, %v329
    %v406 = vadd.f32 %v405, %v331
    %v407 = vadd.f32 %v406, %v333
    %v408 = vrot.slane %v407, 4
    %v409 = vadd.f32 %v407, %v408
    %v410 = vrot.slane %v409, 2
    %v411 = vadd.f32 %v409, %v410
    %v412 = vrot.slane %v411, 1
    %v413 = vadd.f32 %v411, %v412
    %v414 = vadd.f32 %v328, %v330
    %v415 = vadd.f32 %v414, %v332
    %v416 = vadd.f32 %v415, %v334
    %v417 = vrot.slane %v416, 4
    %v418 = vadd.f32 %v416, %v417
    %v419 = vrot.slane %v418, 2
    %v420 = vadd.f32 %v418, %v419
    %v421 = vrot.slane %v420, 1
    %v422 = vadd.f32 %v420, %v421
    %v423 = vrcp.pop 32.0
    %v424 = vmul.f32 %v395, %v423
    %v425 = vmul.f32 %v404, %v423
    %v426 = vmul.f32 %v413, %v423
    %v427 = vmul.f32 %v422, %v423
    %v432 = vsel %vm184, %v377, %v359
    %v433 = vsel %vm184, %v386, %v368
    %v440 = vsel %vm233, %v426, %v424
    %v441 = vsel %vm233, %v427, %v425
    %v444 = vsel %vm236, %v432, %v440
    %v445 = vsel %vm236, %v433, %v441
    %446 = vst [vmem:[#allocation2] sm:$0xf] 0.0
    %447 = vst [vmem:[#allocation2 + $0xc] sm:$0xf] 0.0
    %v450 = vcombine.low %v444, %v445
    %452 = vst [vmem:[#allocation2 + $0x4] sm:$0xff] %v450
    %v453 = vadd.s32 %v139, 128
    %vm454 = vcmp.lt.s32.totalorder %v139, 0
    %v455 = vsub.s32 0, %v139
    %v456 = vsel %vm454, %v455, %v139
    %v457 = vshrl.u32 %v456, 4
    %v458 = vand.u32 %v456, 15
    %v459 = vsub.s32 0, %v458
    %v460 = vsel %vm454, %v459, %v458
    %vm461 = vcmp.lt.s32.totalorder %v453, 0
    %v462 = vsub.s32 0, %v453
    %v463 = vsel %vm461, %v462, %v453
    %v464 = vshrl.u32 %v463, 4
    %v465 = vand.u32 %v463, 15
    %v466 = vsub.s32 0, %v465
    %v467 = vsel %vm461, %v466, %v465
    %vm468 = vcmp.ne.s32.totalorder %v460, 0
    %vm469 = vcmp.ne.s32.totalorder %v467, 0
    %vm470 = vcmp.lt.s32.totalorder %v460, 0
    %vm471 = vcmp.lt.s32.totalorder %v467, 0
    %vm472 = vmand %vm470, %vm468
    %vm473 = vmand %vm471, %vm469
    %v474 = vadd.s32 %v460, 16
    %v475 = vadd.s32 %v467, 16
    %v476 = vsel %vm472, %v474, %v460
    %v477 = vsel %vm473, %v475, %v467
    %v478 = vadd.s32 %v476, 4294967293
    %v479 = vadd.s32 %v477, 4294967293
    %vm480 = vcmp.ge.s32.totalorder %v478, 0
    %vm481 = vcmp.ge.s32.totalorder %v479, 0
    %vm482 = vcmp.lt.s32.totalorder %v478, 16
    %vm483 = vcmp.lt.s32.totalorder %v479, 16
    %vm484 = vmand %vm480, %vm482
    %vm485 = vmand %vm481, %vm483
    %v486 = vld [vmem:[#allocation2] sm:$0xff]
    %v487 = vld [vmem:[#allocation2 + $0x8] sm:$0xf]
    %s488 = sld [smem:[#allocation9]]
    %s489 = sld [smem:[#allocation9 + $0x31]]
    %v490 = vstv %s488
    %v491 = vmul.f32 %v490, %v486
    %v492 = vmul.f32 %v490, %v487
    %v493 = vadd.f32 %v491, 0.0
    %v494 = vadd.f32 %v492, 0.0
    %v495 = vstv %s489
    %v496 = vmul.f32 %v495, %v486
    %v497 = vmul.f32 %v495, %v487
    %v498 = vadd.f32 %v496, 0.0
    %v499 = vadd.f32 %v497, 0.0
    %s500 = sld [smem:[#allocation9 + $0x7]]
    %s501 = sld [smem:[#allocation9 + $0x38]]
    %v502 = vstv %s500
    %v503 = vmul.f32 %v502, %v486
    %v504 = vmul.f32 %v502, %v487
    %507 = vrot.lane.b32.xlu0 %v503, 112
    %v508 = vpop.permute.xlu0 %507
    %509 = vrot.lane.b32.xlu0 %v504, 112
    %v510 = vpop.permute.xlu0 %509
    %v511 = vrot.slane %v508, 4
    %v512 = vrot.slane %v510, 4
    %vm513 = vcmask 1043456
    %v514 = vsel %vm513, %v511, %v512
    %vm515 = vcmask 916480
    %v516 = vsel %vm515, %v508, %v514
    %v519 = vadd.f32 %v493, %v516
    %v520 = vadd.f32 %v494, %v510
    %v521 = vstv %s501
    %v522 = vmul.f32 %v521, %v486
    %v523 = vmul.f32 %v521, %v487
    %526 = vrot.lane.b32.xlu0 %v522, 112
    %v527 = vpop.permute.xlu0 %526
    %528 = vrot.lane.b32.xlu0 %v523, 112
    %v529 = vpop.permute.xlu0 %528
    %v530 = vrot.slane %v527, 4
    %v531 = vrot.slane %v529, 4
    %v532 = vsel %vm513, %v530, %v531
    %v533 = vsel %vm515, %v527, %v532
    %v536 = vadd.f32 %v498, %v533
    %v537 = vadd.f32 %v499, %v529
    %s538 = sld [smem:[#allocation9 + $0xe]]
    %s539 = sld [smem:[#allocation9 + $0x3f]]
    %v540 = vstv %s538
    %v541 = vmul.f32 %v540, %v486
    %v542 = vmul.f32 %v540, %v487
    %545 = vrot.lane.b32.xlu0 %v541, 96
    %v546 = vpop.permute.xlu0 %545
    %547 = vrot.lane.b32.xlu0 %v542, 96
    %v548 = vpop.permute.xlu0 %547
    %v549 = vrot.slane %v546, 4
    %v550 = vrot.slane %v548, 4
    %v551 = vsel %vm513, %v549, %v550
    %vm552 = vcmask 785408
    %v553 = vsel %vm552, %v546, %v551
    %v556 = vadd.f32 %v519, %v553
    %v557 = vadd.f32 %v520, %v548
    %v558 = vstv %s539
    %v559 = vmul.f32 %v558, %v486
    %v560 = vmul.f32 %v558, %v487
    %563 = vrot.lane.b32.xlu0 %v559, 96
    %v564 = vpop.permute.xlu0 %563
    %565 = vrot.lane.b32.xlu0 %v560, 96
    %v566 = vpop.permute.xlu0 %565
    %v567 = vrot.slane %v564, 4
    %v568 = vrot.slane %v566, 4
    %v569 = vsel %vm513, %v567, %v568
    %v570 = vsel %vm552, %v564, %v569
    %v573 = vadd.f32 %v536, %v570
    %v574 = vadd.f32 %v537, %v566
    %s575 = sld [smem:[#allocation9 + $0x15]]
    %s576 = sld [smem:[#allocation9 + $0x46]]
    %v577 = vstv %s575
    %v578 = vmul.f32 %v577, %v486
    %v579 = vmul.f32 %v577, %v487
    %582 = vrot.lane.b32.xlu0 %v578, 80
    %v583 = vpop.permute.xlu0 %582
    %584 = vrot.lane.b32.xlu0 %v579, 80
    %v585 = vpop.permute.xlu0 %584
    %v586 = vrot.slane %v583, 4
    %v587 = vrot.slane %v585, 4
    %v588 = vsel %vm513, %v586, %v587
    %vm589 = vcmask 654336
    %v590 = vsel %vm589, %v583, %v588
    %v593 = vadd.f32 %v556, %v590
    %v594 = vadd.f32 %v557, %v585
    %v595 = vstv %s576
    %v596 = vmul.f32 %v595, %v486
    %v597 = vmul.f32 %v595, %v487
    %600 = vrot.lane.b32.xlu0 %v596, 80
    %v601 = vpop.permute.xlu0 %600
    %602 = vrot.lane.b32.xlu0 %v597, 80
    %v603 = vpop.permute.xlu0 %602
    %v604 = vrot.slane %v601, 4
    %v605 = vrot.slane %v603, 4
    %v606 = vsel %vm513, %v604, %v605
    %v607 = vsel %vm589, %v601, %v606
    %v610 = vadd.f32 %v573, %v607
    %v611 = vadd.f32 %v574, %v603
    %v612 = vld [vmem:[#allocation2 + $0x4] sm:$0xff]
    %v613 = vld [vmem:[#allocation2 + $0xc] sm:$0xf]
    %s614 = sld [smem:[#allocation9 + $0x1c]]
    %s615 = sld [smem:[#allocation9 + $0x4d]]
    %v616 = vstv %s614
    %v617 = vmul.f32 %v616, %v612
    %v618 = vmul.f32 %v616, %v613
    %621 = vrot.lane.b32.xlu0 %v617, 64
    %v622 = vpop.permute.xlu0 %621
    %623 = vrot.lane.b32.xlu0 %v618, 64
    %v624 = vpop.permute.xlu0 %623
    %v625 = vrot.slane %v622, 4
    %vm626 = vcmask 523264
    %v627 = vsel %vm626, %v625, %v622
    %v628 = vsel %vm626, %v625, %v624
    %v631 = vadd.f32 %v593, %v627
    %v632 = vadd.f32 %v594, %v628
    %v633 = vstv %s615
    %v634 = vmul.f32 %v633, %v612
    %v635 = vmul.f32 %v633, %v613
    %638 = vrot.lane.b32.xlu0 %v634, 64
    %v639 = vpop.permute.xlu0 %638
    %640 = vrot.lane.b32.xlu0 %v635, 64
    %v641 = vpop.permute.xlu0 %640
    %v642 = vrot.slane %v639, 4
    %v643 = vsel %vm626, %v642, %v639
    %v644 = vsel %vm626, %v642, %v641
    %v647 = vadd.f32 %v610, %v643
    %v648 = vadd.f32 %v611, %v644
    %s649 = sld [smem:[#allocation9 + $0x23]]
    %s650 = sld [smem:[#allocation9 + $0x54]]
    %v651 = vstv %s649
    %v652 = vmul.f32 %v651, %v612
    %v653 = vmul.f32 %v651, %v613
    %656 = vrot.lane.b32.xlu0 %v652, 48
    %v657 = vpop.permute.xlu0 %656
    %658 = vrot.lane.b32.xlu0 %v653, 48
    %v659 = vpop.permute.xlu0 %658
    %v660 = vrot.slane %v657, 4
    %vm661 = vcmask 392192
    %v662 = vsel %vm661, %v660, %v657
    %v663 = vsel %vm661, %v660, %v659
    %v666 = vadd.f32 %v631, %v662
    %v667 = vadd.f32 %v632, %v663
    %v668 = vstv %s650
    %v669 = vmul.f32 %v668, %v612
    %v670 = vmul.f32 %v668, %v613
    %673 = vrot.lane.b32.xlu0 %v669, 48
    %v674 = vpop.permute.xlu0 %673
    %675 = vrot.lane.b32.xlu0 %v670, 48
    %v676 = vpop.permute.xlu0 %675
    %v677 = vrot.slane %v674, 4
    %v678 = vsel %vm661, %v677, %v674
    %v679 = vsel %vm661, %v677, %v676
    %v682 = vadd.f32 %v647, %v678
    %v683 = vadd.f32 %v648, %v679
    %s684 = sld [smem:[#allocation9 + $0x2a]]
    %s685 = sld [smem:[#allocation9 + $0x5b]]
    %v686 = vstv %s684
    %v687 = vmul.f32 %v686, %v612
    %v688 = vmul.f32 %v686, %v613
    %691 = vrot.lane.b32.xlu0 %v687, 32
    %v692 = vpop.permute.xlu0 %691
    %693 = vrot.lane.b32.xlu0 %v688, 32
    %v694 = vpop.permute.xlu0 %693
    %v695 = vrot.slane %v692, 4
    %vm696 = vcmask 261120
    %v697 = vsel %vm696, %v695, %v692
    %v698 = vsel %vm696, %v695, %v694
    %v701 = vadd.f32 %v666, %v697
    %v702 = vadd.f32 %v667, %v698
    %v703 = vstv %s685
    %v704 = vmul.f32 %v703, %v612
    %v705 = vmul.f32 %v703, %v613
    %708 = vrot.lane.b32.xlu0 %v704, 32
    %v709 = vpop.permute.xlu0 %708
    %710 = vrot.lane.b32.xlu0 %v705, 32
    %v711 = vpop.permute.xlu0 %710
    %v712 = vrot.slane %v709, 4
    %v713 = vsel %vm696, %v712, %v709
    %v714 = vsel %vm696, %v712, %v711
    %v717 = vadd.f32 %v682, %v713
    %v718 = vadd.f32 %v683, %v714
    %v719 = vsel %vm484, 1, 0
    %v720 = vsel %vm485, 1, 0
    %vm721 = vcmp.eq.s32.totalorder %v719, 1
    %vm722 = vcmp.eq.s32.totalorder %v720, 1
    %v725 = vcombine.high %v701, %v701
    %726 = vrot.lane.b32.xlu0 %v701, 51
    %v727 = vpop.permute.xlu0 %726
    %728 = vrot.lane.b32.xlu0 %v725, 51
    %v729 = vpop.permute.xlu0 %728
    %730 = vrot.lane.b32.xlu0 %v702, 51
    %v731 = vpop.permute.xlu0 %730
    %vm732 = vcmask 416768
    %v733 = vsel %vm732, %v727, %v729
    %v734 = vsel %vm732, %v729, %v731
    %v737 = vsel %vm721, %v733, 0.0
    %v738 = vsel %vm722, %v734, 0.0
    %v739 = vadd.f32 %v737, 0.0
    %v740 = vadd.f32 %v738, 0.0
    %v743 = vcombine.high %v717, %v717
    %744 = vrot.lane.b32.xlu0 %v717, 51
    %v745 = vpop.permute.xlu0 %744
    %746 = vrot.lane.b32.xlu0 %v743, 51
    %v747 = vpop.permute.xlu0 %746
    %748 = vrot.lane.b32.xlu0 %v718, 51
    %v749 = vpop.permute.xlu0 %748
    %v750 = vsel %vm732, %v745, %v747
    %v751 = vsel %vm732, %v747, %v749
    %v754 = vsel %vm721, %v750, 0.0
    %v755 = vsel %vm722, %v751, 0.0
    %v756 = vadd.f32 %v754, 0.0
    %v757 = vadd.f32 %v755, 0.0
    %v758 = vadd.s32 %v476, 4294967294
    %v759 = vadd.s32 %v477, 4294967294
    %vm760 = vcmp.ge.s32.totalorder %v758, 0
    %vm761 = vcmp.ge.s32.totalorder %v759, 0
    %vm762 = vcmp.lt.s32.totalorder %v758, 16
    %vm763 = vcmp.lt.s32.totalorder %v759, 16
    %vm764 = vmand %vm760, %vm762
    %vm765 = vmand %vm761, %vm763
    %v766 = vld [vmem:[#allocation2] sm:$0xff]
    %v767 = vld [vmem:[#allocation2 + $0x8] sm:$0xf]
    %s768 = sld [smem:[#allocation9 + $0x1]]
    %s769 = sld [smem:[#allocation9 + $0x32]]
    %v770 = vstv %s768
    %v771 = vmul.f32 %v770, %v766
    %v772 = vmul.f32 %v770, %v767
    %v773 = vadd.f32 %v771, 0.0
    %v774 = vadd.f32 %v772, 0.0
    %v775 = vstv %s769
    %v776 = vmul.f32 %v775, %v766
    %v777 = vmul.f32 %v775, %v767
    %v778 = vadd.f32 %v776, 0.0
    %v779 = vadd.f32 %v777, 0.0
    %s780 = sld [smem:[#allocation9 + $0x8]]
    %s781 = sld [smem:[#allocation9 + $0x39]]
    %v782 = vstv %s780
    %v783 = vmul.f32 %v782, %v766
    %v784 = vmul.f32 %v782, %v767
    %787 = vrot.lane.b32.xlu0 %v783, 112
    %v788 = vpop.permute.xlu0 %787
    %789 = vrot.lane.b32.xlu0 %v784, 112
    %v790 = vpop.permute.xlu0 %789
    %v791 = vrot.slane %v788, 4
    %v792 = vrot.slane %v790, 4
    %v793 = vsel %vm513, %v791, %v792
    %v794 = vsel %vm515, %v788, %v793
    %v797 = vadd.f32 %v773, %v794
    %v798 = vadd.f32 %v774, %v790
    %v799 = vstv %s781
    %v800 = vmul.f32 %v799, %v766
    %v801 = vmul.f32 %v799, %v767
    %804 = vrot.lane.b32.xlu0 %v800, 112
    %v805 = vpop.permute.xlu0 %804
    %806 = vrot.lane.b32.xlu0 %v801, 112
    %v807 = vpop.permute.xlu0 %806
    %v808 = vrot.slane %v805, 4
    %v809 = vrot.slane %v807, 4
    %v810 = vsel %vm513, %v808, %v809
    %v811 = vsel %vm515, %v805, %v810
    %v814 = vadd.f32 %v778, %v811
    %v815 = vadd.f32 %v779, %v807
    %s816 = sld [smem:[#allocation9 + $0xf]]
    %s817 = sld [smem:[#allocation9 + $0x40]]
    %v818 = vstv %s816
    %v819 = vmul.f32 %v818, %v766
    %v820 = vmul.f32 %v818, %v767
    %823 = vrot.lane.b32.xlu0 %v819, 96
    %v824 = vpop.permute.xlu0 %823
    %825 = vrot.lane.b32.xlu0 %v820, 96
    %v826 = vpop.permute.xlu0 %825
    %v827 = vrot.slane %v824, 4
    %v828 = vrot.slane %v826, 4
    %v829 = vsel %vm513, %v827, %v828
    %v830 = vsel %vm552, %v824, %v829
    %v833 = vadd.f32 %v797, %v830
    %v834 = vadd.f32 %v798, %v826
    %v835 = vstv %s817
    %v836 = vmul.f32 %v835, %v766
    %v837 = vmul.f32 %v835, %v767
    %840 = vrot.lane.b32.xlu0 %v836, 96
    %v841 = vpop.permute.xlu0 %840
    %842 = vrot.lane.b32.xlu0 %v837, 96
    %v843 = vpop.permute.xlu0 %842
    %v844 = vrot.slane %v841, 4
    %v845 = vrot.slane %v843, 4
    %v846 = vsel %vm513, %v844, %v845
    %v847 = vsel %vm552, %v841, %v846
    %v850 = vadd.f32 %v814, %v847
    %v851 = vadd.f32 %v815, %v843
    %s852 = sld [smem:[#allocation9 + $0x16]]
    %s853 = sld [smem:[#allocation9 + $0x47]]
    %v854 = vstv %s852
    %v855 = vmul.f32 %v854, %v766
    %v856 = vmul.f32 %v854, %v767
    %859 = vrot.lane.b32.xlu0 %v855, 80
    %v860 = vpop.permute.xlu0 %859
    %861 = vrot.lane.b32.xlu0 %v856, 80
    %v862 = vpop.permute.xlu0 %861
    %v863 = vrot.slane %v860, 4
    %v864 = vrot.slane %v862, 4
    %v865 = vsel %vm513, %v863, %v864
    %v866 = vsel %vm589, %v860, %v865
    %v869 = vadd.f32 %v833, %v866
    %v870 = vadd.f32 %v834, %v862
    %v871 = vstv %s853
    %v872 = vmul.f32 %v871, %v766
    %v873 = vmul.f32 %v871, %v767
    %876 = vrot.lane.b32.xlu0 %v872, 80
    %v877 = vpop.permute.xlu0 %876
    %878 = vrot.lane.b32.xlu0 %v873, 80
    %v879 = vpop.permute.xlu0 %878
    %v880 = vrot.slane %v877, 4
    %v881 = vrot.slane %v879, 4
    %v882 = vsel %vm513, %v880, %v881
    %v883 = vsel %vm589, %v877, %v882
    %v886 = vadd.f32 %v850, %v883
    %v887 = vadd.f32 %v851, %v879
    %v888 = vld [vmem:[#allocation2 + $0x4] sm:$0xff]
    %v889 = vld [vmem:[#allocation2 + $0xc] sm:$0xf]
    %s890 = sld [smem:[#allocation9 + $0x1d]]
    %s891 = sld [smem:[#allocation9 + $0x4e]]
    %v892 = vstv %s890
    %v893 = vmul.f32 %v892, %v888
    %v894 = vmul.f32 %v892, %v889
    %897 = vrot.lane.b32.xlu0 %v893, 64
    %v898 = vpop.permute.xlu0 %897
    %899 = vrot.lane.b32.xlu0 %v894, 64
    %v900 = vpop.permute.xlu0 %899
    %v901 = vrot.slane %v898, 4
    %v902 = vsel %vm626, %v901, %v898
    %v903 = vsel %vm626, %v901, %v900
    %v906 = vadd.f32 %v869, %v902
    %v907 = vadd.f32 %v870, %v903
    %v908 = vstv %s891
    %v909 = vmul.f32 %v908, %v888
    %v910 = vmul.f32 %v908, %v889
    %913 = vrot.lane.b32.xlu0 %v909, 64
    %v914 = vpop.permute.xlu0 %913
    %915 = vrot.lane.b32.xlu0 %v910, 64
    %v916 = vpop.permute.xlu0 %915
    %v917 = vrot.slane %v914, 4
    %v918 = vsel %vm626, %v917, %v914
    %v919 = vsel %vm626, %v917, %v916
    %v922 = vadd.f32 %v886, %v918
    %v923 = vadd.f32 %v887, %v919
    %s924 = sld [smem:[#allocation9 + $0x24]]
    %s925 = sld [smem:[#allocation9 + $0x55]]
    %v926 = vstv %s924
    %v927 = vmul.f32 %v926, %v888
    %v928 = vmul.f32 %v926, %v889
    %931 = vrot.lane.b32.xlu0 %v927, 48
    %v932 = vpop.permute.xlu0 %931
    %933 = vrot.lane.b32.xlu0 %v928, 48
    %v934 = vpop.permute.xlu0 %933
    %v935 = vrot.slane %v932, 4
    %v936 = vsel %vm661, %v935, %v932
    %v937 = vsel %vm661, %v935, %v934
    %v940 = vadd.f32 %v906, %v936
    %v941 = vadd.f32 %v907, %v937
    %v942 = vstv %s925
    %v943 = vmul.f32 %v942, %v888
    %v944 = vmul.f32 %v942, %v889
    %947 = vrot.lane.b32.xlu0 %v943, 48
    %v948 = vpop.permute.xlu0 %947
    %949 = vrot.lane.b32.xlu0 %v944, 48
    %v950 = vpop.permute.xlu0 %949
    %v951 = vrot.slane %v948, 4
    %v952 = vsel %vm661, %v951, %v948
    %v953 = vsel %vm661, %v951, %v950
    %v956 = vadd.f32 %v922, %v952
    %v957 = vadd.f32 %v923, %v953
    %s958 = sld [smem:[#allocation9 + $0x2b]]
    %s959 = sld [smem:[#allocation9 + $0x5c]]
    %v960 = vstv %s958
    %v961 = vmul.f32 %v960, %v888
    %v962 = vmul.f32 %v960, %v889
    %965 = vrot.lane.b32.xlu0 %v961, 32
    %v966 = vpop.permute.xlu0 %965
    %967 = vrot.lane.b32.xlu0 %v962, 32
    %v968 = vpop.permute.xlu0 %967
    %v969 = vrot.slane %v966, 4
    %v970 = vsel %vm696, %v969, %v966
    %v971 = vsel %vm696, %v969, %v968
    %v974 = vadd.f32 %v940, %v970
    %v975 = vadd.f32 %v941, %v971
    %v976 = vstv %s959
    %v977 = vmul.f32 %v976, %v888
    %v978 = vmul.f32 %v976, %v889
    %981 = vrot.lane.b32.xlu0 %v977, 32
    %v982 = vpop.permute.xlu0 %981
    %983 = vrot.lane.b32.xlu0 %v978, 32
    %v984 = vpop.permute.xlu0 %983
    %v985 = vrot.slane %v982, 4
    %v986 = vsel %vm696, %v985, %v982
    %v987 = vsel %vm696, %v985, %v984
    %v990 = vadd.f32 %v956, %v986
    %v991 = vadd.f32 %v957, %v987
    %v992 = vsel %vm764, 1, 0
    %v993 = vsel %vm765, 1, 0
    %vm994 = vcmp.eq.s32.totalorder %v992, 1
    %vm995 = vcmp.eq.s32.totalorder %v993, 1
    %v998 = vcombine.high %v974, %v974
    %999 = vrot.lane.b32.xlu0 %v974, 50
    %v1000 = vpop.permute.xlu0 %999
    %1001 = vrot.lane.b32.xlu0 %v998, 50
    %v1002 = vpop.permute.xlu0 %1001
    %1003 = vrot.lane.b32.xlu0 %v975, 50
    %v1004 = vpop.permute.xlu0 %1003
    %vm1005 = vcmask 408576
    %v1006 = vsel %vm1005, %v1000, %v1002
    %v1007 = vsel %vm1005, %v1002, %v1004
    %v1010 = vsel %vm994, %v1006, 0.0
    %v1011 = vsel %vm995, %v1007, 0.0
    %v1012 = vadd.f32 %v739, %v1010
    %v1013 = vadd.f32 %v740, %v1011
    %v1016 = vcombine.high %v990, %v990
    %1017 = vrot.lane.b32.xlu0 %v990, 50
    %v1018 = vpop.permute.xlu0 %1017
    %1019 = vrot.lane.b32.xlu0 %v1016, 50
    %v1020 = vpop.permute.xlu0 %1019
    %1021 = vrot.lane.b32.xlu0 %v991, 50
    %v1022 = vpop.permute.xlu0 %1021
    %v1023 = vsel %vm1005, %v1018, %v1020
    %v1024 = vsel %vm1005, %v1020, %v1022
    %v1027 = vsel %vm994, %v1023, 0.0
    %v1028 = vsel %vm995, %v1024, 0.0
    %v1029 = vadd.f32 %v756, %v1027
    %v1030 = vadd.f32 %v757, %v1028
    %v1031 = vadd.s32 %v476, 4294967295
    %v1032 = vadd.s32 %v477, 4294967295
    %vm1033 = vcmp.ge.s32.totalorder %v1031, 0
    %vm1034 = vcmp.ge.s32.totalorder %v1032, 0
    %vm1035 = vcmp.lt.s32.totalorder %v1031, 16
    %vm1036 = vcmp.lt.s32.totalorder %v1032, 16
    %vm1037 = vmand %vm1033, %vm1035
    %vm1038 = vmand %vm1034, %vm1036
    %v1039 = vld [vmem:[#allocation2] sm:$0xff]
    %v1040 = vld [vmem:[#allocation2 + $0x8] sm:$0xf]
    %s1041 = sld [smem:[#allocation9 + $0x2]]
    %s1042 = sld [smem:[#allocation9 + $0x33]]
    %v1043 = vstv %s1041
    %v1044 = vmul.f32 %v1043, %v1039
    %v1045 = vmul.f32 %v1043, %v1040
    %v1046 = vadd.f32 %v1044, 0.0
    %v1047 = vadd.f32 %v1045, 0.0
    %v1048 = vstv %s1042
    %v1049 = vmul.f32 %v1048, %v1039
    %v1050 = vmul.f32 %v1048, %v1040
    %v1051 = vadd.f32 %v1049, 0.0
    %v1052 = vadd.f32 %v1050, 0.0
    %s1053 = sld [smem:[#allocation9 + $0x9]]
    %s1054 = sld [smem:[#allocation9 + $0x3a]]
    %v1055 = vstv %s1053
    %v1056 = vmul.f32 %v1055, %v1039
    %v1057 = vmul.f32 %v1055, %v1040
    %1060 = vrot.lane.b32.xlu0 %v1056, 112
    %v1061 = vpop.permute.xlu0 %1060
    %1062 = vrot.lane.b32.xlu0 %v1057, 112
    %v1063 = vpop.permute.xlu0 %1062
    %v1064 = vrot.slane %v1061, 4
    %v1065 = vrot.slane %v1063, 4
    %v1066 = vsel %vm513, %v1064, %v1065
    %v1067 = vsel %vm515, %v1061, %v1066
    %v1070 = vadd.f32 %v1046, %v1067
    %v1071 = vadd.f32 %v1047, %v1063
    %v1072 = vstv %s1054
    %v1073 = vmul.f32 %v1072, %v1039
    %v1074 = vmul.f32 %v1072, %v1040
    %1077 = vrot.lane.b32.xlu0 %v1073, 112
    %v1078 = vpop.permute.xlu0 %1077
    %1079 = vrot.lane.b32.xlu0 %v1074, 112
    %v1080 = vpop.permute.xlu0 %1079
    %v1081 = vrot.slane %v1078, 4
    %v1082 = vrot.slane %v1080, 4
    %v1083 = vsel %vm513, %v1081, %v1082
    %v1084 = vsel %vm515, %v1078, %v1083
    %v1087 = vadd.f32 %v1051, %v1084
    %v1088 = vadd.f32 %v1052, %v1080
    %s1089 = sld [smem:[#allocation9 + $0x10]]
    %s1090 = sld [smem:[#allocation9 + $0x41]]
    %v1091 = vstv %s1089
    %v1092 = vmul.f32 %v1091, %v1039
    %v1093 = vmul.f32 %v1091, %v1040
    %1096 = vrot.lane.b32.xlu0 %v1092, 96
    %v1097 = vpop.permute.xlu0 %1096
    %1098 = vrot.lane.b32.xlu0 %v1093, 96
    %v1099 = vpop.permute.xlu0 %1098
    %v1100 = vrot.slane %v1097, 4
    %v1101 = vrot.slane %v1099, 4
    %v1102 = vsel %vm513, %v1100, %v1101
    %v1103 = vsel %vm552, %v1097, %v1102
    %v1106 = vadd.f32 %v1070, %v1103
    %v1107 = vadd.f32 %v1071, %v1099
    %v1108 = vstv %s1090
    %v1109 = vmul.f32 %v1108, %v1039
    %v1110 = vmul.f32 %v1108, %v1040
    %1113 = vrot.lane.b32.xlu0 %v1109, 96
    %v1114 = vpop.permute.xlu0 %1113
    %1115 = vrot.lane.b32.xlu0 %v1110, 96
    %v1116 = vpop.permute.xlu0 %1115
    %v1117 = vrot.slane %v1114, 4
    %v1118 = vrot.slane %v1116, 4
    %v1119 = vsel %vm513, %v1117, %v1118
    %v1120 = vsel %vm552, %v1114, %v1119
    %v1123 = vadd.f32 %v1087, %v1120
    %v1124 = vadd.f32 %v1088, %v1116
    %s1125 = sld [smem:[#allocation9 + $0x17]]
    %s1126 = sld [smem:[#allocation9 + $0x48]]
    %v1127 = vstv %s1125
    %v1128 = vmul.f32 %v1127, %v1039
    %v1129 = vmul.f32 %v1127, %v1040
    %1132 = vrot.lane.b32.xlu0 %v1128, 80
    %v1133 = vpop.permute.xlu0 %1132
    %1134 = vrot.lane.b32.xlu0 %v1129, 80
    %v1135 = vpop.permute.xlu0 %1134
    %v1136 = vrot.slane %v1133, 4
    %v1137 = vrot.slane %v1135, 4
    %v1138 = vsel %vm513, %v1136, %v1137
    %v1139 = vsel %vm589, %v1133, %v1138
    %v1142 = vadd.f32 %v1106, %v1139
    %v1143 = vadd.f32 %v1107, %v1135
    %v1144 = vstv %s1126
    %v1145 = vmul.f32 %v1144, %v1039
    %v1146 = vmul.f32 %v1144, %v1040
    %1149 = vrot.lane.b32.xlu0 %v1145, 80
    %v1150 = vpop.permute.xlu0 %1149
    %1151 = vrot.lane.b32.xlu0 %v1146, 80
    %v1152 = vpop.permute.xlu0 %1151
    %v1153 = vrot.slane %v1150, 4
    %v1154 = vrot.slane %v1152, 4
    %v1155 = vsel %vm513, %v1153, %v1154
    %v1156 = vsel %vm589, %v1150, %v1155
    %v1159 = vadd.f32 %v1123, %v1156
    %v1160 = vadd.f32 %v1124, %v1152
    %v1161 = vld [vmem:[#allocation2 + $0x4] sm:$0xff]
    %v1162 = vld [vmem:[#allocation2 + $0xc] sm:$0xf]
    %s1163 = sld [smem:[#allocation9 + $0x1e]]
    %s1164 = sld [smem:[#allocation9 + $0x4f]]
    %v1165 = vstv %s1163
    %v1166 = vmul.f32 %v1165, %v1161
    %v1167 = vmul.f32 %v1165, %v1162
    %1170 = vrot.lane.b32.xlu0 %v1166, 64
    %v1171 = vpop.permute.xlu0 %1170
    %1172 = vrot.lane.b32.xlu0 %v1167, 64
    %v1173 = vpop.permute.xlu0 %1172
    %v1174 = vrot.slane %v1171, 4
    %v1175 = vsel %vm626, %v1174, %v1171
    %v1176 = vsel %vm626, %v1174, %v1173
    %v1179 = vadd.f32 %v1142, %v1175
    %v1180 = vadd.f32 %v1143, %v1176
    %v1181 = vstv %s1164
    %v1182 = vmul.f32 %v1181, %v1161
    %v1183 = vmul.f32 %v1181, %v1162
    %1186 = vrot.lane.b32.xlu0 %v1182, 64
    %v1187 = vpop.permute.xlu0 %1186
    %1188 = vrot.lane.b32.xlu0 %v1183, 64
    %v1189 = vpop.permute.xlu0 %1188
    %v1190 = vrot.slane %v1187, 4
    %v1191 = vsel %vm626, %v1190, %v1187
    %v1192 = vsel %vm626, %v1190, %v1189
    %v1195 = vadd.f32 %v1159, %v1191
    %v1196 = vadd.f32 %v1160, %v1192
    %s1197 = sld [smem:[#allocation9 + $0x25]]
    %s1198 = sld [smem:[#allocation9 + $0x56]]
    %v1199 = vstv %s1197
    %v1200 = vmul.f32 %v1199, %v1161
    %v1201 = vmul.f32 %v1199, %v1162
    %1204 = vrot.lane.b32.xlu0 %v1200, 48
    %v1205 = vpop.permute.xlu0 %1204
    %1206 = vrot.lane.b32.xlu0 %v1201, 48
    %v1207 = vpop.permute.xlu0 %1206
    %v1208 = vrot.slane %v1205, 4
    %v1209 = vsel %vm661, %v1208, %v1205
    %v1210 = vsel %vm661, %v1208, %v1207
    %v1213 = vadd.f32 %v1179, %v1209
    %v1214 = vadd.f32 %v1180, %v1210
    %v1215 = vstv %s1198
    %v1216 = vmul.f32 %v1215, %v1161
    %v1217 = vmul.f32 %v1215, %v1162
    %1220 = vrot.lane.b32.xlu0 %v1216, 48
    %v1221 = vpop.permute.xlu0 %1220
    %1222 = vrot.lane.b32.xlu0 %v1217, 48
    %v1223 = vpop.permute.xlu0 %1222
    %v1224 = vrot.slane %v1221, 4
    %v1225 = vsel %vm661, %v1224, %v1221
    %v1226 = vsel %vm661, %v1224, %v1223
    %v1229 = vadd.f32 %v1195, %v1225
    %v1230 = vadd.f32 %v1196, %v1226
    %s1231 = sld [smem:[#allocation9 + $0x2c]]
    %s1232 = sld [smem:[#allocation9 + $0x5d]]
    %v1233 = vstv %s1231
    %v1234 = vmul.f32 %v1233, %v1161
    %v1235 = vmul.f32 %v1233, %v1162
    %1238 = vrot.lane.b32.xlu0 %v1234, 32
    %v1239 = vpop.permute.xlu0 %1238
    %1240 = vrot.lane.b32.xlu0 %v1235, 32
    %v1241 = vpop.permute.xlu0 %1240
    %v1242 = vrot.slane %v1239, 4
    %v1243 = vsel %vm696, %v1242, %v1239
    %v1244 = vsel %vm696, %v1242, %v1241
    %v1247 = vadd.f32 %v1213, %v1243
    %v1248 = vadd.f32 %v1214, %v1244
    %v1249 = vstv %s1232
    %v1250 = vmul.f32 %v1249, %v1161
    %v1251 = vmul.f32 %v1249, %v1162
    %1254 = vrot.lane.b32.xlu0 %v1250, 32
    %v1255 = vpop.permute.xlu0 %1254
    %1256 = vrot.lane.b32.xlu0 %v1251, 32
    %v1257 = vpop.permute.xlu0 %1256
    %v1258 = vrot.slane %v1255, 4
    %v1259 = vsel %vm696, %v1258, %v1255
    %v1260 = vsel %vm696, %v1258, %v1257
    %v1263 = vadd.f32 %v1229, %v1259
    %v1264 = vadd.f32 %v1230, %v1260
    %v1265 = vsel %vm1037, 1, 0
    %v1266 = vsel %vm1038, 1, 0
    %vm1267 = vcmp.eq.s32.totalorder %v1265, 1
    %vm1268 = vcmp.eq.s32.totalorder %v1266, 1
    %v1271 = vcombine.high %v1247, %v1247
    %1272 = vrot.lane.b32.xlu0 %v1247, 49
    %v1273 = vpop.permute.xlu0 %1272
    %1274 = vrot.lane.b32.xlu0 %v1271, 49
    %v1275 = vpop.permute.xlu0 %1274
    %1276 = vrot.lane.b32.xlu0 %v1248, 49
    %v1277 = vpop.permute.xlu0 %1276
    %vm1278 = vcmask 400384
    %v1279 = vsel %vm1278, %v1273, %v1275
    %v1280 = vsel %vm1278, %v1275, %v1277
    %v1283 = vsel %vm1267, %v1279, 0.0
    %v1284 = vsel %vm1268, %v1280, 0.0
    %v1285 = vadd.f32 %v1012, %v1283
    %v1286 = vadd.f32 %v1013, %v1284
    %v1289 = vcombine.high %v1263, %v1263
    %1290 = vrot.lane.b32.xlu0 %v1263, 49
    %v1291 = vpop.permute.xlu0 %1290
    %1292 = vrot.lane.b32.xlu0 %v1289, 49
    %v1293 = vpop.permute.xlu0 %1292
    %1294 = vrot.lane.b32.xlu0 %v1264, 49
    %v1295 = vpop.permute.xlu0 %1294
    %v1296 = vsel %vm1278, %v1291, %v1293
    %v1297 = vsel %vm1278, %v1293, %v1295
    %v1300 = vsel %vm1267, %v1296, 0.0
    %v1301 = vsel %vm1268, %v1297, 0.0
    %v1302 = vadd.f32 %v1029, %v1300
    %v1303 = vadd.f32 %v1030, %v1301
    %vm1304 = vcmp.ge.s32.totalorder %v476, 0
    %vm1305 = vcmp.ge.s32.totalorder %v477, 0
    %vm1306 = vcmp.lt.s32.totalorder %v476, 16
    %vm1307 = vcmp.lt.s32.totalorder %v477, 16
    %vm1308 = vmand %vm1304, %vm1306
    %vm1309 = vmand %vm1305, %vm1307
    %v1310 = vld [vmem:[#allocation2] sm:$0xff]
    %v1311 = vld [vmem:[#allocation2 + $0x8] sm:$0xf]
    %s1312 = sld [smem:[#allocation9 + $0x3]]
    %s1313 = sld [smem:[#allocation9 + $0x34]]
    %v1314 = vstv %s1312
    %v1315 = vmul.f32 %v1314, %v1310
    %v1316 = vmul.f32 %v1314, %v1311
    %v1317 = vadd.f32 %v1315, 0.0
    %v1318 = vadd.f32 %v1316, 0.0
    %v1319 = vstv %s1313
    %v1320 = vmul.f32 %v1319, %v1310
    %v1321 = vmul.f32 %v1319, %v1311
    %v1322 = vadd.f32 %v1320, 0.0
    %v1323 = vadd.f32 %v1321, 0.0
    %s1324 = sld [smem:[#allocation9 + $0xa]]
    %s1325 = sld [smem:[#allocation9 + $0x3b]]
    %v1326 = vstv %s1324
    %v1327 = vmul.f32 %v1326, %v1310
    %v1328 = vmul.f32 %v1326, %v1311
    %1331 = vrot.lane.b32.xlu0 %v1327, 112
    %v1332 = vpop.permute.xlu0 %1331
    %1333 = vrot.lane.b32.xlu0 %v1328, 112
    %v1334 = vpop.permute.xlu0 %1333
    %v1335 = vrot.slane %v1332, 4
    %v1336 = vrot.slane %v1334, 4
    %v1337 = vsel %vm513, %v1335, %v1336
    %v1338 = vsel %vm515, %v1332, %v1337
    %v1341 = vadd.f32 %v1317, %v1338
    %v1342 = vadd.f32 %v1318, %v1334
    %v1343 = vstv %s1325
    %v1344 = vmul.f32 %v1343, %v1310
    %v1345 = vmul.f32 %v1343, %v1311
    %1348 = vrot.lane.b32.xlu0 %v1344, 112
    %v1349 = vpop.permute.xlu0 %1348
    %1350 = vrot.lane.b32.xlu0 %v1345, 112
    %v1351 = vpop.permute.xlu0 %1350
    %v1352 = vrot.slane %v1349, 4
    %v1353 = vrot.slane %v1351, 4
    %v1354 = vsel %vm513, %v1352, %v1353
    %v1355 = vsel %vm515, %v1349, %v1354
    %v1358 = vadd.f32 %v1322, %v1355
    %v1359 = vadd.f32 %v1323, %v1351
    %s1360 = sld [smem:[#allocation9 + $0x11]]
    %s1361 = sld [smem:[#allocation9 + $0x42]]
    %v1362 = vstv %s1360
    %v1363 = vmul.f32 %v1362, %v1310
    %v1364 = vmul.f32 %v1362, %v1311
    %1367 = vrot.lane.b32.xlu0 %v1363, 96
    %v1368 = vpop.permute.xlu0 %1367
    %1369 = vrot.lane.b32.xlu0 %v1364, 96
    %v1370 = vpop.permute.xlu0 %1369
    %v1371 = vrot.slane %v1368, 4
    %v1372 = vrot.slane %v1370, 4
    %v1373 = vsel %vm513, %v1371, %v1372
    %v1374 = vsel %vm552, %v1368, %v1373
    %v1377 = vadd.f32 %v1341, %v1374
    %v1378 = vadd.f32 %v1342, %v1370
    %v1379 = vstv %s1361
    %v1380 = vmul.f32 %v1379, %v1310
    %v1381 = vmul.f32 %v1379, %v1311
    %1384 = vrot.lane.b32.xlu0 %v1380, 96
    %v1385 = vpop.permute.xlu0 %1384
    %1386 = vrot.lane.b32.xlu0 %v1381, 96
    %v1387 = vpop.permute.xlu0 %1386
    %v1388 = vrot.slane %v1385, 4
    %v1389 = vrot.slane %v1387, 4
    %v1390 = vsel %vm513, %v1388, %v1389
    %v1391 = vsel %vm552, %v1385, %v1390
    %v1394 = vadd.f32 %v1358, %v1391
    %v1395 = vadd.f32 %v1359, %v1387
    %v1396 = vld [vmem:[#allocation2 + $0x4] sm:$0xff]
    %s1397 = sld [smem:[#allocation9 + $0x18]]
    %s1398 = sld [smem:[#allocation9 + $0x49]]
    %v1399 = vstv %s1397
    %v1400 = vmul.f32 %v1399, %v1396
    %1402 = vrot.lane.b32.xlu0 %v1400, 80
    %v1403 = vpop.permute.xlu0 %1402
    %v1404 = vrot.slane %v1403, 4
    %v1405 = vsel %vm589, %v1404, %v1403
    %v1408 = vadd.f32 %v1377, %v1405
    %v1409 = vadd.f32 %v1378, %v1404
    %v1410 = vstv %s1398
    %v1411 = vmul.f32 %v1410, %v1396
    %1413 = vrot.lane.b32.xlu0 %v1411, 80
    %v1414 = vpop.permute.xlu0 %1413
    %v1415 = vrot.slane %v1414, 4
    %v1416 = vsel %vm589, %v1415, %v1414
    %v1419 = vadd.f32 %v1394, %v1416
    %v1420 = vadd.f32 %v1395, %v1415
    %v1421 = vld [vmem:[#allocation2 + $0x4] sm:$0xff]
    %v1422 = vld [vmem:[#allocation2 + $0xc] sm:$0xf]
    %s1423 = sld [smem:[#allocation9 + $0x1f]]
    %s1424 = sld [smem:[#allocation9 + $0x50]]
    %v1425 = vstv %s1423
    %v1426 = vmul.f32 %v1425, %v1421
    %v1427 = vmul.f32 %v1425, %v1422
    %1430 = vrot.lane.b32.xlu0 %v1426, 64
    %v1431 = vpop.permute.xlu0 %1430
    %1432 = vrot.lane.b32.xlu0 %v1427, 64
    %v1433 = vpop.permute.xlu0 %1432
    %v1434 = vrot.slane %v1431, 4
    %v1435 = vsel %vm626, %v1434, %v1431
    %v1436 = vsel %vm626, %v1434, %v1433
    %v1439 = vadd.f32 %v1408, %v1435
    %v1440 = vadd.f32 %v1409, %v1436
    %v1441 = vstv %s1424
    %v1442 = vmul.f32 %v1441, %v1421
    %v1443 = vmul.f32 %v1441, %v1422
    %1446 = vrot.lane.b32.xlu0 %v1442, 64
    %v1447 = vpop.permute.xlu0 %1446
    %1448 = vrot.lane.b32.xlu0 %v1443, 64
    %v1449 = vpop.permute.xlu0 %1448
    %v1450 = vrot.slane %v1447, 4
    %v1451 = vsel %vm626, %v1450, %v1447
    %v1452 = vsel %vm626, %v1450, %v1449
    %v1455 = vadd.f32 %v1419, %v1451
    %v1456 = vadd.f32 %v1420, %v1452
    %s1457 = sld [smem:[#allocation9 + $0x26]]
    %s1458 = sld [smem:[#allocation9 + $0x57]]
    %v1459 = vstv %s1457
    %v1460 = vmul.f32 %v1459, %v1421
    %v1461 = vmul.f32 %v1459, %v1422
    %1464 = vrot.lane.b32.xlu0 %v1460, 48
    %v1465 = vpop.permute.xlu0 %1464
    %1466 = vrot.lane.b32.xlu0 %v1461, 48
    %v1467 = vpop.permute.xlu0 %1466
    %v1468 = vrot.slane %v1465, 4
    %v1469 = vsel %vm661, %v1468, %v1465
    %v1470 = vsel %vm661, %v1468, %v1467
    %v1473 = vadd.f32 %v1439, %v1469
    %v1474 = vadd.f32 %v1440, %v1470
    %v1475 = vstv %s1458
    %v1476 = vmul.f32 %v1475, %v1421
    %v1477 = vmul.f32 %v1475, %v1422
    %1480 = vrot.lane.b32.xlu0 %v1476, 48
    %v1481 = vpop.permute.xlu0 %1480
    %1482 = vrot.lane.b32.xlu0 %v1477, 48
    %v1483 = vpop.permute.xlu0 %1482
    %v1484 = vrot.slane %v1481, 4
    %v1485 = vsel %vm661, %v1484, %v1481
    %v1486 = vsel %vm661, %v1484, %v1483
    %v1489 = vadd.f32 %v1455, %v1485
    %v1490 = vadd.f32 %v1456, %v1486
    %s1491 = sld [smem:[#allocation9 + $0x2d]]
    %s1492 = sld [smem:[#allocation9 + $0x5e]]
    %v1493 = vstv %s1491
    %v1494 = vmul.f32 %v1493, %v1421
    %v1495 = vmul.f32 %v1493, %v1422
    %1498 = vrot.lane.b32.xlu0 %v1494, 32
    %v1499 = vpop.permute.xlu0 %1498
    %1500 = vrot.lane.b32.xlu0 %v1495, 32
    %v1501 = vpop.permute.xlu0 %1500
    %v1502 = vrot.slane %v1499, 4
    %v1503 = vsel %vm696, %v1502, %v1499
    %v1504 = vsel %vm696, %v1502, %v1501
    %v1507 = vadd.f32 %v1473, %v1503
    %v1508 = vadd.f32 %v1474, %v1504
    %v1509 = vstv %s1492
    %v1510 = vmul.f32 %v1509, %v1421
    %v1511 = vmul.f32 %v1509, %v1422
    %1514 = vrot.lane.b32.xlu0 %v1510, 32
    %v1515 = vpop.permute.xlu0 %1514
    %1516 = vrot.lane.b32.xlu0 %v1511, 32
    %v1517 = vpop.permute.xlu0 %1516
    %v1518 = vrot.slane %v1515, 4
    %v1519 = vsel %vm696, %v1518, %v1515
    %v1520 = vsel %vm696, %v1518, %v1517
    %v1523 = vadd.f32 %v1489, %v1519
    %v1524 = vadd.f32 %v1490, %v1520
    %v1525 = vsel %vm1308, 1, 0
    %v1526 = vsel %vm1309, 1, 0
    %vm1527 = vcmp.eq.s32.totalorder %v1525, 1
    %vm1528 = vcmp.eq.s32.totalorder %v1526, 1
    %v1531 = vcombine.high %v1507, %v1507
    %1532 = vrot.lane.b32.xlu0 %v1507, 48
    %v1533 = vpop.permute.xlu0 %1532
    %1534 = vrot.lane.b32.xlu0 %v1531, 48
    %v1535 = vpop.permute.xlu0 %1534
    %1536 = vrot.lane.b32.xlu0 %v1508, 48
    %v1537 = vpop.permute.xlu0 %1536
    %v1538 = vsel %vm661, %v1533, %v1535
    %v1539 = vsel %vm661, %v1535, %v1537
    %v1542 = vsel %vm1527, %v1538, 0.0
    %v1543 = vsel %vm1528, %v1539, 0.0
    %v1544 = vadd.f32 %v1285, %v1542
    %v1545 = vadd.f32 %v1286, %v1543
    %v1548 = vcombine.high %v1523, %v1523
    %1549 = vrot.lane.b32.xlu0 %v1523, 48
    %v1550 = vpop.permute.xlu0 %1549
    %1551 = vrot.lane.b32.xlu0 %v1548, 48
    %v1552 = vpop.permute.xlu0 %1551
    %1553 = vrot.lane.b32.xlu0 %v1524, 48
    %v1554 = vpop.permute.xlu0 %1553
    %v1555 = vsel %vm661, %v1550, %v1552
    %v1556 = vsel %vm661, %v1552, %v1554
    %v1559 = vsel %vm1527, %v1555, 0.0
    %v1560 = vsel %vm1528, %v1556, 0.0
    %v1561 = vadd.f32 %v1302, %v1559
    %v1562 = vadd.f32 %v1303, %v1560
    %v1563 = vadd.s32 %v476, 1
    %v1564 = vadd.s32 %v477, 1
    %vm1565 = vcmp.ge.s32.totalorder %v1563, 0
    %vm1566 = vcmp.ge.s32.totalorder %v1564, 0
    %vm1567 = vcmp.lt.s32.totalorder %v1563, 16
    %vm1568 = vcmp.lt.s32.totalorder %v1564, 16
    %vm1569 = vmand %vm1565, %vm1567
    %vm1570 = vmand %vm1566, %vm1568
    %v1571 = vld [vmem:[#allocation2] sm:$0xff]
    %v1572 = vld [vmem:[#allocation2 + $0x8] sm:$0xf]
    %s1573 = sld [smem:[#allocation9 + $0x4]]
    %s1574 = sld [smem:[#allocation9 + $0x35]]
    %v1575 = vstv %s1573
    %v1576 = vmul.f32 %v1575, %v1571
    %v1577 = vmul.f32 %v1575, %v1572
    %v1578 = vadd.f32 %v1576, 0.0
    %v1579 = vadd.f32 %v1577, 0.0
    %v1580 = vstv %s1574
    %v1581 = vmul.f32 %v1580, %v1571
    %v1582 = vmul.f32 %v1580, %v1572
    %v1583 = vadd.f32 %v1581, 0.0
    %v1584 = vadd.f32 %v1582, 0.0
    %s1585 = sld [smem:[#allocation9 + $0xb]]
    %s1586 = sld [smem:[#allocation9 + $0x3c]]
    %v1587 = vstv %s1585
    %v1588 = vmul.f32 %v1587, %v1571
    %v1589 = vmul.f32 %v1587, %v1572
    %1592 = vrot.lane.b32.xlu0 %v1588, 112
    %v1593 = vpop.permute.xlu0 %1592
    %1594 = vrot.lane.b32.xlu0 %v1589, 112
    %v1595 = vpop.permute.xlu0 %1594
    %v1596 = vrot.slane %v1593, 4
    %v1597 = vrot.slane %v1595, 4
    %v1598 = vsel %vm513, %v1596, %v1597
    %v1599 = vsel %vm515, %v1593, %v1598
    %v1602 = vadd.f32 %v1578, %v1599
    %v1603 = vadd.f32 %v1579, %v1595
    %v1604 = vstv %s1586
    %v1605 = vmul.f32 %v1604, %v1571
    %v1606 = vmul.f32 %v1604, %v1572
    %1609 = vrot.lane.b32.xlu0 %v1605, 112
    %v1610 = vpop.permute.xlu0 %1609
    %1611 = vrot.lane.b32.xlu0 %v1606, 112
    %v1612 = vpop.permute.xlu0 %1611
    %v1613 = vrot.slane %v1610, 4
    %v1614 = vrot.slane %v1612, 4
    %v1615 = vsel %vm513, %v1613, %v1614
    %v1616 = vsel %vm515, %v1610, %v1615
    %v1619 = vadd.f32 %v1583, %v1616
    %v1620 = vadd.f32 %v1584, %v1612
    %s1621 = sld [smem:[#allocation9 + $0x12]]
    %s1622 = sld [smem:[#allocation9 + $0x43]]
    %v1623 = vstv %s1621
    %v1624 = vmul.f32 %v1623, %v1571
    %v1625 = vmul.f32 %v1623, %v1572
    %1628 = vrot.lane.b32.xlu0 %v1624, 96
    %v1629 = vpop.permute.xlu0 %1628
    %1630 = vrot.lane.b32.xlu0 %v1625, 96
    %v1631 = vpop.permute.xlu0 %1630
    %v1632 = vrot.slane %v1629, 4
    %v1633 = vrot.slane %v1631, 4
    %v1634 = vsel %vm513, %v1632, %v1633
    %v1635 = vsel %vm552, %v1629, %v1634
    %v1638 = vadd.f32 %v1602, %v1635
    %v1639 = vadd.f32 %v1603, %v1631
    %v1640 = vstv %s1622
    %v1641 = vmul.f32 %v1640, %v1571
    %v1642 = vmul.f32 %v1640, %v1572
    %1645 = vrot.lane.b32.xlu0 %v1641, 96
    %v1646 = vpop.permute.xlu0 %1645
    %1647 = vrot.lane.b32.xlu0 %v1642, 96
    %v1648 = vpop.permute.xlu0 %1647
    %v1649 = vrot.slane %v1646, 4
    %v1650 = vrot.slane %v1648, 4
    %v1651 = vsel %vm513, %v1649, %v1650
    %v1652 = vsel %vm552, %v1646, %v1651
    %v1655 = vadd.f32 %v1619, %v1652
    %v1656 = vadd.f32 %v1620, %v1648
    %v1657 = vld [vmem:[#allocation2 + $0x4] sm:$0xff]
    %v1658 = vld [vmem:[#allocation2 + $0xc] sm:$0xf]
    %s1659 = sld [smem:[#allocation9 + $0x19]]
    %s1660 = sld [smem:[#allocation9 + $0x4a]]
    %v1661 = vstv %s1659
    %v1662 = vmul.f32 %v1661, %v1657
    %v1663 = vmul.f32 %v1661, %v1658
    %1666 = vrot.lane.b32.xlu0 %v1662, 80
    %v1667 = vpop.permute.xlu0 %1666
    %1668 = vrot.lane.b32.xlu0 %v1663, 80
    %v1669 = vpop.permute.xlu0 %1668
    %v1670 = vrot.slane %v1667, 4
    %v1671 = vsel %vm589, %v1670, %v1667
    %v1672 = vsel %vm589, %v1670, %v1669
    %v1675 = vadd.f32 %v1638, %v1671
    %v1676 = vadd.f32 %v1639, %v1672
    %v1677 = vstv %s1660
    %v1678 = vmul.f32 %v1677, %v1657
    %v1679 = vmul.f32 %v1677, %v1658
    %1682 = vrot.lane.b32.xlu0 %v1678, 80
    %v1683 = vpop.permute.xlu0 %1682
    %1684 = vrot.lane.b32.xlu0 %v1679, 80
    %v1685 = vpop.permute.xlu0 %1684
    %v1686 = vrot.slane %v1683, 4
    %v1687 = vsel %vm589, %v1686, %v1683
    %v1688 = vsel %vm589, %v1686, %v1685
    %v1691 = vadd.f32 %v1655, %v1687
    %v1692 = vadd.f32 %v1656, %v1688
    %s1693 = sld [smem:[#allocation9 + $0x20]]
    %s1694 = sld [smem:[#allocation9 + $0x51]]
    %v1695 = vstv %s1693
    %v1696 = vmul.f32 %v1695, %v1657
    %v1697 = vmul.f32 %v1695, %v1658
    %1700 = vrot.lane.b32.xlu0 %v1696, 64
    %v1701 = vpop.permute.xlu0 %1700
    %1702 = vrot.lane.b32.xlu0 %v1697, 64
    %v1703 = vpop.permute.xlu0 %1702
    %v1704 = vrot.slane %v1701, 4
    %v1705 = vsel %vm626, %v1704, %v1701
    %v1706 = vsel %vm626, %v1704, %v1703
    %v1709 = vadd.f32 %v1675, %v1705
    %v1710 = vadd.f32 %v1676, %v1706
    %v1711 = vstv %s1694
    %v1712 = vmul.f32 %v1711, %v1657
    %v1713 = vmul.f32 %v1711, %v1658
    %1716 = vrot.lane.b32.xlu0 %v1712, 64
    %v1717 = vpop.permute.xlu0 %1716
    %1718 = vrot.lane.b32.xlu0 %v1713, 64
    %v1719 = vpop.permute.xlu0 %1718
    %v1720 = vrot.slane %v1717, 4
    %v1721 = vsel %vm626, %v1720, %v1717
    %v1722 = vsel %vm626, %v1720, %v1719
    %v1725 = vadd.f32 %v1691, %v1721
    %v1726 = vadd.f32 %v1692, %v1722
    %s1727 = sld [smem:[#allocation9 + $0x27]]
    %s1728 = sld [smem:[#allocation9 + $0x58]]
    %v1729 = vstv %s1727
    %v1730 = vmul.f32 %v1729, %v1657
    %v1731 = vmul.f32 %v1729, %v1658
    %1734 = vrot.lane.b32.xlu0 %v1730, 48
    %v1735 = vpop.permute.xlu0 %1734
    %1736 = vrot.lane.b32.xlu0 %v1731, 48
    %v1737 = vpop.permute.xlu0 %1736
    %v1738 = vrot.slane %v1735, 4
    %v1739 = vsel %vm661, %v1738, %v1735
    %v1740 = vsel %vm661, %v1738, %v1737
    %v1743 = vadd.f32 %v1709, %v1739
    %v1744 = vadd.f32 %v1710, %v1740
    %v1745 = vstv %s1728
    %v1746 = vmul.f32 %v1745, %v1657
    %v1747 = vmul.f32 %v1745, %v1658
    %1750 = vrot.lane.b32.xlu0 %v1746, 48
    %v1751 = vpop.permute.xlu0 %1750
    %1752 = vrot.lane.b32.xlu0 %v1747, 48
    %v1753 = vpop.permute.xlu0 %1752
    %v1754 = vrot.slane %v1751, 4
    %v1755 = vsel %vm661, %v1754, %v1751
    %v1756 = vsel %vm661, %v1754, %v1753
    %v1759 = vadd.f32 %v1725, %v1755
    %v1760 = vadd.f32 %v1726, %v1756
    %s1761 = sld [smem:[#allocation9 + $0x2e]]
    %s1762 = sld [smem:[#allocation9 + $0x5f]]
    %v1763 = vstv %s1761
    %v1764 = vmul.f32 %v1763, %v1657
    %v1765 = vmul.f32 %v1763, %v1658
    %1768 = vrot.lane.b32.xlu0 %v1764, 32
    %v1769 = vpop.permute.xlu0 %1768
    %1770 = vrot.lane.b32.xlu0 %v1765, 32
    %v1771 = vpop.permute.xlu0 %1770
    %v1772 = vrot.slane %v1769, 4
    %v1773 = vsel %vm696, %v1772, %v1769
    %v1774 = vsel %vm696, %v1772, %v1771
    %v1777 = vadd.f32 %v1743, %v1773
    %v1778 = vadd.f32 %v1744, %v1774
    %v1779 = vstv %s1762
    %v1780 = vmul.f32 %v1779, %v1657
    %v1781 = vmul.f32 %v1779, %v1658
    %1784 = vrot.lane.b32.xlu0 %v1780, 32
    %v1785 = vpop.permute.xlu0 %1784
    %1786 = vrot.lane.b32.xlu0 %v1781, 32
    %v1787 = vpop.permute.xlu0 %1786
    %v1788 = vrot.slane %v1785, 4
    %v1789 = vsel %vm696, %v1788, %v1785
    %v1790 = vsel %vm696, %v1788, %v1787
    %v1793 = vadd.f32 %v1759, %v1789
    %v1794 = vadd.f32 %v1760, %v1790
    %v1795 = vsel %vm1569, 1, 0
    %v1796 = vsel %vm1570, 1, 0
    %vm1797 = vcmp.eq.s32.totalorder %v1795, 1
    %vm1798 = vcmp.eq.s32.totalorder %v1796, 1
    %v1801 = vcombine.high %v1777, %v1777
    %1802 = vrot.lane.b32.xlu0 %v1777, 47
    %v1803 = vpop.permute.xlu0 %1802
    %1804 = vrot.lane.b32.xlu0 %v1801, 47
    %v1805 = vpop.permute.xlu0 %1804
    %1806 = vrot.lane.b32.xlu0 %v1778, 47
    %v1807 = vpop.permute.xlu0 %1806
    %vm1808 = vcmask 384000
    %v1809 = vsel %vm1808, %v1803, %v1805
    %v1810 = vsel %vm1808, %v1805, %v1807
    %v1813 = vsel %vm1797, %v1809, 0.0
    %v1814 = vsel %vm1798, %v1810, 0.0
    %v1815 = vadd.f32 %v1544, %v1813
    %v1816 = vadd.f32 %v1545, %v1814
    %v1819 = vcombine.high %v1793, %v1793
    %1820 = vrot.lane.b32.xlu0 %v1793, 47
    %v1821 = vpop.permute.xlu0 %1820
    %1822 = vrot.lane.b32.xlu0 %v1819, 47
    %v1823 = vpop.permute.xlu0 %1822
    %1824 = vrot.lane.b32.xlu0 %v1794, 47
    %v1825 = vpop.permute.xlu0 %1824
    %v1826 = vsel %vm1808, %v1821, %v1823
    %v1827 = vsel %vm1808, %v1823, %v1825
    %v1830 = vsel %vm1797, %v1826, 0.0
    %v1831 = vsel %vm1798, %v1827, 0.0
    %v1832 = vadd.f32 %v1561, %v1830
    %v1833 = vadd.f32 %v1562, %v1831
    %v1834 = vadd.s32 %v476, 2
    %v1835 = vadd.s32 %v477, 2
    %vm1836 = vcmp.ge.s32.totalorder %v1834, 0
    %vm1837 = vcmp.ge.s32.totalorder %v1835, 0
    %vm1838 = vcmp.lt.s32.totalorder %v1834, 16
    %vm1839 = vcmp.lt.s32.totalorder %v1835, 16
    %vm1840 = vmand %vm1836, %vm1838
    %vm1841 = vmand %vm1837, %vm1839
    %v1842 = vld [vmem:[#allocation2] sm:$0xff]
    %v1843 = vld [vmem:[#allocation2 + $0x8] sm:$0xf]
    %s1844 = sld [smem:[#allocation9 + $0x5]]
    %s1845 = sld [smem:[#allocation9 + $0x36]]
    %v1846 = vstv %s1844
    %v1847 = vmul.f32 %v1846, %v1842
    %v1848 = vmul.f32 %v1846, %v1843
    %v1849 = vadd.f32 %v1847, 0.0
    %v1850 = vadd.f32 %v1848, 0.0
    %v1851 = vstv %s1845
    %v1852 = vmul.f32 %v1851, %v1842
    %v1853 = vmul.f32 %v1851, %v1843
    %v1854 = vadd.f32 %v1852, 0.0
    %v1855 = vadd.f32 %v1853, 0.0
    %s1856 = sld [smem:[#allocation9 + $0xc]]
    %s1857 = sld [smem:[#allocation9 + $0x3d]]
    %v1858 = vstv %s1856
    %v1859 = vmul.f32 %v1858, %v1842
    %v1860 = vmul.f32 %v1858, %v1843
    %1863 = vrot.lane.b32.xlu0 %v1859, 112
    %v1864 = vpop.permute.xlu0 %1863
    %1865 = vrot.lane.b32.xlu0 %v1860, 112
    %v1866 = vpop.permute.xlu0 %1865
    %v1867 = vrot.slane %v1864, 4
    %v1868 = vrot.slane %v1866, 4
    %v1869 = vsel %vm513, %v1867, %v1868
    %v1870 = vsel %vm515, %v1864, %v1869
    %v1873 = vadd.f32 %v1849, %v1870
    %v1874 = vadd.f32 %v1850, %v1866
    %v1875 = vstv %s1857
    %v1876 = vmul.f32 %v1875, %v1842
    %v1877 = vmul.f32 %v1875, %v1843
    %1880 = vrot.lane.b32.xlu0 %v1876, 112
    %v1881 = vpop.permute.xlu0 %1880
    %1882 = vrot.lane.b32.xlu0 %v1877, 112
    %v1883 = vpop.permute.xlu0 %1882
    %v1884 = vrot.slane %v1881, 4
    %v1885 = vrot.slane %v1883, 4
    %v1886 = vsel %vm513, %v1884, %v1885
    %v1887 = vsel %vm515, %v1881, %v1886
    %v1890 = vadd.f32 %v1854, %v1887
    %v1891 = vadd.f32 %v1855, %v1883
    %s1892 = sld [smem:[#allocation9 + $0x13]]
    %s1893 = sld [smem:[#allocation9 + $0x44]]
    %v1894 = vstv %s1892
    %v1895 = vmul.f32 %v1894, %v1842
    %v1896 = vmul.f32 %v1894, %v1843
    %1899 = vrot.lane.b32.xlu0 %v1895, 96
    %v1900 = vpop.permute.xlu0 %1899
    %1901 = vrot.lane.b32.xlu0 %v1896, 96
    %v1902 = vpop.permute.xlu0 %1901
    %v1903 = vrot.slane %v1900, 4
    %v1904 = vrot.slane %v1902, 4
    %v1905 = vsel %vm513, %v1903, %v1904
    %v1906 = vsel %vm552, %v1900, %v1905
    %v1909 = vadd.f32 %v1873, %v1906
    %v1910 = vadd.f32 %v1874, %v1902
    %v1911 = vstv %s1893
    %v1912 = vmul.f32 %v1911, %v1842
    %v1913 = vmul.f32 %v1911, %v1843
    %1916 = vrot.lane.b32.xlu0 %v1912, 96
    %v1917 = vpop.permute.xlu0 %1916
    %1918 = vrot.lane.b32.xlu0 %v1913, 96
    %v1919 = vpop.permute.xlu0 %1918
    %v1920 = vrot.slane %v1917, 4
    %v1921 = vrot.slane %v1919, 4
    %v1922 = vsel %vm513, %v1920, %v1921
    %v1923 = vsel %vm552, %v1917, %v1922
    %v1926 = vadd.f32 %v1890, %v1923
    %v1927 = vadd.f32 %v1891, %v1919
    %v1928 = vld [vmem:[#allocation2 + $0x4] sm:$0xff]
    %v1929 = vld [vmem:[#allocation2 + $0xc] sm:$0xf]
    %s1930 = sld [smem:[#allocation9 + $0x1a]]
    %s1931 = sld [smem:[#allocation9 + $0x4b]]
    %v1932 = vstv %s1930
    %v1933 = vmul.f32 %v1932, %v1928
    %v1934 = vmul.f32 %v1932, %v1929
    %1937 = vrot.lane.b32.xlu0 %v1933, 80
    %v1938 = vpop.permute.xlu0 %1937
    %1939 = vrot.lane.b32.xlu0 %v1934, 80
    %v1940 = vpop.permute.xlu0 %1939
    %v1941 = vrot.slane %v1938, 4
    %v1942 = vsel %vm589, %v1941, %v1938
    %v1943 = vsel %vm589, %v1941, %v1940
    %v1946 = vadd.f32 %v1909, %v1942
    %v1947 = vadd.f32 %v1910, %v1943
    %v1948 = vstv %s1931
    %v1949 = vmul.f32 %v1948, %v1928
    %v1950 = vmul.f32 %v1948, %v1929
    %1953 = vrot.lane.b32.xlu0 %v1949, 80
    %v1954 = vpop.permute.xlu0 %1953
    %1955 = vrot.lane.b32.xlu0 %v1950, 80
    %v1956 = vpop.permute.xlu0 %1955
    %v1957 = vrot.slane %v1954, 4
    %v1958 = vsel %vm589, %v1957, %v1954
    %v1959 = vsel %vm589, %v1957, %v1956
    %v1962 = vadd.f32 %v1926, %v1958
    %v1963 = vadd.f32 %v1927, %v1959
    %s1964 = sld [smem:[#allocation9 + $0x21]]
    %s1965 = sld [smem:[#allocation9 + $0x52]]
    %v1966 = vstv %s1964
    %v1967 = vmul.f32 %v1966, %v1928
    %v1968 = vmul.f32 %v1966, %v1929
    %1971 = vrot.lane.b32.xlu0 %v1967, 64
    %v1972 = vpop.permute.xlu0 %1971
    %1973 = vrot.lane.b32.xlu0 %v1968, 64
    %v1974 = vpop.permute.xlu0 %1973
    %v1975 = vrot.slane %v1972, 4
    %v1976 = vsel %vm626, %v1975, %v1972
    %v1977 = vsel %vm626, %v1975, %v1974
    %v1980 = vadd.f32 %v1946, %v1976
    %v1981 = vadd.f32 %v1947, %v1977
    %v1982 = vstv %s1965
    %v1983 = vmul.f32 %v1982, %v1928
    %v1984 = vmul.f32 %v1982, %v1929
    %1987 = vrot.lane.b32.xlu0 %v1983, 64
    %v1988 = vpop.permute.xlu0 %1987
    %1989 = vrot.lane.b32.xlu0 %v1984, 64
    %v1990 = vpop.permute.xlu0 %1989
    %v1991 = vrot.slane %v1988, 4
    %v1992 = vsel %vm626, %v1991, %v1988
    %v1993 = vsel %vm626, %v1991, %v1990
    %v1996 = vadd.f32 %v1962, %v1992
    %v1997 = vadd.f32 %v1963, %v1993
    %s1998 = sld [smem:[#allocation9 + $0x28]]
    %s1999 = sld [smem:[#allocation9 + $0x59]]
    %v2000 = vstv %s1998
    %v2001 = vmul.f32 %v2000, %v1928
    %v2002 = vmul.f32 %v2000, %v1929
    %2005 = vrot.lane.b32.xlu0 %v2001, 48
    %v2006 = vpop.permute.xlu0 %2005
    %2007 = vrot.lane.b32.xlu0 %v2002, 48
    %v2008 = vpop.permute.xlu0 %2007
    %v2009 = vrot.slane %v2006, 4
    %v2010 = vsel %vm661, %v2009, %v2006
    %v2011 = vsel %vm661, %v2009, %v2008
    %v2014 = vadd.f32 %v1980, %v2010
    %v2015 = vadd.f32 %v1981, %v2011
    %v2016 = vstv %s1999
    %v2017 = vmul.f32 %v2016, %v1928
    %v2018 = vmul.f32 %v2016, %v1929
    %2021 = vrot.lane.b32.xlu0 %v2017, 48
    %v2022 = vpop.permute.xlu0 %2021
    %2023 = vrot.lane.b32.xlu0 %v2018, 48
    %v2024 = vpop.permute.xlu0 %2023
    %v2025 = vrot.slane %v2022, 4
    %v2026 = vsel %vm661, %v2025, %v2022
    %v2027 = vsel %vm661, %v2025, %v2024
    %v2030 = vadd.f32 %v1996, %v2026
    %v2031 = vadd.f32 %v1997, %v2027
    %s2032 = sld [smem:[#allocation9 + $0x2f]]
    %s2033 = sld [smem:[#allocation9 + $0x60]]
    %v2034 = vstv %s2032
    %v2035 = vmul.f32 %v2034, %v1928
    %v2036 = vmul.f32 %v2034, %v1929
    %2039 = vrot.lane.b32.xlu0 %v2035, 32
    %v2040 = vpop.permute.xlu0 %2039
    %2041 = vrot.lane.b32.xlu0 %v2036, 32
    %v2042 = vpop.permute.xlu0 %2041
    %v2043 = vrot.slane %v2040, 4
    %v2044 = vsel %vm696, %v2043, %v2040
    %v2045 = vsel %vm696, %v2043, %v2042
    %v2048 = vadd.f32 %v2014, %v2044
    %v2049 = vadd.f32 %v2015, %v2045
    %v2050 = vstv %s2033
    %v2051 = vmul.f32 %v2050, %v1928
    %v2052 = vmul.f32 %v2050, %v1929
    %2055 = vrot.lane.b32.xlu0 %v2051, 32
    %v2056 = vpop.permute.xlu0 %2055
    %2057 = vrot.lane.b32.xlu0 %v2052, 32
    %v2058 = vpop.permute.xlu0 %2057
    %v2059 = vrot.slane %v2056, 4
    %v2060 = vsel %vm696, %v2059, %v2056
    %v2061 = vsel %vm696, %v2059, %v2058
    %v2064 = vadd.f32 %v2030, %v2060
    %v2065 = vadd.f32 %v2031, %v2061
    %v2066 = vsel %vm1840, 1, 0
    %v2067 = vsel %vm1841, 1, 0
    %vm2068 = vcmp.eq.s32.totalorder %v2066, 1
    %vm2069 = vcmp.eq.s32.totalorder %v2067, 1
    %v2072 = vcombine.high %v2048, %v2048
    %2073 = vrot.lane.b32.xlu0 %v2048, 46
    %v2074 = vpop.permute.xlu0 %2073
    %2075 = vrot.lane.b32.xlu0 %v2072, 46
    %v2076 = vpop.permute.xlu0 %2075
    %2077 = vrot.lane.b32.xlu0 %v2049, 46
    %v2078 = vpop.permute.xlu0 %2077
    %vm2079 = vcmask 375808
    %v2080 = vsel %vm2079, %v2074, %v2076
    %v2081 = vsel %vm2079, %v2076, %v2078
    %v2084 = vsel %vm2068, %v2080, 0.0
    %v2085 = vsel %vm2069, %v2081, 0.0
    %v2086 = vadd.f32 %v1815, %v2084
    %v2087 = vadd.f32 %v1816, %v2085
    %v2090 = vcombine.high %v2064, %v2064
    %2091 = vrot.lane.b32.xlu0 %v2064, 46
    %v2092 = vpop.permute.xlu0 %2091
    %2093 = vrot.lane.b32.xlu0 %v2090, 46
    %v2094 = vpop.permute.xlu0 %2093
    %2095 = vrot.lane.b32.xlu0 %v2065, 46
    %v2096 = vpop.permute.xlu0 %2095
    %v2097 = vsel %vm2079, %v2092, %v2094
    %v2098 = vsel %vm2079, %v2094, %v2096
    %v2101 = vsel %vm2068, %v2097, 0.0
    %v2102 = vsel %vm2069, %v2098, 0.0
    %v2103 = vadd.f32 %v1832, %v2101
    %v2104 = vadd.f32 %v1833, %v2102
    %v2105 = vadd.s32 %v476, 3
    %v2106 = vadd.s32 %v477, 3
    %vm2107 = vcmp.ge.s32.totalorder %v2105, 0
    %vm2108 = vcmp.ge.s32.totalorder %v2106, 0
    %vm2109 = vcmp.lt.s32.totalorder %v2105, 16
    %vm2110 = vcmp.lt.s32.totalorder %v2106, 16
    %vm2111 = vmand %vm2107, %vm2109
    %vm2112 = vmand %vm2108, %vm2110
    %v2113 = vld [vmem:[#allocation2] sm:$0xff]
    %v2114 = vld [vmem:[#allocation2 + $0x8] sm:$0xf]
    %s2115 = sld [smem:[#allocation9 + $0x6]]
    %s2116 = sld [smem:[#allocation9 + $0x37]]
    %v2117 = vstv %s2115
    %v2118 = vmul.f32 %v2117, %v2113
    %v2119 = vmul.f32 %v2117, %v2114
    %v2120 = vadd.f32 %v2118, 0.0
    %v2121 = vadd.f32 %v2119, 0.0
    %v2122 = vstv %s2116
    %v2123 = vmul.f32 %v2122, %v2113
    %v2124 = vmul.f32 %v2122, %v2114
    %v2125 = vadd.f32 %v2123, 0.0
    %v2126 = vadd.f32 %v2124, 0.0
    %s2127 = sld [smem:[#allocation9 + $0xd]]
    %s2128 = sld [smem:[#allocation9 + $0x3e]]
    %v2129 = vstv %s2127
    %v2130 = vmul.f32 %v2129, %v2113
    %v2131 = vmul.f32 %v2129, %v2114
    %2134 = vrot.lane.b32.xlu0 %v2130, 112
    %v2135 = vpop.permute.xlu0 %2134
    %2136 = vrot.lane.b32.xlu0 %v2131, 112
    %v2137 = vpop.permute.xlu0 %2136
    %v2138 = vrot.slane %v2135, 4
    %v2139 = vrot.slane %v2137, 4
    %v2140 = vsel %vm513, %v2138, %v2139
    %v2141 = vsel %vm515, %v2135, %v2140
    %v2144 = vadd.f32 %v2120, %v2141
    %v2145 = vadd.f32 %v2121, %v2137
    %v2146 = vstv %s2128
    %v2147 = vmul.f32 %v2146, %v2113
    %v2148 = vmul.f32 %v2146, %v2114
    %2151 = vrot.lane.b32.xlu0 %v2147, 112
    %v2152 = vpop.permute.xlu0 %2151
    %2153 = vrot.lane.b32.xlu0 %v2148, 112
    %v2154 = vpop.permute.xlu0 %2153
    %v2155 = vrot.slane %v2152, 4
    %v2156 = vrot.slane %v2154, 4
    %v2157 = vsel %vm513, %v2155, %v2156
    %v2158 = vsel %vm515, %v2152, %v2157
    %v2161 = vadd.f32 %v2125, %v2158
    %v2162 = vadd.f32 %v2126, %v2154
    %s2163 = sld [smem:[#allocation9 + $0x14]]
    %s2164 = sld [smem:[#allocation9 + $0x45]]
    %v2165 = vstv %s2163
    %v2166 = vmul.f32 %v2165, %v2113
    %v2167 = vmul.f32 %v2165, %v2114
    %2170 = vrot.lane.b32.xlu0 %v2166, 96
    %v2171 = vpop.permute.xlu0 %2170
    %2172 = vrot.lane.b32.xlu0 %v2167, 96
    %v2173 = vpop.permute.xlu0 %2172
    %v2174 = vrot.slane %v2171, 4
    %v2175 = vrot.slane %v2173, 4
    %v2176 = vsel %vm513, %v2174, %v2175
    %v2177 = vsel %vm552, %v2171, %v2176
    %v2180 = vadd.f32 %v2144, %v2177
    %v2181 = vadd.f32 %v2145, %v2173
    %v2182 = vstv %s2164
    %v2183 = vmul.f32 %v2182, %v2113
    %v2184 = vmul.f32 %v2182, %v2114
    %2187 = vrot.lane.b32.xlu0 %v2183, 96
    %v2188 = vpop.permute.xlu0 %2187
    %2189 = vrot.lane.b32.xlu0 %v2184, 96
    %v2190 = vpop.permute.xlu0 %2189
    %v2191 = vrot.slane %v2188, 4
    %v2192 = vrot.slane %v2190, 4
    %v2193 = vsel %vm513, %v2191, %v2192
    %v2194 = vsel %vm552, %v2188, %v2193
    %v2197 = vadd.f32 %v2161, %v2194
    %v2198 = vadd.f32 %v2162, %v2190
    %v2199 = vld [vmem:[#allocation2 + $0x4] sm:$0xff]
    %v2200 = vld [vmem:[#allocation2 + $0xc] sm:$0xf]
    %s2201 = sld [smem:[#allocation9 + $0x1b]]
    %s2202 = sld [smem:[#allocation9 + $0x4c]]
    %v2203 = vstv %s2201
    %v2204 = vmul.f32 %v2203, %v2199
    %v2205 = vmul.f32 %v2203, %v2200
    %2208 = vrot.lane.b32.xlu0 %v2204, 80
    %v2209 = vpop.permute.xlu0 %2208
    %2210 = vrot.lane.b32.xlu0 %v2205, 80
    %v2211 = vpop.permute.xlu0 %2210
    %v2212 = vrot.slane %v2209, 4
    %v2213 = vsel %vm589, %v2212, %v2209
    %v2214 = vsel %vm589, %v2212, %v2211
    %v2217 = vadd.f32 %v2180, %v2213
    %v2218 = vadd.f32 %v2181, %v2214
    %v2219 = vstv %s2202
    %v2220 = vmul.f32 %v2219, %v2199
    %v2221 = vmul.f32 %v2219, %v2200
    %2224 = vrot.lane.b32.xlu0 %v2220, 80
    %v2225 = vpop.permute.xlu0 %2224
    %2226 = vrot.lane.b32.xlu0 %v2221, 80
    %v2227 = vpop.permute.xlu0 %2226
    %v2228 = vrot.slane %v2225, 4
    %v2229 = vsel %vm589, %v2228, %v2225
    %v2230 = vsel %vm589, %v2228, %v2227
    %v2233 = vadd.f32 %v2197, %v2229
    %v2234 = vadd.f32 %v2198, %v2230
    %s2235 = sld [smem:[#allocation9 + $0x22]]
    %s2236 = sld [smem:[#allocation9 + $0x53]]
    %v2237 = vstv %s2235
    %v2238 = vmul.f32 %v2237, %v2199
    %v2239 = vmul.f32 %v2237, %v2200
    %2242 = vrot.lane.b32.xlu0 %v2238, 64
    %v2243 = vpop.permute.xlu0 %2242
    %2244 = vrot.lane.b32.xlu0 %v2239, 64
    %v2245 = vpop.permute.xlu0 %2244
    %v2246 = vrot.slane %v2243, 4
    %v2247 = vsel %vm626, %v2246, %v2243
    %v2248 = vsel %vm626, %v2246, %v2245
    %v2251 = vadd.f32 %v2217, %v2247
    %v2252 = vadd.f32 %v2218, %v2248
    %v2253 = vstv %s2236
    %v2254 = vmul.f32 %v2253, %v2199
    %v2255 = vmul.f32 %v2253, %v2200
    %2258 = vrot.lane.b32.xlu0 %v2254, 64
    %v2259 = vpop.permute.xlu0 %2258
    %2260 = vrot.lane.b32.xlu0 %v2255, 64
    %v2261 = vpop.permute.xlu0 %2260
    %v2262 = vrot.slane %v2259, 4
    %v2263 = vsel %vm626, %v2262, %v2259
    %v2264 = vsel %vm626, %v2262, %v2261
    %v2267 = vadd.f32 %v2233, %v2263
    %v2268 = vadd.f32 %v2234, %v2264
    %s2269 = sld [smem:[#allocation9 + $0x29]]
    %s2270 = sld [smem:[#allocation9 + $0x5a]]
    %v2271 = vstv %s2269
    %v2272 = vmul.f32 %v2271, %v2199
    %v2273 = vmul.f32 %v2271, %v2200
    %2276 = vrot.lane.b32.xlu0 %v2272, 48
    %v2277 = vpop.permute.xlu0 %2276
    %2278 = vrot.lane.b32.xlu0 %v2273, 48
    %v2279 = vpop.permute.xlu0 %2278
    %v2280 = vrot.slane %v2277, 4
    %v2281 = vsel %vm661, %v2280, %v2277
    %v2282 = vsel %vm661, %v2280, %v2279
    %v2285 = vadd.f32 %v2251, %v2281
    %v2286 = vadd.f32 %v2252, %v2282
    %v2287 = vstv %s2270
    %v2288 = vmul.f32 %v2287, %v2199
    %v2289 = vmul.f32 %v2287, %v2200
    %2292 = vrot.lane.b32.xlu0 %v2288, 48
    %v2293 = vpop.permute.xlu0 %2292
    %2294 = vrot.lane.b32.xlu0 %v2289, 48
    %v2295 = vpop.permute.xlu0 %2294
    %v2296 = vrot.slane %v2293, 4
    %v2297 = vsel %vm661, %v2296, %v2293
    %v2298 = vsel %vm661, %v2296, %v2295
    %v2301 = vadd.f32 %v2267, %v2297
    %v2302 = vadd.f32 %v2268, %v2298
    %s2303 = sld [smem:[#allocation9 + $0x30]]
    %s2304 = sld [smem:[#allocation9 + $0x61]]
    %v2305 = vstv %s2303
    %v2306 = vmul.f32 %v2305, %v2199
    %v2307 = vmul.f32 %v2305, %v2200
    %2310 = vrot.lane.b32.xlu0 %v2306, 32
    %v2311 = vpop.permute.xlu0 %2310
    %2312 = vrot.lane.b32.xlu0 %v2307, 32
    %v2313 = vpop.permute.xlu0 %2312
    %v2314 = vrot.slane %v2311, 4
    %v2315 = vsel %vm696, %v2314, %v2311
    %v2316 = vsel %vm696, %v2314, %v2313
    %v2319 = vadd.f32 %v2285, %v2315
    %v2320 = vadd.f32 %v2286, %v2316
    %v2321 = vstv %s2304
    %v2322 = vmul.f32 %v2321, %v2199
    %v2323 = vmul.f32 %v2321, %v2200
    %2326 = vrot.lane.b32.xlu0 %v2322, 32
    %v2327 = vpop.permute.xlu0 %2326
    %2328 = vrot.lane.b32.xlu0 %v2323, 32
    %v2329 = vpop.permute.xlu0 %2328
    %v2330 = vrot.slane %v2327, 4
    %v2331 = vsel %vm696, %v2330, %v2327
    %v2332 = vsel %vm696, %v2330, %v2329
    %v2335 = vadd.f32 %v2301, %v2331
    %v2336 = vadd.f32 %v2302, %v2332
    %v2337 = vsel %vm2111, 1, 0
    %v2338 = vsel %vm2112, 1, 0
    %vm2339 = vcmp.eq.s32.totalorder %v2337, 1
    %vm2340 = vcmp.eq.s32.totalorder %v2338, 1
    %v2343 = vcombine.high %v2319, %v2319
    %2344 = vrot.lane.b32.xlu0 %v2319, 45
    %v2345 = vpop.permute.xlu0 %2344
    %2346 = vrot.lane.b32.xlu0 %v2343, 45
    %v2347 = vpop.permute.xlu0 %2346
    %2348 = vrot.lane.b32.xlu0 %v2320, 45
    %v2349 = vpop.permute.xlu0 %2348
    %vm2350 = vcmask 367616
    %v2351 = vsel %vm2350, %v2345, %v2347
    %v2352 = vsel %vm2350, %v2347, %v2349
    %v2355 = vsel %vm2339, %v2351, 0.0
    %v2356 = vsel %vm2340, %v2352, 0.0
    %v2357 = vadd.f32 %v2086, %v2355
    %v2358 = vadd.f32 %v2087, %v2356
    %v2361 = vcombine.high %v2335, %v2335
    %2362 = vrot.lane.b32.xlu0 %v2335, 45
    %v2363 = vpop.permute.xlu0 %2362
    %2364 = vrot.lane.b32.xlu0 %v2361, 45
    %v2365 = vpop.permute.xlu0 %2364
    %2366 = vrot.lane.b32.xlu0 %v2336, 45
    %v2367 = vpop.permute.xlu0 %2366
    %v2368 = vsel %vm2350, %v2363, %v2365
    %v2369 = vsel %vm2350, %v2365, %v2367
    %v2372 = vsel %vm2339, %v2368, 0.0
    %v2373 = vsel %vm2340, %v2369, 0.0
    %v2374 = vadd.f32 %v2103, %v2372
    %v2375 = vadd.f32 %v2104, %v2373
    %v2378 = vrot.slane %v2374, 2
    %v2379 = vrot.slane %v2375, 2
    %v2382 = vadd.f32 %v2357, %v2378
    %v2383 = vadd.f32 %v2358, %v2379
    %v2384 = vxor.u32 %v2382, 2147483648
    %v2385 = vxor.u32 %v2383, 2147483648
    %v2386 = vmul.f32 %v2384, 1.442695
    %v2387 = vpow.pop %v2386
    %v2388 = vmul.f32 %v2385, 1.442695
    %v2389 = vpow.pop %v2388
    %v2390 = vadd.f32 %v2387, 1.0
    %v2391 = vadd.f32 %v2389, 1.0
    %v2392 = vrcp.pop %v2390
    %v2393 = vmul.f32 1.0, %v2392
    %v2394 = vrcp.pop %v2391
    %v2395 = vmul.f32 1.0, %v2394
    %v2398 = vcombine.low %v2393, %v2395
    %v2400 = vunpack.c.l.s4 1966171168
    %v2401 = vunpack.c.0.s8 %v2400
    %v2402 = vlaneseq
    %v2403 = vshrl.u32 %v2402, 7
    %v2404 = vsub.s32 %v2401, %v2403
    %v2405 = vrot.slane %v2398, %v2404
    %v2406 = vcombine.high %v2405, %v2405
    %v2408 = vunpack.c.l.s4 1966171168
    %v2409 = vunpack.c.0.s8 %v2408
    %v2410 = vlaneseq
    %v2411 = vshrl.u32 %v2410, 7
    %v2412 = vsub.s32 %v2409, %v2411
    %v2413 = vrot.slane %v2405, %v2412
    %v2415 = vunpack.c.l.s4 1966171168
    %v2416 = vunpack.c.0.s8 %v2415
    %v2417 = vlaneseq
    %v2418 = vshrl.u32 %v2417, 7
    %v2419 = vsub.s32 %v2416, %v2418
    %v2420 = vrot.slane %v2406, %v2419
    %v2421 = vld [vmem:[#allocation10] sm:$0xff]
    %v2422 = vld [vmem:[#allocation10 + $0x8] sm:$0xff]
    %v2423 = vld [vmem:[#allocation10 + $0x10] sm:$0xff]
    %v2424 = vld [vmem:[#allocation10 + $0x18] sm:$0xff]
    %v2425 = vld [vmem:[#allocation10 + $0x20] sm:$0xff]
    %v2426 = vld [vmem:[#allocation10 + $0x28] sm:$0xff]
    %v2427 = vld [vmem:[#allocation10 + $0x30] sm:$0xff]
    %v2428 = vld [vmem:[#allocation10 + $0x38] sm:$0xff]
    %v2429 = vld [vmem:[#allocation10 + $0x40] sm:$0xff]
    %v2430 = vld [vmem:[#allocation10 + $0x48] sm:$0xff]
    %v2431 = vld [vmem:[#allocation10 + $0x50] sm:$0xff]
    %v2432 = vld [vmem:[#allocation10 + $0x58] sm:$0xff]
    %v2433 = vld [vmem:[#allocation10 + $0x60] sm:$0xff]
    %v2434 = vld [vmem:[#allocation10 + $0x68] sm:$0xff]
    %v2435 = vld [vmem:[#allocation10 + $0x70] sm:$0xff]
    %v2436 = vld [vmem:[#allocation10 + $0x78] sm:$0xff]
    %v2437 = vlaneseq
    %v2438 = vshrl.u32 %v2437, 7
    %v2439 = vsub.s32 0, %v2438
    %v2440 = vrot.slane %v2413, %v2439
    %v2441 = vlaneseq
    %v2442 = vshrl.u32 %v2441, 7
    %v2443 = vsub.s32 1, %v2442
    %v2444 = vrot.slane %v2413, %v2443
    %v2445 = vlaneseq
    %v2446 = vshrl.u32 %v2445, 7
    %v2447 = vsub.s32 0, %v2446
    %v2448 = vrot.slane %v2420, %v2447
    %v2449 = vlaneseq
    %v2450 = vshrl.u32 %v2449, 7
    %v2451 = vsub.s32 1, %v2450
    %v2452 = vrot.slane %v2420, %v2451
    %v2457 = vmul.f32 %v2440, %v2421
    %v2458 = vmul.f32 %v2444, %v2422
    %v2459 = vmul.f32 %v2440, %v2423
    %v2460 = vmul.f32 %v2444, %v2424
    %v2461 = vmul.f32 %v2440, %v2425
    %v2462 = vmul.f32 %v2444, %v2426
    %v2463 = vmul.f32 %v2440, %v2427
    %v2464 = vmul.f32 %v2444, %v2428
    %v2465 = vmul.f32 %v2448, %v2429
    %v2466 = vmul.f32 %v2452, %v2430
    %v2467 = vmul.f32 %v2448, %v2431
    %v2468 = vmul.f32 %v2452, %v2432
    %v2469 = vmul.f32 %v2448, %v2433
    %v2470 = vmul.f32 %v2452, %v2434
    %v2471 = vmul.f32 %v2448, %v2435
    %v2472 = vmul.f32 %v2452, %v2436
    %2473 = vst [vmem:[#allocation10] sm:$0xff] %v2457
    %2474 = vst [vmem:[#allocation10 + $0x8] sm:$0xff] %v2458
    %2475 = vst [vmem:[#allocation10 + $0x10] sm:$0xff] %v2459
    %2476 = vst [vmem:[#allocation10 + $0x18] sm:$0xff] %v2460
    %2477 = vst [vmem:[#allocation10 + $0x20] sm:$0xff] %v2461
    %2478 = vst [vmem:[#allocation10 + $0x28] sm:$0xff] %v2462
    %2479 = vst [vmem:[#allocation10 + $0x30] sm:$0xff] %v2463
    %2480 = vst [vmem:[#allocation10 + $0x38] sm:$0xff] %v2464
    %2481 = vst [vmem:[#allocation10 + $0x40] sm:$0xff] %v2465
    %2482 = vst [vmem:[#allocation10 + $0x48] sm:$0xff] %v2466
    %2483 = vst [vmem:[#allocation10 + $0x50] sm:$0xff] %v2467
    %2484 = vst [vmem:[#allocation10 + $0x58] sm:$0xff] %v2468
    %2485 = vst [vmem:[#allocation10 + $0x60] sm:$0xff] %v2469
    %2486 = vst [vmem:[#allocation10 + $0x68] sm:$0xff] %v2470
    %2487 = vst [vmem:[#allocation10 + $0x70] sm:$0xff] %v2471
    %2488 = vst [vmem:[#allocation10 + $0x78] sm:$0xff] %v2472
    // Predicated region
    $region30: #{tpu_custom_call.1} parent=1 // pred_check
      _
    $region31: #{tpu_custom_call.1} parent=1 // pred_check_branch
      %2490 = sbr.rel (0) target = $region33
    $region32: #{tpu_custom_call.1} parent=1 // pred_region
      %s2492 = ssub.s32 2048, 2048
      %2493 = vsyncadd [#allocation5], %s2492
      %s2494 = sshll.u32 [#allocation10], 4
      %s2495 = int_to_ptr.vmem [resolvable:$true] %s2494
      %2500 = dma.vmem_to_hbm [thread:$0]  %s2495, 2048, %s4, [#allocation5], 256, 256, 16
    $region33: #{tpu_custom_call.1} parent=1 // pred_fallthru
      _
    // Predicated region
    $region34: #{tpu_custom_call.1} parent=1 // pred_check
      _
    $region35: #{tpu_custom_call.1} parent=1 // pred_check_branch
      %2502 = sbr.rel (0) target = $region37
    $region36: #{tpu_custom_call.1} parent=1 // pred_region
      %2503 = dma.done [#allocation5], 2048
    $region37: #{tpu_custom_call.1} parent=1 // pred_fallthru
      _
    %2504 = vsyncpa [#allocation4], 1
    %2505 = vsyncpa [#allocation8], 1
    %2506 = vsyncpa [#allocation5], 1
    %2507 = vsyncpa [#allocation6], 1

</llo_original>
